<compile_context>
chip_gen: v7x
topology: tpu7x:2x2x1
jax: 0.10.0
libtpu: 0.0.40
codegen_flags: <defaults>
</compile_context>

<pallas_src>
import jax
import jax.numpy as jnp
import numpy as np
from jax.experimental import pallas as pl
from jax.experimental.pallas import tpu as pltpu

OMEGA_0 = 30.0          # SIREN frequency (Sine activation = sin(30 * x))
IN_FEATURES = 3
OUT_FEATURES = 1
HIDDEN = 64             # small stand-in for the default 256 hidden features
NUM_HIDDEN_LAYERS = 3   # SingleBVPNet default
LANE = 128


def _round_up(x, m):
    return ((x + m - 1) // m) * m


def _default_pack():
    """Points packed per lane row: 4 on v6e/v7x (256-wide MXU), else 2."""
    try:
        kind = jax.devices()[0].device_kind.lower()
    except Exception:
        return 2
    for tag in ("v6", "v7", "7x", "trillium"):
        if tag in kind:
            return 4
    return 2


def _siren_packed_kernel(xp_ref, w1_ref, b1_ref, wh_ref, bh_ref,
                         w5_ref, b5_ref, out_ref):
    """One tile of packed points through the whole SIREN MLP.

    xp_ref  : [R, Kp]          P points' coords per row, zero-padded to Kp cols
    w1_ref  : [Kp, P*H]        block-diagonal first-layer weight (omega folded)
    b1_ref  : [1, P*H]         (omega folded)
    wh_ref  : [L, P*H, P*H]    stacked block-diagonal hidden weights (omega folded)
    bh_ref  : [L, 1, P*H]      (omega folded)
    w5_ref  : [P*H, P]         masked final weight: col p = w5 in rows p*H:(p+1)*H
    b5_ref  : [1, P]
    out_ref : [R, P]           col p of row i = point i*P + p
    """
    x = xp_ref[...].astype(jnp.float32)                              # [R, Kp]

    # layer 1 on the MXU (K is tiny but the MXU slot is otherwise idle).
    h = jnp.sin(jnp.dot(x, w1_ref[...], preferred_element_type=jnp.float32)
                + b1_ref[...])                                       # [R, P*H]

    # hidden layers: block-diagonal matmuls on the MXU; omega_0 pre-folded.
    for li in range(NUM_HIDDEN_LAYERS):
        h = jnp.sin(jnp.dot(h, wh_ref[li], preferred_element_type=jnp.float32)
                    + bh_ref[li])

    # final Linear(H, 1): tiny masked MXU matmul, no activation / no omega.
    y = jnp.dot(h, w5_ref[...], preferred_element_type=jnp.float32) + b5_ref[...]
    out_ref[...] = y.astype(out_ref.dtype)                           # [R, P]


def init_siren_params(key, in_features=IN_FEATURES, hidden=HIDDEN,
                      out_features=OUT_FEATURES, num_hidden_layers=NUM_HIDDEN_LAYERS):
    """Deterministic SIREN-style init (first_layer_sine_init / sine_init)."""
    dims = [in_features] + [hidden] * (num_hidden_layers + 1) + [out_features]
    params = []
    for li in range(len(dims) - 1):
        fan_in, fan_out = dims[li], dims[li + 1]
        key, kw, kb = jax.random.split(key, 3)
        if li == 0:
            bound = 1.0 / fan_in
        else:
            bound = np.sqrt(6.0 / fan_in) / OMEGA_0
        w = jax.random.uniform(kw, (fan_in, fan_out), jnp.float32, -bound, bound)
        # PyTorch Linear default bias init: U(-1/sqrt(fan_in), 1/sqrt(fan_in))
        b_bound = 1.0 / np.sqrt(fan_in)
        b = jax.random.uniform(kb, (1, fan_out), jnp.float32, -b_bound, b_bound)
        params.append((w, b))
    return params


def _pack_params(params, pack):
    """Block-diagonal 'P points per row' packed weights, omega_0 pre-folded."""
    (w1, b1) = params[0]
    hidden = params[1:-1]
    (w5, b5) = params[-1]
    H = w1.shape[1]
    HP = pack * H
    Kp = _round_up(pack * IN_FEATURES, 8)

    # first layer: [3, H] -> block-diag [Kp, P*H], scaled by omega_0.
    w1p = jnp.zeros((Kp, HP), jnp.float32)
    for p in range(pack):
        w1p = w1p.at[p * IN_FEATURES:(p + 1) * IN_FEATURES,
                     p * H:(p + 1) * H].set(OMEGA_0 * w1)
    b1p = jnp.tile(OMEGA_0 * b1, (1, pack))                          # [1, P*H]

    # hidden layers: stacked block-diag [L, P*H, P*H], scaled by omega_0.
    whs, bhs = [], []
    for (w, b) in hidden:
        wp = jnp.zeros((HP, HP), jnp.float32)
        for p in range(pack):
            wp = wp.at[p * H:(p + 1) * H, p * H:(p + 1) * H].set(OMEGA_0 * w)
        whs.append(wp)
        bhs.append(jnp.tile(OMEGA_0 * b, (1, pack)))
    wh = jnp.stack(whs, axis=0)                                      # [L, P*H, P*H]
    bh = jnp.stack(bhs, axis=0)                                      # [L, 1, P*H]

    # final layer: masked [P*H, P]; column p holds w5 in rows p*H:(p+1)*H.
    w5m = jnp.zeros((HP, pack), jnp.float32)
    for p in range(pack):
        w5m = w5m.at[p * H:(p + 1) * H, p:p + 1].set(w5)
    b5p = jnp.tile(b5, (1, pack))                                    # [1, P]
    return w1p, b1p, wh, bh, w5m, b5p


def sdf_decoder_forward(coords, params, tile_m=8192, pack=None):
    """coords: [B, N, 3] float32 -> model_out: [B, N, 1] float32."""
    B, N, C = coords.shape
    assert C == IN_FEATURES
    M = B * N

    if pack is None:
        pack = _default_pack()

    w1p, b1p, wh, bh, w5m, b5p = _pack_params(params, pack)
    Kp, HP = w1p.shape

    # packed rows (P points per row); pad the ragged tail with zeros.
    rows = (M + pack - 1) // pack
    tile_rows = max(8, min(tile_m // pack, _round_up(rows, 8)))
    tile_rows = _round_up(tile_rows, 8)
    if rows > 8:
        # give the grid >= 2 steps so both v7x TensorCores get work (no cost on
        # single-TC v5e/v6e beyond one extra ~0.35us grid step).
        tile_rows = min(tile_rows, _round_up((rows + 1) // 2, 8))
    rows_pad = _round_up(rows, tile_rows)
    grid = (rows_pad // tile_rows,)

    x = coords.reshape(M, C).astype(jnp.float32)
    x = jnp.pad(x, ((0, rows_pad * pack - M), (0, 0)))
    xp = x.reshape(rows_pad, pack * C)                               # [rows_pad, P*3]
    if Kp > pack * C:
        xp = jnp.pad(xp, ((0, 0), (0, Kp - pack * C)))               # zero K cols

    # Explicit VMEM budget: the narrow coord/output blocks pad to 128 lanes in
    # VMEM and dominate the footprint; weights are tiny but double-buffered.
    bpf = 4
    coords_blk = tile_rows * _round_up(Kp, LANE) * bpf
    out_blk = tile_rows * _round_up(pack, LANE) * bpf
    weight_bytes = bpf * (
        _round_up(Kp, 8) * _round_up(HP, LANE)                       # w1p
        + 8 * _round_up(HP, LANE)                                    # b1p
        + NUM_HIDDEN_LAYERS * _round_up(HP, 8) * _round_up(HP, LANE)  # wh
        + NUM_HIDDEN_LAYERS * 8 * _round_up(HP, LANE)                # bh
        + _round_up(HP, 8) * _round_up(pack, LANE)                   # w5m
        + 8 * _round_up(pack, LANE))                                 # b5p
    act_bytes = 6 * tile_rows * _round_up(HP, LANE) * bpf            # live temps headroom
    vmem_limit = 2 * (coords_blk + out_blk) + 2 * weight_bytes + act_bytes + (4 << 20)
    vmem_limit = int(min(max(vmem_limit, 32 << 20), 48 << 20))

    in_specs = [
        pl.BlockSpec((tile_rows, Kp), lambda i: (i, 0)),             # packed coords tile
        pl.BlockSpec(w1p.shape, lambda i: (0, 0)),                   # weights resident
        pl.BlockSpec(b1p.shape, lambda i: (0, 0)),
        pl.BlockSpec(wh.shape, lambda i: (0, 0, 0)),
        pl.BlockSpec(bh.shape, lambda i: (0, 0, 0)),
        pl.BlockSpec(w5m.shape, lambda i: (0, 0)),
        pl.BlockSpec(b5p.shape, lambda i: (0, 0)),
    ]

    out = pl.pallas_call(
        _siren_packed_kernel,
        out_shape=jax.ShapeDtypeStruct((rows_pad, pack), jnp.float32),
        grid_spec=pltpu.PrefetchScalarGridSpec(
            num_scalar_prefetch=0,
            grid=grid,
            in_specs=in_specs,
            out_specs=pl.BlockSpec((tile_rows, pack), lambda i: (i, 0)),
        ),
        compiler_params=pltpu.CompilerParams(
            dimension_semantics=("parallel",),
            vmem_limit_bytes=vmem_limit),
    )(xp, w1p, b1p, wh, bh, w5m, b5p)

    out = out.reshape(rows_pad * pack, OUT_FEATURES)[:M]
    return out.reshape(B, N, OUT_FEATURES)


def reference_forward(coords, params):
    """Pure-JAX reference of the same SIREN MLP (unpacked, unfolded params)."""
    B, N, C = coords.shape
    h = coords.reshape(B * N, C)
    n_layers = len(params)
    for li, (w, b) in enumerate(params):
        h = h @ w + b
        if li != n_layers - 1:
            h = jnp.sin(OMEGA_0 * h)
    return h.reshape(B, N, OUT_FEATURES)


if __name__ == "__main__":
    key = jax.random.PRNGKey(0)
    k_coords, k_params, k_big = jax.random.split(key, 3)

    params = init_siren_params(k_params)

    # small demo shape (exercises the >=2-grid-step split)
    B, N = 2, 128
    coords = jax.random.uniform(k_coords, (B, N, IN_FEATURES), jnp.float32,
                                minval=-1.0, maxval=1.0)
    out = sdf_decoder_forward(coords, params)
    out = jax.block_until_ready(out)
    ref = reference_forward(coords, params)
    np.testing.assert_allclose(np.asarray(out), np.asarray(ref),
                               rtol=1e-4, atol=2e-4)
    assert out.shape == (B, N, OUT_FEATURES)

    # ragged multi-tile shape (exercises pipelining + tail-row padding)
    Bb, Nb = 1, 4097
    coords_big = jax.random.uniform(k_big, (Bb, Nb, IN_FEATURES), jnp.float32,
                                    minval=-1.0, maxval=1.0)
    out_big = sdf_decoder_forward(coords_big, params, tile_m=2048)
    out_big = jax.block_until_ready(out_big)
    ref_big = reference_forward(coords_big, params)
    np.testing.assert_allclose(np.asarray(out_big), np.asarray(ref_big),
                               rtol=1e-4, atol=2e-4)
    assert out_big.shape == (Bb, Nb, OUT_FEATURES)

    print("KERNEL_OK")
</pallas_src>

<mosaic_0001>
module attributes {stable_mosaic.version = 11 : i64} {
  func.func @_siren_packed_kernel(%arg0: i32, %arg1: memref<64x8xf32, #tpu.memory_space<vmem>>, %arg2: memref<8x128xf32, #tpu.memory_space<vmem>>, %arg3: memref<1x128xf32, #tpu.memory_space<vmem>>, %arg4: memref<3x128x128xf32, #tpu.memory_space<vmem>>, %arg5: memref<3x1x128xf32, #tpu.memory_space<vmem>>, %arg6: memref<128x2xf32, #tpu.memory_space<vmem>>, %arg7: memref<1x2xf32, #tpu.memory_space<vmem>>, %arg8: memref<64x2xf32, #tpu.memory_space<vmem>>) attributes {dimension_semantics = [#tpu.dimension_semantics<parallel>], iteration_bounds = array<i64: 2>, scalar_prefetch = 0 : i64, scratch_operands = 0 : i64, tpu.core_type = #tpu.core_type<tc>, window_params = [{transform_indices = @transform_0, window_bounds = array<i64: 64, 8>}, {pipeline_mode = #tpu.pipeline_mode<synchronous>, transform_indices = @transform_1, window_bounds = array<i64: 8, 128>}, {pipeline_mode = #tpu.pipeline_mode<synchronous>, transform_indices = @transform_2, window_bounds = array<i64: 1, 128>}, {pipeline_mode = #tpu.pipeline_mode<synchronous>, transform_indices = @transform_3, window_bounds = array<i64: 3, 128, 128>}, {pipeline_mode = #tpu.pipeline_mode<synchronous>, transform_indices = @transform_4, window_bounds = array<i64: 3, 1, 128>}, {pipeline_mode = #tpu.pipeline_mode<synchronous>, transform_indices = @transform_5, window_bounds = array<i64: 128, 2>}, {pipeline_mode = #tpu.pipeline_mode<synchronous>, transform_indices = @transform_6, window_bounds = array<i64: 1, 2>}, {transform_indices = @transform_7, window_bounds = array<i64: 64, 2>}]} {
    %c0 = arith.constant 0 : index
    %c0_0 = arith.constant 0 : index
    %0 = vector.load %arg1[%c0, %c0_0] : memref<64x8xf32, #tpu.memory_space<vmem>>, vector<64x8xf32>
    %c0_1 = arith.constant 0 : index
    %c0_2 = arith.constant 0 : index
    %1 = vector.load %arg2[%c0_1, %c0_2] : memref<8x128xf32, #tpu.memory_space<vmem>>, vector<8x128xf32>
    %cst = arith.constant dense<0.000000e+00> : vector<64x128xf32>
    %2 = tpu.matmul %0, %1, %cst {dimension_numbers = #tpu.dot_dimension_numbers<[1], [0], [0], [1], [0, 0, 1, 1], [], []>} : vector<64x8xf32>, vector<8x128xf32>, vector<64x128xf32> -> vector<64x128xf32>
    %c0_3 = arith.constant 0 : index
    %c0_4 = arith.constant 0 : index
    %3 = vector.load %arg3[%c0_3, %c0_4] : memref<1x128xf32, #tpu.memory_space<vmem>>, vector<1x128xf32>
    %4 = vector.broadcast %3 : vector<1x128xf32> to vector<64x128xf32>
    %5 = arith.addf %2, %4 : vector<64x128xf32>
    %6 = math.sin %5 : vector<64x128xf32>
    %c0_5 = arith.constant 0 : index
    %c0_6 = arith.constant 0 : index
    %c0_7 = arith.constant 0 : index
    %7 = vector.load %arg4[%c0_5, %c0_6, %c0_7] : memref<3x128x128xf32, #tpu.memory_space<vmem>>, vector<1x128x128xf32>
    %8 = vector.shape_cast %7 : vector<1x128x128xf32> to vector<128x128xf32>
    %cst_8 = arith.constant dense<0.000000e+00> : vector<64x128xf32>
    %9 = tpu.matmul %6, %8, %cst_8 {dimension_numbers = #tpu.dot_dimension_numbers<[1], [0], [0], [1], [0, 0, 1, 1], [], []>} : vector<64x128xf32>, vector<128x128xf32>, vector<64x128xf32> -> vector<64x128xf32>
    %c0_9 = arith.constant 0 : index
    %c0_10 = arith.constant 0 : index
    %c0_11 = arith.constant 0 : index
    %10 = vector.load %arg5[%c0_9, %c0_10, %c0_11] : memref<3x1x128xf32, #tpu.memory_space<vmem>>, vector<1x1x128xf32>
    %11 = vector.shape_cast %10 : vector<1x1x128xf32> to vector<1x128xf32>
    %12 = vector.broadcast %11 : vector<1x128xf32> to vector<64x128xf32>
    %13 = arith.addf %9, %12 : vector<64x128xf32>
    %14 = math.sin %13 : vector<64x128xf32>
    %c1 = arith.constant 1 : index
    %c0_12 = arith.constant 0 : index
    %c0_13 = arith.constant 0 : index
    %15 = vector.load %arg4[%c1, %c0_12, %c0_13] : memref<3x128x128xf32, #tpu.memory_space<vmem>>, vector<1x128x128xf32>
    %16 = vector.shape_cast %15 : vector<1x128x128xf32> to vector<128x128xf32>
    %cst_14 = arith.constant dense<0.000000e+00> : vector<64x128xf32>
    %17 = tpu.matmul %14, %16, %cst_14 {dimension_numbers = #tpu.dot_dimension_numbers<[1], [0], [0], [1], [0, 0, 1, 1], [], []>} : vector<64x128xf32>, vector<128x128xf32>, vector<64x128xf32> -> vector<64x128xf32>
    %c1_15 = arith.constant 1 : index
    %c0_16 = arith.constant 0 : index
    %c0_17 = arith.constant 0 : index
    %18 = vector.load %arg5[%c1_15, %c0_16, %c0_17] : memref<3x1x128xf32, #tpu.memory_space<vmem>>, vector<1x1x128xf32>
    %19 = vector.shape_cast %18 : vector<1x1x128xf32> to vector<1x128xf32>
    %20 = vector.broadcast %19 : vector<1x128xf32> to vector<64x128xf32>
    %21 = arith.addf %17, %20 : vector<64x128xf32>
    %22 = math.sin %21 : vector<64x128xf32>
    %c2 = arith.constant 2 : index
    %c0_18 = arith.constant 0 : index
    %c0_19 = arith.constant 0 : index
    %23 = vector.load %arg4[%c2, %c0_18, %c0_19] : memref<3x128x128xf32, #tpu.memory_space<vmem>>, vector<1x128x128xf32>
    %24 = vector.shape_cast %23 : vector<1x128x128xf32> to vector<128x128xf32>
    %cst_20 = arith.constant dense<0.000000e+00> : vector<64x128xf32>
    %25 = tpu.matmul %22, %24, %cst_20 {dimension_numbers = #tpu.dot_dimension_numbers<[1], [0], [0], [1], [0, 0, 1, 1], [], []>} : vector<64x128xf32>, vector<128x128xf32>, vector<64x128xf32> -> vector<64x128xf32>
    %c2_21 = arith.constant 2 : index
    %c0_22 = arith.constant 0 : index
    %c0_23 = arith.constant 0 : index
    %26 = vector.load %arg5[%c2_21, %c0_22, %c0_23] : memref<3x1x128xf32, #tpu.memory_space<vmem>>, vector<1x1x128xf32>
    %27 = vector.shape_cast %26 : vector<1x1x128xf32> to vector<1x128xf32>
    %28 = vector.broadcast %27 : vector<1x128xf32> to vector<64x128xf32>
    %29 = arith.addf %25, %28 : vector<64x128xf32>
    %30 = math.sin %29 : vector<64x128xf32>
    %c0_24 = arith.constant 0 : index
    %c0_25 = arith.constant 0 : index
    %31 = vector.load %arg6[%c0_24, %c0_25] : memref<128x2xf32, #tpu.memory_space<vmem>>, vector<128x2xf32>
    %cst_26 = arith.constant dense<0.000000e+00> : vector<64x2xf32>
    %32 = tpu.matmul %30, %31, %cst_26 {dimension_numbers = #tpu.dot_dimension_numbers<[1], [0], [0], [1], [0, 0, 1, 1], [], []>} : vector<64x128xf32>, vector<128x2xf32>, vector<64x2xf32> -> vector<64x2xf32>
    %c0_27 = arith.constant 0 : index
    %c0_28 = arith.constant 0 : index
    %33 = vector.load %arg7[%c0_27, %c0_28] : memref<1x2xf32, #tpu.memory_space<vmem>>, vector<1x2xf32>
    %34 = vector.broadcast %33 : vector<1x2xf32> to vector<64x2xf32>
    %35 = arith.addf %32, %34 : vector<64x2xf32>
    %c0_29 = arith.constant 0 : index
    %c0_30 = arith.constant 0 : index
    %36 = vector.load %arg8[%c0_29, %c0_30] : memref<64x2xf32, #tpu.memory_space<vmem>>, vector<64x2xf32>
    tpu.vector_store %arg8[%c0_29, %c0_30], %35 {strides = array<i32>} : memref<64x2xf32, #tpu.memory_space<vmem>>, vector<64x2xf32>,
    return
  }
  func.func @transform_0(%arg0: i32) -> (i32, i32) {
    %c0_i32 = arith.constant 0 : i32
    %c0_i32_0 = arith.constant 0 : i32
    return %arg0, %c0_i32 : i32, i32
  }
  func.func @transform_1(%arg0: i32) -> (i32, i32) {
    %c0_i32 = arith.constant 0 : i32
    %c0_i32_0 = arith.constant 0 : i32
    %c0_i32_1 = arith.constant 0 : i32
    return %c0_i32, %c0_i32_0 : i32, i32
  }
  func.func @transform_2(%arg0: i32) -> (i32, i32) {
    %c0_i32 = arith.constant 0 : i32
    %c0_i32_0 = arith.constant 0 : i32
    %c0_i32_1 = arith.constant 0 : i32
    return %c0_i32, %c0_i32_0 : i32, i32
  }
  func.func @transform_3(%arg0: i32) -> (i32, i32, i32) {
    %c0_i32 = arith.constant 0 : i32
    %c0_i32_0 = arith.constant 0 : i32
    %c0_i32_1 = arith.constant 0 : i32
    %c0_i32_2 = arith.constant 0 : i32
    return %c0_i32, %c0_i32_0, %c0_i32_1 : i32, i32, i32
  }
  func.func @transform_4(%arg0: i32) -> (i32, i32, i32) {
    %c0_i32 = arith.constant 0 : i32
    %c0_i32_0 = arith.constant 0 : i32
    %c0_i32_1 = arith.constant 0 : i32
    %c0_i32_2 = arith.constant 0 : i32
    return %c0_i32, %c0_i32_0, %c0_i32_1 : i32, i32, i32
  }
  func.func @transform_5(%arg0: i32) -> (i32, i32) {
    %c0_i32 = arith.constant 0 : i32
    %c0_i32_0 = arith.constant 0 : i32
    %c0_i32_1 = arith.constant 0 : i32
    return %c0_i32, %c0_i32_0 : i32, i32
  }
  func.func @transform_6(%arg0: i32) -> (i32, i32) {
    %c0_i32 = arith.constant 0 : i32
    %c0_i32_0 = arith.constant 0 : i32
    %c0_i32_1 = arith.constant 0 : i32
    return %c0_i32, %c0_i32_0 : i32, i32
  }
  func.func @transform_7(%arg0: i32) -> (i32, i32) {
    %c0_i32 = arith.constant 0 : i32
    %c0_i32_0 = arith.constant 0 : i32
    return %arg0, %c0_i32 : i32, i32
  }
}

</mosaic_0001>

<llo_original>
// kernel: tpu_custom_call.1
$region0: #{tpu_custom_call.1}
  #allocation0 [shape = 'u32[]', space=smem, size = 0x4, offset = 0x4, fixed_abs, tag = 'smem constant byte address 0x4 - core index']
  #allocation1 [shape = 'u32[144,128]{1,0:T(1,128)}', space=vmem, size = 0x12000, scoped, tag = 'internal scratch']
  %s0 = inlined_call_operand.vmem [shape: f32[128,8], index: 0, kind: input, shape index: {}]
  %s1 = inlined_call_operand.vmem [shape: f32[8,128], index: 1, kind: input, shape index: {}]
  %s2 = inlined_call_operand.vmem [shape: f32[1,128], index: 2, kind: input, shape index: {}]
  %s3 = inlined_call_operand.hbm [shape: f32[3,128,128], index: 3, kind: input, shape index: {}]
  %s4 = inlined_call_operand.vmem [shape: f32[3,1,128], index: 4, kind: input, shape index: {}]
  %s5 = inlined_call_operand.vmem [shape: f32[128,2], index: 5, kind: input, shape index: {}]
  %s6 = inlined_call_operand.vmem [shape: f32[1,2], index: 6, kind: input, shape index: {}]
  %s7 = inlined_call_operand.vmem [shape: f32[128,2], index: 7, kind: output, shape index: {}]
  %s8 = sld [smem:[#allocation0]]
  $region65: #{tpu_custom_call.1} parent=0
    _
  %s10 = ssub.s32 1, %s8
  %s11 = scalar_select 0, %s10, %s8
  $region1: #{tpu_custom_call.1} parent=0
    #allocation2 [shape = 'u8[196608]{0}', space=vmem, size = 0x30000, scoped, tag = 'input window, operand 3, single buffered']
    #allocation3 [shape = 's32[2]{0}', space=sflag, size = 0x8, scoped, tag = 'scoped memory for tpu_custom_call.1']
    %12 = vsyncpa [#allocation3], 0
    loop: start=0, step=1, limit=4
    $region2: #{tpu_custom_call.1} parent=1 // loop_pre_header
      _
    $region3: #{tpu_custom_call.1} parent=1 // loop_header
      %s14 = sphi 0, %s18
      %p15 = scmp.ge.s32.totalorder %s14, 4
      %s24 = sphi 0, %s26
      %s27 = sphi 0, %s24
      %s28 = sphi 0, %s27
      %s44 = sphi 0, %s28
      %s48 = sphi 0, %s48
      %s50 = sphi 0, %s48
      %s51 = sphi 0, %s50
      %s65 = sphi 0, %s51
      %s69 = sphi 0, %s69
      %s71 = sphi 0, %s69
      %s72 = sphi 0, %s71
      %s86 = sphi 0, %s72
      %s90 = sphi 0, %s90
      %s92 = sphi 0, %s90
      %s93 = sphi 0, %s92
      %s107 = sphi 0, %s93
      %s111 = sphi 0, %s111
      %s113 = sphi 0, %s111
      %s114 = sphi 0, %s113
      %s128 = sphi 0, %s114
      %s132 = sphi 0, %s132
      %s134 = sphi 0, %s132
      %s135 = sphi 0, %s134
      %s149 = sphi 0, %s135
      %s153 = sphi 0, %s153
      %s155 = sphi 0, %s153
      %s156 = sphi 0, %s155
      %s170 = sphi 0, %s156
      %s176 = sphi 0, %s178
      %s179 = sphi 0, %s176
      %s180 = sphi 0, %s179
      %s196 = sphi 0, %s180
    $region4: #{tpu_custom_call.1} parent=1 // loop_header_branch
      %17 = sbr.rel (%p15) target = $region8
    $region5: #{tpu_custom_call.1} parent=1 // loop_body
      %s19 = ssub.s32 %s14, 1
      %s20 = ssub.s32 %s14, 2
      %s21 = sadd.s32 %s14, 1
      %s22 = ssub.s32 %s14, %s21
      %p23 = scmp.eq.s32.totalorder %s22, 0
      %s25 = sadd.s32 %s24, 1
      %s26 = scalar_select %p23, %s24, %s25
      %p29 = pneg %p23
      %p30 = scmp.eq.s32.totalorder %s14, 1
      %p31 = por %p29, %p30
      %p32 = scmp.ne.s32.totalorder %s24, %s27
      %p33 = scmp.eq.s32.totalorder %s14, 0
      %p34 = por %p32, %p33
      %p35 = scmp.ne.s32.totalorder %s24, %s27
      %p36 = scmp.eq.s32.totalorder %s19, 1
      %p37 = por %p35, %p36
      %p38 = scmp.ne.s32.totalorder %s27, %s28
      %p39 = scmp.eq.s32.totalorder %s19, 0
      %p40 = por %p38, %p39
      %p41 = scmp.ne.s32.totalorder %s27, %s28
      %p42 = scmp.eq.s32.totalorder %s20, 1
      %p43 = por %p41, %p42
      %p45 = scmp.ne.s32.totalorder %s28, %s44
      %p46 = scmp.eq.s32.totalorder %s20, 0
      %p47 = por %p45, %p46
      %s49 = sadd.s32 %s48, 1
      %p52 = scmp.eq.s32.totalorder %s14, 1
      %p53 = scmp.ne.s32.totalorder %s48, %s50
      %p54 = scmp.eq.s32.totalorder %s14, 0
      %p55 = por %p53, %p54
      %p56 = scmp.ne.s32.totalorder %s48, %s50
      %p57 = scmp.eq.s32.totalorder %s19, 1
      %p58 = por %p56, %p57
      %p59 = scmp.ne.s32.totalorder %s50, %s51
      %p60 = scmp.eq.s32.totalorder %s19, 0
      %p61 = por %p59, %p60
      %p62 = scmp.ne.s32.totalorder %s50, %s51
      %p63 = scmp.eq.s32.totalorder %s20, 1
      %p64 = por %p62, %p63
      %p66 = scmp.ne.s32.totalorder %s51, %s65
      %p67 = scmp.eq.s32.totalorder %s20, 0
      %p68 = por %p66, %p67
      %s70 = sadd.s32 %s69, 1
      %p73 = scmp.eq.s32.totalorder %s14, 1
      %p74 = scmp.ne.s32.totalorder %s69, %s71
      %p75 = scmp.eq.s32.totalorder %s14, 0
      %p76 = por %p74, %p75
      %p77 = scmp.ne.s32.totalorder %s69, %s71
      %p78 = scmp.eq.s32.totalorder %s19, 1
      %p79 = por %p77, %p78
      %p80 = scmp.ne.s32.totalorder %s71, %s72
      %p81 = scmp.eq.s32.totalorder %s19, 0
      %p82 = por %p80, %p81
      %p83 = scmp.ne.s32.totalorder %s71, %s72
      %p84 = scmp.eq.s32.totalorder %s20, 1
      %p85 = por %p83, %p84
      %p87 = scmp.ne.s32.totalorder %s72, %s86
      %p88 = scmp.eq.s32.totalorder %s20, 0
      %p89 = por %p87, %p88
      %s91 = sadd.s32 %s90, 1
      %p94 = scmp.eq.s32.totalorder %s14, 1
      %p95 = scmp.ne.s32.totalorder %s90, %s92
      %p96 = scmp.eq.s32.totalorder %s14, 0
      %p97 = por %p95, %p96
      %p98 = scmp.ne.s32.totalorder %s90, %s92
      %p99 = scmp.eq.s32.totalorder %s19, 1
      %p100 = por %p98, %p99
      %p101 = scmp.ne.s32.totalorder %s92, %s93
      %p102 = scmp.eq.s32.totalorder %s19, 0
      %p103 = por %p101, %p102
      %p104 = scmp.ne.s32.totalorder %s92, %s93
      %p105 = scmp.eq.s32.totalorder %s20, 1
      %p106 = por %p104, %p105
      %p108 = scmp.ne.s32.totalorder %s93, %s107
      %p109 = scmp.eq.s32.totalorder %s20, 0
      %p110 = por %p108, %p109
      %s112 = sadd.s32 %s111, 1
      %p115 = scmp.eq.s32.totalorder %s14, 1
      %p116 = scmp.ne.s32.totalorder %s111, %s113
      %p117 = scmp.eq.s32.totalorder %s14, 0
      %p118 = por %p116, %p117
      %p119 = scmp.ne.s32.totalorder %s111, %s113
      %p120 = scmp.eq.s32.totalorder %s19, 1
      %p121 = por %p119, %p120
      %p122 = scmp.ne.s32.totalorder %s113, %s114
      %p123 = scmp.eq.s32.totalorder %s19, 0
      %p124 = por %p122, %p123
      %p125 = scmp.ne.s32.totalorder %s113, %s114
      %p126 = scmp.eq.s32.totalorder %s20, 1
      %p127 = por %p125, %p126
      %p129 = scmp.ne.s32.totalorder %s114, %s128
      %p130 = scmp.eq.s32.totalorder %s20, 0
      %p131 = por %p129, %p130
      %s133 = sadd.s32 %s132, 1
      %p136 = scmp.eq.s32.totalorder %s14, 1
      %p137 = scmp.ne.s32.totalorder %s132, %s134
      %p138 = scmp.eq.s32.totalorder %s14, 0
      %p139 = por %p137, %p138
      %p140 = scmp.ne.s32.totalorder %s132, %s134
      %p141 = scmp.eq.s32.totalorder %s19, 1
      %p142 = por %p140, %p141
      %p143 = scmp.ne.s32.totalorder %s134, %s135
      %p144 = scmp.eq.s32.totalorder %s19, 0
      %p145 = por %p143, %p144
      %p146 = scmp.ne.s32.totalorder %s134, %s135
      %p147 = scmp.eq.s32.totalorder %s20, 1
      %p148 = por %p146, %p147
      %p150 = scmp.ne.s32.totalorder %s135, %s149
      %p151 = scmp.eq.s32.totalorder %s20, 0
      %p152 = por %p150, %p151
      %s154 = sadd.s32 %s153, 1
      %p157 = scmp.eq.s32.totalorder %s14, 1
      %p158 = scmp.ne.s32.totalorder %s153, %s155
      %p159 = scmp.eq.s32.totalorder %s14, 0
      %p160 = por %p158, %p159
      %p161 = scmp.ne.s32.totalorder %s153, %s155
      %p162 = scmp.eq.s32.totalorder %s19, 1
      %p163 = por %p161, %p162
      %p164 = scmp.ne.s32.totalorder %s155, %s156
      %p165 = scmp.eq.s32.totalorder %s19, 0
      %p166 = por %p164, %p165
      %p167 = scmp.ne.s32.totalorder %s155, %s156
      %p168 = scmp.eq.s32.totalorder %s20, 1
      %p169 = por %p167, %p168
      %p171 = scmp.ne.s32.totalorder %s156, %s170
      %p172 = scmp.eq.s32.totalorder %s20, 0
      %p173 = por %p171, %p172
      %s174 = ssub.s32 %s14, %s21
      %p175 = scmp.eq.s32.totalorder %s174, 0
      %s177 = sadd.s32 %s176, 1
      %s178 = scalar_select %p175, %s176, %s177
      %p181 = pneg %p175
      %p182 = scmp.eq.s32.totalorder %s14, 1
      %p183 = por %p181, %p182
      %p184 = scmp.ne.s32.totalorder %s176, %s179
      %p185 = scmp.eq.s32.totalorder %s14, 0
      %p186 = por %p184, %p185
      %p187 = scmp.ne.s32.totalorder %s176, %s179
      %p188 = scmp.eq.s32.totalorder %s19, 1
      %p189 = por %p187, %p188
      %p190 = scmp.ne.s32.totalorder %s179, %s180
      %p191 = scmp.eq.s32.totalorder %s19, 0
      %p192 = por %p190, %p191
      %p193 = scmp.ne.s32.totalorder %s179, %s180
      %p194 = scmp.eq.s32.totalorder %s20, 1
      %p195 = por %p193, %p194
      %p197 = scmp.ne.s32.totalorder %s180, %s196
      %p198 = scmp.eq.s32.totalorder %s20, 0
      %p199 = por %p197, %p198
      %p200 = scmp.le.s32.totalorder 1, %s14
      %p201 = scmp.lt.s32.totalorder %s14, 3
      %p202 = pnand %p200, %p201
      %p203 = pneg %p202
      // Predicated region
      $region9: #{tpu_custom_call.1} parent=5 // pred_check
        _
      $region10: #{tpu_custom_call.1} parent=5 // pred_check_branch
        %205 = sbr.rel (%p202) target = $region12
      $region11: #{tpu_custom_call.1} parent=5 // pred_region
        %s206 = ssub.s32 %s14, 1
        // Predicated region
        $region13: #{tpu_custom_call.1} parent=11 // pred_check
          %p207 = pneg %p61
        $region14: #{tpu_custom_call.1} parent=11 // pred_check_branch
          %209 = sbr.rel (%p207) target = $region16
        $region15: #{tpu_custom_call.1} parent=11 // pred_region
          _
        $region16: #{tpu_custom_call.1} parent=11 // pred_fallthru
          _
        // Predicated region
        $region17: #{tpu_custom_call.1} parent=11 // pred_check
          %p210 = pneg %p82
        $region18: #{tpu_custom_call.1} parent=11 // pred_check_branch
          %212 = sbr.rel (%p210) target = $region20
        $region19: #{tpu_custom_call.1} parent=11 // pred_region
          _
        $region20: #{tpu_custom_call.1} parent=11 // pred_fallthru
          _
        // Predicated region
        $region21: #{tpu_custom_call.1} parent=11 // pred_check
          %p213 = pneg %p103
        $region22: #{tpu_custom_call.1} parent=11 // pred_check_branch
          %215 = sbr.rel (%p213) target = $region24
        $region23: #{tpu_custom_call.1} parent=11 // pred_region
          %s217 = ssub.s32 6144, 6144
          %218 = vsyncadd [#allocation3], %s217
          %s219 = sshll.u32 [#allocation2], 4
          %s220 = int_to_ptr.vmem [resolvable:$true] %s219
          %225 = dma.hbm_to_vmem [thread:$0]  %s3, 6144, %s220, [#allocation3], 128, 128, 8
        $region24: #{tpu_custom_call.1} parent=11 // pred_fallthru
          _
        // Predicated region
        $region25: #{tpu_custom_call.1} parent=11 // pred_check
          %p226 = pneg %p124
        $region26: #{tpu_custom_call.1} parent=11 // pred_check_branch
          %228 = sbr.rel (%p226) target = $region28
        $region27: #{tpu_custom_call.1} parent=11 // pred_region
          _
        $region28: #{tpu_custom_call.1} parent=11 // pred_fallthru
          _
        // Predicated region
        $region29: #{tpu_custom_call.1} parent=11 // pred_check
          %p229 = pneg %p145
        $region30: #{tpu_custom_call.1} parent=11 // pred_check_branch
          %231 = sbr.rel (%p229) target = $region32
        $region31: #{tpu_custom_call.1} parent=11 // pred_region
          _
        $region32: #{tpu_custom_call.1} parent=11 // pred_fallthru
          _
        // Predicated region
        $region33: #{tpu_custom_call.1} parent=11 // pred_check
          %p232 = pneg %p166
        $region34: #{tpu_custom_call.1} parent=11 // pred_check_branch
          %234 = sbr.rel (%p232) target = $region36
        $region35: #{tpu_custom_call.1} parent=11 // pred_region
          _
        $region36: #{tpu_custom_call.1} parent=11 // pred_fallthru
          _
      $region12: #{tpu_custom_call.1} parent=5 // pred_fallthru
        _
      %p235 = scmp.lt.s32.totalorder %s14, 2
      // Predicated region
      $region37: #{tpu_custom_call.1} parent=5 // pred_check
        %p236 = pneg %p235
      $region38: #{tpu_custom_call.1} parent=5 // pred_check_branch
        %238 = sbr.rel (%p236) target = $region40
      $region39: #{tpu_custom_call.1} parent=5 // pred_region
        // Predicated region
        $region41: #{tpu_custom_call.1} parent=39 // pred_check
          %p239 = pneg %p34
        $region42: #{tpu_custom_call.1} parent=39 // pred_check_branch
          %241 = sbr.rel (%p239) target = $region44
        $region43: #{tpu_custom_call.1} parent=39 // pred_region
          %s242 = smul.u32 8, %s14
          %p243 = scmp.lt.s32.totalorder %s242, 15
          %s244 = scalar_select %p243, %s242, 15
          %s245 = smul.addr %s244, 8
          %s246 = scalar_lea.vmem %s0, %s245
          %s247 = smul.u32 8, %s14
        $region44: #{tpu_custom_call.1} parent=39 // pred_fallthru
          _
      $region40: #{tpu_custom_call.1} parent=5 // pred_fallthru
        _
      %p248 = scmp.le.s32.totalorder 1, %s14
      %p249 = scmp.lt.s32.totalorder %s14, 3
      %p250 = pnand %p248, %p249
      %p251 = pneg %p250
      // Predicated region
      $region45: #{tpu_custom_call.1} parent=5 // pred_check
        _
      $region46: #{tpu_custom_call.1} parent=5 // pred_check_branch
        %253 = sbr.rel (%p250) target = $region48
      $region47: #{tpu_custom_call.1} parent=5 // pred_region
        %s254 = ssub.s32 %s14, 1
        // Predicated region
        $region49: #{tpu_custom_call.1} parent=47 // pred_check
          %p255 = pneg %p103
        $region50: #{tpu_custom_call.1} parent=47 // pred_check_branch
          %257 = sbr.rel (%p255) target = $region52
        $region51: #{tpu_custom_call.1} parent=47 // pred_region
          %258 = dma.done [#allocation3], 6144
        $region52: #{tpu_custom_call.1} parent=47 // pred_fallthru
          _
        %s259 = smul.u32 8, %s19
        %p260 = scmp.lt.s32.totalorder %s259, 15
        %s261 = scalar_select %p260, %s259, 15
        %s262 = smul.addr %s261, 8
        %s263 = scalar_lea.vmem %s0, %s262
        %p264 = pneg %p40
        %p265 = pneg %p37
        %p266 = pneg %p61
        %p267 = pneg %p58
        %p268 = pneg %p82
        %p269 = pneg %p79
        %p270 = pneg %p103
        %p271 = pneg %p100
        %p272 = pneg %p124
        %p273 = pneg %p121
        %p274 = pneg %p145
        %p275 = pneg %p142
        %p276 = pneg %p166
        %p277 = pneg %p163
        %p278 = pneg %p192
        %p279 = pneg %p189
        %s280 = smul.u32 8, %s19
        %p281 = scmp.lt.s32.totalorder %s280, 15
        %s282 = scalar_select %p281, %s280, 15
        %s283 = smul.addr %s282, 8
        %s284 = scalar_lea.vmem %s7, %s283
        %s285 = smul.u32 8, %s19
        %p286 = scmp.lt.s32.totalorder %s285, 15
        %s287 = scalar_select %p286, %s285, 15
        %s288 = smul.addr %s287, 8
        %s289 = scalar_lea.vmem %s0, %s288
        %s290 = smul.u32 8, %s19
        %s291 = smul.u32 8, %s19
        %p292 = scmp.lt.s32.totalorder %s291, 15
        %s293 = scalar_select %p292, %s291, 15
        %s294 = smul.addr %s293, 8
        %s295 = scalar_lea.vmem %s7, %s294
        %s296 = smul.u32 8, %s19
        %v297 = vld [vmem:[%s289] sm:$0xff]
        %v298 = vld [vmem:[%s289 + $0x8] sm:$0xff]
        %v299 = vld [vmem:[%s289 + $0x10] sm:$0xff]
        %v300 = vld [vmem:[%s289 + $0x18] sm:$0xff]
        %v301 = vld [vmem:[%s289 + $0x20] sm:$0xff]
        %v302 = vld [vmem:[%s289 + $0x28] sm:$0xff]
        %v303 = vld [vmem:[%s289 + $0x30] sm:$0xff]
        %v304 = vld [vmem:[%s289 + $0x38] sm:$0xff]
        %v305 = vld [vmem:[%s1] sm:$0xff]
        %v306 = vld [vmem:[%s2] sm:$0x1]
        %v308 = vlaneseq
        %v309 = vshrl.u32 %v308, 7
        %v310 = vsub.s32 0, %v309
        %v311 = vrot.slane %v306, %v310
        %vm313 = vcmask 64512
        %v315 = vsel %vm313, %v297, 0
        %v318 = vsel %vm313, %v298, 0
        %v321 = vsel %vm313, %v299, 0
        %v324 = vsel %vm313, %v300, 0
        %v327 = vsel %vm313, %v301, 0
        %v330 = vsel %vm313, %v302, 0
        %v333 = vsel %vm313, %v303, 0
        %v336 = vsel %vm313, %v304, 0
        %338 = vmatprep.subr.mxu0 0.0
        %339 = vmatpush1.msra.mxu0 %v305
        %340 = vmatprep.subr.mxu0 0.0
        %341 = vmatpush1.msra.mxu0 0.0
        %342 = vmatprep.subr.mxu0 0.0
        %343 = vmatpush1.msra.mxu0 0.0
        %344 = vmatprep.subr.mxu0 0.0
        %345 = vmatpush1.msra.mxu0 0.0
        %346 = vmatprep.subr.mxu0 0.0
        %347 = vmatpush1.msra.mxu0 0.0
        %348 = vmatprep.subr.mxu0 0.0
        %349 = vmatpush1.msra.mxu0 0.0
        %350 = vmatprep.subr.mxu0 0.0
        %351 = vmatpush1.msra.mxu0 0.0
        %352 = vmatprep.subr.mxu0 0.0
        %353 = vmatpush1.msra.mxu0 0.0
        %354 = vmatprep.subr.mxu0 0.0
        %355 = vmatpush1.msra.mxu0 0.0
        %356 = vmatprep.subr.mxu0 0.0
        %357 = vmatpush1.msra.mxu0 0.0
        %358 = vmatprep.subr.mxu0 0.0
        %359 = vmatpush1.msra.mxu0 0.0
        %360 = vmatprep.subr.mxu0 0.0
        %361 = vmatpush1.msra.mxu0 0.0
        %362 = vmatprep.subr.mxu0 0.0
        %363 = vmatpush1.msra.mxu0 0.0
        %364 = vmatprep.subr.mxu0 0.0
        %365 = vmatpush1.msra.mxu0 0.0
        %366 = vmatprep.subr.mxu0 0.0
        %367 = vmatpush1.msra.mxu0 0.0
        %368 = vmatprep.subr.mxu0 0.0
        %369 = vmatpush1.msra.mxu0 0.0
        %370 = vmatprep.subr.mxu0 0.0
        %371 = vmatpush1.msra.mxu0 0.0
        %372 = vmatprep.subr.mxu0 0.0
        %373 = vmatpush1.msra.mxu0 0.0
        %374 = vmatprep.subr.mxu0 0.0
        %375 = vmatpush1.msra.mxu0 0.0
        %376 = vmatprep.subr.mxu0 0.0
        %377 = vmatpush1.msra.mxu0 0.0
        %378 = vmatprep.subr.mxu0 0.0
        %379 = vmatpush1.msra.mxu0 0.0
        %380 = vmatprep.subr.mxu0 0.0
        %381 = vmatpush1.msra.mxu0 0.0
        %382 = vmatprep.subr.mxu0 0.0
        %383 = vmatpush1.msra.mxu0 0.0
        %384 = vmatprep.subr.mxu0 0.0
        %385 = vmatpush1.msra.mxu0 0.0
        %386 = vmatprep.subr.mxu0 0.0
        %387 = vmatpush1.msra.mxu0 0.0
        %388 = vmatprep.subr.mxu0 0.0
        %389 = vmatpush1.msra.mxu0 0.0
        %390 = vmatprep.subr.mxu0 0.0
        %391 = vmatpush1.msra.mxu0 0.0
        %392 = vmatprep.subr.mxu0 0.0
        %393 = vmatpush1.msra.mxu0 0.0
        %394 = vmatprep.subr.mxu0 0.0
        %395 = vmatpush1.msra.mxu0 0.0
        %396 = vmatprep.subr.mxu0 0.0
        %397 = vmatpush1.msra.mxu0 0.0
        %398 = vmatprep.subr.mxu0 0.0
        %399 = vmatpush1.msra.mxu0 0.0
        %400 = vmatprep.subr.mxu0 0.0
        %401 = vmatpush1.msra.mxu0 0.0
        %402 = vmatprep.mubr.f32.mxu0 0.0
        %403 = vmatmul.mubr.f32.gmra.mrb[0].mxu0 %v315
        %v404 = vpop.f32.mrb[0].mxu0
        %v405 = vadd.f32 %v311, %v404
        %v406 = vpop.f32.mrb[0].mxu0
        %407 = vmatprep.mubr.f32.mxu0 0.0
        %408 = vmatmul.mubr.f32.gmra.mrb[0].mxu0 %v318
        %v409 = vpop.f32.mrb[0].mxu0
        %v410 = vadd.f32 %v311, %v409
        %v411 = vpop.f32.mrb[0].mxu0
        %412 = vmatprep.mubr.f32.mxu0 0.0
        %413 = vmatmul.mubr.f32.gmra.mrb[0].mxu0 %v321
        %v414 = vpop.f32.mrb[0].mxu0
        %v415 = vadd.f32 %v311, %v414
        %v416 = vpop.f32.mrb[0].mxu0
        %417 = vmatprep.mubr.f32.mxu0 0.0
        %418 = vmatmul.mubr.f32.gmra.mrb[0].mxu0 %v324
        %v419 = vpop.f32.mrb[0].mxu0
        %v420 = vadd.f32 %v311, %v419
        %v421 = vpop.f32.mrb[0].mxu0
        %422 = vmatprep.mubr.f32.mxu0 0.0
        %423 = vmatmul.mubr.f32.gmra.mrb[0].mxu0 %v327
        %v424 = vpop.f32.mrb[0].mxu0
        %v425 = vadd.f32 %v311, %v424
        %v426 = vpop.f32.mrb[0].mxu0
        %427 = vmatprep.mubr.f32.mxu0 0.0
        %428 = vmatmul.mubr.f32.gmra.mrb[0].mxu0 %v330
        %v429 = vpop.f32.mrb[0].mxu0
        %v430 = vadd.f32 %v311, %v429
        %v431 = vpop.f32.mrb[0].mxu0
        %432 = vmatprep.mubr.f32.mxu0 0.0
        %433 = vmatmul.mubr.f32.gmra.mrb[0].mxu0 %v333
        %v434 = vpop.f32.mrb[0].mxu0
        %v435 = vadd.f32 %v311, %v434
        %v436 = vpop.f32.mrb[0].mxu0
        %437 = vmatprep.mubr.f32.mxu0 0.0
        %438 = vmatmul.mubr.f32.gmra.mrb[0].mxu0 %v336
        %v439 = vpop.f32.mrb[0].mxu0
        %v440 = vadd.f32 %v311, %v439
        %v441 = vpop.f32.mrb[0].mxu0
        %442 = vdwg.mxu0
        %v443 = vand.u32 2147483647, %v405
        %vm444 = vcmp.le.f32.partialorder %v443, 0.7853982
        %vm445 = vcmp.lt.s32.totalorder %v405, 0
        %v446 = vand.u32 %v405, 2139095040
        %v447 = vshrl.u32 %v446, 23
        %v448 = vsub.s32 %v447, 127
        %v449 = vand.u32 2147483647, %v405
        %v450 = vand.u32 %v449, 8388607
        %v451 = vor.u32 %v450, 8388608
        %v452 = vsub.s32 0, %v451
        %v453 = vadd.s32 %v448, 1
        %vm454 = vcmp.gt.s32.totalorder %v453, 0
        %v455 = vsel %vm454, %v453, 0
        %v456 = vshrl.u32 %v455, 5
        %v457 = vand.u32 %v455, 31
        %v458 = vsub.s32 32, %v457
        %v459 = vshrl.u32 683565275, %v458
        %v460 = vshll.u32 683565275, %v457
        %v461 = vshrl.u32 2475754826, %v458
        %v462 = vor.u32 %v460, %v461
        %v463 = vshll.u32 2475754826, %v457
        %v464 = vshrl.u32 2131351028, %v458
        %v465 = vor.u32 %v463, %v464
        %v466 = vshll.u32 2131351028, %v457
        %v467 = vshrl.u32 2102212464, %v458
        %v468 = vor.u32 %v466, %v467
        %v469 = vshll.u32 2102212464, %v457
        %v470 = vshrl.u32 920167782, %v458
        %v471 = vor.u32 %v469, %v470
        %v472 = vshll.u32 920167782, %v457
        %v473 = vshrl.u32 1326507024, %v458
        %v474 = vor.u32 %v472, %v473
        %vm475 = vcmp.lt.s32.totalorder %v456, 1
        %vm476 = vcmp.lt.s32.totalorder %v456, 2
        %vm477 = vcmp.lt.s32.totalorder %v456, 3
        %vm478 = vcmp.lt.s32.totalorder %v456, 4
        %v479 = vsel %vm475, %v459, %v462
        %v480 = vsel %vm478, %v468, 2102212464
        %v481 = vsel %vm477, %v465, %v480
        %v482 = vsel %vm476, %v479, %v481
        %v483 = vsel %vm475, %v462, %v465
        %v484 = vsel %vm478, %v471, 920167782
        %v485 = vsel %vm477, %v468, %v484
        %v486 = vsel %vm476, %v483, %v485
        %v487 = vsel %vm475, %v465, %v468
        %v488 = vsel %vm478, %v474, 1326507024
        %v489 = vsel %vm477, %v471, %v488
        %v490 = vsel %vm476, %v487, %v489
        %v491 = vshll.u32 %v451, 8
        %v492 = vmul.u32.u64.compose %v491, %v490
        %v493 = vextract.low.u32 %v492
        %v494 = vextract.high.u32 %v492
        %v495 = vmul.u32.u64.compose %v491, %v486
        %v496 = vextract.low.u32 %v495
        %v497 = vextract.high.u32 %v495
        %v498 = vmul.u32 %v491, %v482
        %v499 = vadd.s32 %v494, %v496
        %vm500 = vc.u32 %v494, %v496
        %v501 = vadd.s32 %v497, 1
        %v502 = vsel %vm500, %v501, %v497
        %v503 = vadd.s32 %v498, %v502
        %v504 = vadd.s32 %v503, 536870912
        %v505 = vshrl.u32 %v504, 30
        %v506 = vshll.u32 %v505, 30
        %v507 = vsub.s32 %v503, %v506
        %vm508 = vcmp.lt.s32.totalorder %v507, 0
        %v509 = vsub.s32 0, %v507
        %v510 = vsel %vm508, %v509, %v507
        %v511 = vclz %v510
        %v512 = vsub.s32 %v511, 2
        %vm513 = vcmp.gt.s32.totalorder 0, %v512
        %v514 = vsel %vm513, 0, %v512
        %v515 = vsub.s32 32, %v514
        %v516 = vshll.u32 %v507, %v514
        %v517 = vshrl.u32 %v499, %v515
        %v518 = vor.u32 %v516, %v517
        %v519 = vsub.s32 4294967266, %v514
        %v520 = vadd.s32 %v519, 127
        %v521 = vshll.u32 %v520, 23
        %v522 = vor.u32 4788187, %v521
        %v523 = vand.u32 2147483647, %v522
        %v525 = vcvt.s32.f32 %v518
        %v526 = vmul.f32 %v525, %v523
        %v527 = vxor.u32 %v526, 2147483648
        %v528 = vsel %vm445, %v527, %v526
        %v529 = vsub.s32 4, %v505
        %v530 = vsel %vm445, %v529, %v505
        %v531 = vsel %vm444, %v405, %v528
        %v532 = vsel %vm444, 0, %v530
        %v533 = vcosq.f32.pop %v531
        %v534 = vsinq.f32.pop %v531
        %vm535 = vweird.f32 %v405
        %v536 = vadd.s32 %v532, 3
        %v537 = vand.u32 %v536, 3
        %vm538 = vcmp.lt.s32.totalorder %v537, 2
        %vm539 = vcmp.eq.s32.totalorder %v537, 0
        %v540 = vxor.u32 %v534, 2147483648
        %v541 = vsel %vm539, %v533, %v540
        %vm542 = vcmp.eq.s32.totalorder %v537, 2
        %v543 = vxor.u32 %v533, 2147483648
        %v544 = vsel %vm542, %v543, %v534
        %v545 = vsel %vm538, %v541, %v544
        %v546 = vsel %vm535, nan, %v545
        %v547 = vand.u32 2147483647, %v410
        %vm548 = vcmp.le.f32.partialorder %v547, 0.7853982
        %vm549 = vcmp.lt.s32.totalorder %v410, 0
        %v550 = vand.u32 %v410, 2139095040
        %v551 = vshrl.u32 %v550, 23
        %v552 = vsub.s32 %v551, 127
        %v553 = vand.u32 2147483647, %v410
        %v554 = vand.u32 %v553, 8388607
        %v555 = vor.u32 %v554, 8388608
        %v556 = vsub.s32 0, %v555
        %v557 = vadd.s32 %v552, 1
        %vm558 = vcmp.gt.s32.totalorder %v557, 0
        %v559 = vsel %vm558, %v557, 0
        %v560 = vshrl.u32 %v559, 5
        %v561 = vand.u32 %v559, 31
        %v562 = vsub.s32 32, %v561
        %v563 = vshrl.u32 683565275, %v562
        %v564 = vshll.u32 683565275, %v561
        %v565 = vshrl.u32 2475754826, %v562
        %v566 = vor.u32 %v564, %v565
        %v567 = vshll.u32 2475754826, %v561
        %v568 = vshrl.u32 2131351028, %v562
        %v569 = vor.u32 %v567, %v568
        %v570 = vshll.u32 2131351028, %v561
        %v571 = vshrl.u32 2102212464, %v562
        %v572 = vor.u32 %v570, %v571
        %v573 = vshll.u32 2102212464, %v561
        %v574 = vshrl.u32 920167782, %v562
        %v575 = vor.u32 %v573, %v574
        %v576 = vshll.u32 920167782, %v561
        %v577 = vshrl.u32 1326507024, %v562
        %v578 = vor.u32 %v576, %v577
        %vm579 = vcmp.lt.s32.totalorder %v560, 1
        %vm580 = vcmp.lt.s32.totalorder %v560, 2
        %vm581 = vcmp.lt.s32.totalorder %v560, 3
        %vm582 = vcmp.lt.s32.totalorder %v560, 4
        %v583 = vsel %vm579, %v563, %v566
        %v584 = vsel %vm582, %v572, 2102212464
        %v585 = vsel %vm581, %v569, %v584
        %v586 = vsel %vm580, %v583, %v585
        %v587 = vsel %vm579, %v566, %v569
        %v588 = vsel %vm582, %v575, 920167782
        %v589 = vsel %vm581, %v572, %v588
        %v590 = vsel %vm580, %v587, %v589
        %v591 = vsel %vm579, %v569, %v572
        %v592 = vsel %vm582, %v578, 1326507024
        %v593 = vsel %vm581, %v575, %v592
        %v594 = vsel %vm580, %v591, %v593
        %v595 = vshll.u32 %v555, 8
        %v596 = vmul.u32.u64.compose %v595, %v594
        %v597 = vextract.low.u32 %v596
        %v598 = vextract.high.u32 %v596
        %v599 = vmul.u32.u64.compose %v595, %v590
        %v600 = vextract.low.u32 %v599
        %v601 = vextract.high.u32 %v599
        %v602 = vmul.u32 %v595, %v586
        %v603 = vadd.s32 %v598, %v600
        %vm604 = vc.u32 %v598, %v600
        %v605 = vadd.s32 %v601, 1
        %v606 = vsel %vm604, %v605, %v601
        %v607 = vadd.s32 %v602, %v606
        %v608 = vadd.s32 %v607, 536870912
        %v609 = vshrl.u32 %v608, 30
        %v610 = vshll.u32 %v609, 30
        %v611 = vsub.s32 %v607, %v610
        %vm612 = vcmp.lt.s32.totalorder %v611, 0
        %v613 = vsub.s32 0, %v611
        %v614 = vsel %vm612, %v613, %v611
        %v615 = vclz %v614
        %v616 = vsub.s32 %v615, 2
        %vm617 = vcmp.gt.s32.totalorder 0, %v616
        %v618 = vsel %vm617, 0, %v616
        %v619 = vsub.s32 32, %v618
        %v620 = vshll.u32 %v611, %v618
        %v621 = vshrl.u32 %v603, %v619
        %v622 = vor.u32 %v620, %v621
        %v623 = vsub.s32 4294967266, %v618
        %v624 = vadd.s32 %v623, 127
        %v625 = vshll.u32 %v624, 23
        %v626 = vor.u32 4788187, %v625
        %v627 = vand.u32 2147483647, %v626
        %v629 = vcvt.s32.f32 %v622
        %v630 = vmul.f32 %v629, %v627
        %v631 = vxor.u32 %v630, 2147483648
        %v632 = vsel %vm549, %v631, %v630
        %v633 = vsub.s32 4, %v609
        %v634 = vsel %vm549, %v633, %v609
        %v635 = vsel %vm548, %v410, %v632
        %v636 = vsel %vm548, 0, %v634
        %v637 = vcosq.f32.pop %v635
        %v638 = vsinq.f32.pop %v635
        %vm639 = vweird.f32 %v410
        %v640 = vadd.s32 %v636, 3
        %v641 = vand.u32 %v640, 3
        %vm642 = vcmp.lt.s32.totalorder %v641, 2
        %vm643 = vcmp.eq.s32.totalorder %v641, 0
        %v644 = vxor.u32 %v638, 2147483648
        %v645 = vsel %vm643, %v637, %v644
        %vm646 = vcmp.eq.s32.totalorder %v641, 2
        %v647 = vxor.u32 %v637, 2147483648
        %v648 = vsel %vm646, %v647, %v638
        %v649 = vsel %vm642, %v645, %v648
        %v650 = vsel %vm639, nan, %v649
        %v651 = vand.u32 2147483647, %v415
        %vm652 = vcmp.le.f32.partialorder %v651, 0.7853982
        %vm653 = vcmp.lt.s32.totalorder %v415, 0
        %v654 = vand.u32 %v415, 2139095040
        %v655 = vshrl.u32 %v654, 23
        %v656 = vsub.s32 %v655, 127
        %v657 = vand.u32 2147483647, %v415
        %v658 = vand.u32 %v657, 8388607
        %v659 = vor.u32 %v658, 8388608
        %v660 = vsub.s32 0, %v659
        %v661 = vadd.s32 %v656, 1
        %vm662 = vcmp.gt.s32.totalorder %v661, 0
        %v663 = vsel %vm662, %v661, 0
        %v664 = vshrl.u32 %v663, 5
        %v665 = vand.u32 %v663, 31
        %v666 = vsub.s32 32, %v665
        %v667 = vshrl.u32 683565275, %v666
        %v668 = vshll.u32 683565275, %v665
        %v669 = vshrl.u32 2475754826, %v666
        %v670 = vor.u32 %v668, %v669
        %v671 = vshll.u32 2475754826, %v665
        %v672 = vshrl.u32 2131351028, %v666
        %v673 = vor.u32 %v671, %v672
        %v674 = vshll.u32 2131351028, %v665
        %v675 = vshrl.u32 2102212464, %v666
        %v676 = vor.u32 %v674, %v675
        %v677 = vshll.u32 2102212464, %v665
        %v678 = vshrl.u32 920167782, %v666
        %v679 = vor.u32 %v677, %v678
        %v680 = vshll.u32 920167782, %v665
        %v681 = vshrl.u32 1326507024, %v666
        %v682 = vor.u32 %v680, %v681
        %vm683 = vcmp.lt.s32.totalorder %v664, 1
        %vm684 = vcmp.lt.s32.totalorder %v664, 2
        %vm685 = vcmp.lt.s32.totalorder %v664, 3
        %vm686 = vcmp.lt.s32.totalorder %v664, 4
        %v687 = vsel %vm683, %v667, %v670
        %v688 = vsel %vm686, %v676, 2102212464
        %v689 = vsel %vm685, %v673, %v688
        %v690 = vsel %vm684, %v687, %v689
        %v691 = vsel %vm683, %v670, %v673
        %v692 = vsel %vm686, %v679, 920167782
        %v693 = vsel %vm685, %v676, %v692
        %v694 = vsel %vm684, %v691, %v693
        %v695 = vsel %vm683, %v673, %v676
        %v696 = vsel %vm686, %v682, 1326507024
        %v697 = vsel %vm685, %v679, %v696
        %v698 = vsel %vm684, %v695, %v697
        %v699 = vshll.u32 %v659, 8
        %v700 = vmul.u32.u64.compose %v699, %v698
        %v701 = vextract.low.u32 %v700
        %v702 = vextract.high.u32 %v700
        %v703 = vmul.u32.u64.compose %v699, %v694
        %v704 = vextract.low.u32 %v703
        %v705 = vextract.high.u32 %v703
        %v706 = vmul.u32 %v699, %v690
        %v707 = vadd.s32 %v702, %v704
        %vm708 = vc.u32 %v702, %v704
        %v709 = vadd.s32 %v705, 1
        %v710 = vsel %vm708, %v709, %v705
        %v711 = vadd.s32 %v706, %v710
        %v712 = vadd.s32 %v711, 536870912
        %v713 = vshrl.u32 %v712, 30
        %v714 = vshll.u32 %v713, 30
        %v715 = vsub.s32 %v711, %v714
        %vm716 = vcmp.lt.s32.totalorder %v715, 0
        %v717 = vsub.s32 0, %v715
        %v718 = vsel %vm716, %v717, %v715
        %v719 = vclz %v718
        %v720 = vsub.s32 %v719, 2
        %vm721 = vcmp.gt.s32.totalorder 0, %v720
        %v722 = vsel %vm721, 0, %v720
        %v723 = vsub.s32 32, %v722
        %v724 = vshll.u32 %v715, %v722
        %v725 = vshrl.u32 %v707, %v723
        %v726 = vor.u32 %v724, %v725
        %v727 = vsub.s32 4294967266, %v722
        %v728 = vadd.s32 %v727, 127
        %v729 = vshll.u32 %v728, 23
        %v730 = vor.u32 4788187, %v729
        %v731 = vand.u32 2147483647, %v730
        %v733 = vcvt.s32.f32 %v726
        %v734 = vmul.f32 %v733, %v731
        %v735 = vxor.u32 %v734, 2147483648
        %v736 = vsel %vm653, %v735, %v734
        %v737 = vsub.s32 4, %v713
        %v738 = vsel %vm653, %v737, %v713
        %v739 = vsel %vm652, %v415, %v736
        %v740 = vsel %vm652, 0, %v738
        %v741 = vcosq.f32.pop %v739
        %v742 = vsinq.f32.pop %v739
        %vm743 = vweird.f32 %v415
        %v744 = vadd.s32 %v740, 3
        %v745 = vand.u32 %v744, 3
        %vm746 = vcmp.lt.s32.totalorder %v745, 2
        %vm747 = vcmp.eq.s32.totalorder %v745, 0
        %v748 = vxor.u32 %v742, 2147483648
        %v749 = vsel %vm747, %v741, %v748
        %vm750 = vcmp.eq.s32.totalorder %v745, 2
        %v751 = vxor.u32 %v741, 2147483648
        %v752 = vsel %vm750, %v751, %v742
        %v753 = vsel %vm746, %v749, %v752
        %v754 = vsel %vm743, nan, %v753
        %v755 = vand.u32 2147483647, %v420
        %vm756 = vcmp.le.f32.partialorder %v755, 0.7853982
        %vm757 = vcmp.lt.s32.totalorder %v420, 0
        %v758 = vand.u32 %v420, 2139095040
        %v759 = vshrl.u32 %v758, 23
        %v760 = vsub.s32 %v759, 127
        %v761 = vand.u32 2147483647, %v420
        %v762 = vand.u32 %v761, 8388607
        %v763 = vor.u32 %v762, 8388608
        %v764 = vsub.s32 0, %v763
        %v765 = vadd.s32 %v760, 1
        %vm766 = vcmp.gt.s32.totalorder %v765, 0
        %v767 = vsel %vm766, %v765, 0
        %v768 = vshrl.u32 %v767, 5
        %v769 = vand.u32 %v767, 31
        %v770 = vsub.s32 32, %v769
        %v771 = vshrl.u32 683565275, %v770
        %v772 = vshll.u32 683565275, %v769
        %v773 = vshrl.u32 2475754826, %v770
        %v774 = vor.u32 %v772, %v773
        %v775 = vshll.u32 2475754826, %v769
        %v776 = vshrl.u32 2131351028, %v770
        %v777 = vor.u32 %v775, %v776
        %v778 = vshll.u32 2131351028, %v769
        %v779 = vshrl.u32 2102212464, %v770
        %v780 = vor.u32 %v778, %v779
        %v781 = vshll.u32 2102212464, %v769
        %v782 = vshrl.u32 920167782, %v770
        %v783 = vor.u32 %v781, %v782
        %v784 = vshll.u32 920167782, %v769
        %v785 = vshrl.u32 1326507024, %v770
        %v786 = vor.u32 %v784, %v785
        %vm787 = vcmp.lt.s32.totalorder %v768, 1
        %vm788 = vcmp.lt.s32.totalorder %v768, 2
        %vm789 = vcmp.lt.s32.totalorder %v768, 3
        %vm790 = vcmp.lt.s32.totalorder %v768, 4
        %v791 = vsel %vm787, %v771, %v774
        %v792 = vsel %vm790, %v780, 2102212464
        %v793 = vsel %vm789, %v777, %v792
        %v794 = vsel %vm788, %v791, %v793
        %v795 = vsel %vm787, %v774, %v777
        %v796 = vsel %vm790, %v783, 920167782
        %v797 = vsel %vm789, %v780, %v796
        %v798 = vsel %vm788, %v795, %v797
        %v799 = vsel %vm787, %v777, %v780
        %v800 = vsel %vm790, %v786, 1326507024
        %v801 = vsel %vm789, %v783, %v800
        %v802 = vsel %vm788, %v799, %v801
        %v803 = vshll.u32 %v763, 8
        %v804 = vmul.u32.u64.compose %v803, %v802
        %v805 = vextract.low.u32 %v804
        %v806 = vextract.high.u32 %v804
        %v807 = vmul.u32.u64.compose %v803, %v798
        %v808 = vextract.low.u32 %v807
        %v809 = vextract.high.u32 %v807
        %v810 = vmul.u32 %v803, %v794
        %v811 = vadd.s32 %v806, %v808
        %vm812 = vc.u32 %v806, %v808
        %v813 = vadd.s32 %v809, 1
        %v814 = vsel %vm812, %v813, %v809
        %v815 = vadd.s32 %v810, %v814
        %v816 = vadd.s32 %v815, 536870912
        %v817 = vshrl.u32 %v816, 30
        %v818 = vshll.u32 %v817, 30
        %v819 = vsub.s32 %v815, %v818
        %vm820 = vcmp.lt.s32.totalorder %v819, 0
        %v821 = vsub.s32 0, %v819
        %v822 = vsel %vm820, %v821, %v819
        %v823 = vclz %v822
        %v824 = vsub.s32 %v823, 2
        %vm825 = vcmp.gt.s32.totalorder 0, %v824
        %v826 = vsel %vm825, 0, %v824
        %v827 = vsub.s32 32, %v826
        %v828 = vshll.u32 %v819, %v826
        %v829 = vshrl.u32 %v811, %v827
        %v830 = vor.u32 %v828, %v829
        %v831 = vsub.s32 4294967266, %v826
        %v832 = vadd.s32 %v831, 127
        %v833 = vshll.u32 %v832, 23
        %v834 = vor.u32 4788187, %v833
        %v835 = vand.u32 2147483647, %v834
        %v837 = vcvt.s32.f32 %v830
        %v838 = vmul.f32 %v837, %v835
        %v839 = vxor.u32 %v838, 2147483648
        %v840 = vsel %vm757, %v839, %v838
        %v841 = vsub.s32 4, %v817
        %v842 = vsel %vm757, %v841, %v817
        %v843 = vsel %vm756, %v420, %v840
        %v844 = vsel %vm756, 0, %v842
        %v845 = vcosq.f32.pop %v843
        %v846 = vsinq.f32.pop %v843
        %vm847 = vweird.f32 %v420
        %v848 = vadd.s32 %v844, 3
        %v849 = vand.u32 %v848, 3
        %vm850 = vcmp.lt.s32.totalorder %v849, 2
        %vm851 = vcmp.eq.s32.totalorder %v849, 0
        %v852 = vxor.u32 %v846, 2147483648
        %v853 = vsel %vm851, %v845, %v852
        %vm854 = vcmp.eq.s32.totalorder %v849, 2
        %v855 = vxor.u32 %v845, 2147483648
        %v856 = vsel %vm854, %v855, %v846
        %v857 = vsel %vm850, %v853, %v856
        %v858 = vsel %vm847, nan, %v857
        %v859 = vand.u32 2147483647, %v425
        %vm860 = vcmp.le.f32.partialorder %v859, 0.7853982
        %vm861 = vcmp.lt.s32.totalorder %v425, 0
        %v862 = vand.u32 %v425, 2139095040
        %v863 = vshrl.u32 %v862, 23
        %v864 = vsub.s32 %v863, 127
        %v865 = vand.u32 2147483647, %v425
        %v866 = vand.u32 %v865, 8388607
        %v867 = vor.u32 %v866, 8388608
        %v868 = vsub.s32 0, %v867
        %v869 = vadd.s32 %v864, 1
        %vm870 = vcmp.gt.s32.totalorder %v869, 0
        %v871 = vsel %vm870, %v869, 0
        %v872 = vshrl.u32 %v871, 5
        %v873 = vand.u32 %v871, 31
        %v874 = vsub.s32 32, %v873
        %v875 = vshrl.u32 683565275, %v874
        %v876 = vshll.u32 683565275, %v873
        %v877 = vshrl.u32 2475754826, %v874
        %v878 = vor.u32 %v876, %v877
        %v879 = vshll.u32 2475754826, %v873
        %v880 = vshrl.u32 2131351028, %v874
        %v881 = vor.u32 %v879, %v880
        %v882 = vshll.u32 2131351028, %v873
        %v883 = vshrl.u32 2102212464, %v874
        %v884 = vor.u32 %v882, %v883
        %v885 = vshll.u32 2102212464, %v873
        %v886 = vshrl.u32 920167782, %v874
        %v887 = vor.u32 %v885, %v886
        %v888 = vshll.u32 920167782, %v873
        %v889 = vshrl.u32 1326507024, %v874
        %v890 = vor.u32 %v888, %v889
        %vm891 = vcmp.lt.s32.totalorder %v872, 1
        %vm892 = vcmp.lt.s32.totalorder %v872, 2
        %vm893 = vcmp.lt.s32.totalorder %v872, 3
        %vm894 = vcmp.lt.s32.totalorder %v872, 4
        %v895 = vsel %vm891, %v875, %v878
        %v896 = vsel %vm894, %v884, 2102212464
        %v897 = vsel %vm893, %v881, %v896
        %v898 = vsel %vm892, %v895, %v897
        %v899 = vsel %vm891, %v878, %v881
        %v900 = vsel %vm894, %v887, 920167782
        %v901 = vsel %vm893, %v884, %v900
        %v902 = vsel %vm892, %v899, %v901
        %v903 = vsel %vm891, %v881, %v884
        %v904 = vsel %vm894, %v890, 1326507024
        %v905 = vsel %vm893, %v887, %v904
        %v906 = vsel %vm892, %v903, %v905
        %v907 = vshll.u32 %v867, 8
        %v908 = vmul.u32.u64.compose %v907, %v906
        %v909 = vextract.low.u32 %v908
        %v910 = vextract.high.u32 %v908
        %v911 = vmul.u32.u64.compose %v907, %v902
        %v912 = vextract.low.u32 %v911
        %v913 = vextract.high.u32 %v911
        %v914 = vmul.u32 %v907, %v898
        %v915 = vadd.s32 %v910, %v912
        %vm916 = vc.u32 %v910, %v912
        %v917 = vadd.s32 %v913, 1
        %v918 = vsel %vm916, %v917, %v913
        %v919 = vadd.s32 %v914, %v918
        %v920 = vadd.s32 %v919, 536870912
        %v921 = vshrl.u32 %v920, 30
        %v922 = vshll.u32 %v921, 30
        %v923 = vsub.s32 %v919, %v922
        %vm924 = vcmp.lt.s32.totalorder %v923, 0
        %v925 = vsub.s32 0, %v923
        %v926 = vsel %vm924, %v925, %v923
        %v927 = vclz %v926
        %v928 = vsub.s32 %v927, 2
        %vm929 = vcmp.gt.s32.totalorder 0, %v928
        %v930 = vsel %vm929, 0, %v928
        %v931 = vsub.s32 32, %v930
        %v932 = vshll.u32 %v923, %v930
        %v933 = vshrl.u32 %v915, %v931
        %v934 = vor.u32 %v932, %v933
        %v935 = vsub.s32 4294967266, %v930
        %v936 = vadd.s32 %v935, 127
        %v937 = vshll.u32 %v936, 23
        %v938 = vor.u32 4788187, %v937
        %v939 = vand.u32 2147483647, %v938
        %v941 = vcvt.s32.f32 %v934
        %v942 = vmul.f32 %v941, %v939
        %v943 = vxor.u32 %v942, 2147483648
        %v944 = vsel %vm861, %v943, %v942
        %v945 = vsub.s32 4, %v921
        %v946 = vsel %vm861, %v945, %v921
        %v947 = vsel %vm860, %v425, %v944
        %v948 = vsel %vm860, 0, %v946
        %v949 = vcosq.f32.pop %v947
        %v950 = vsinq.f32.pop %v947
        %vm951 = vweird.f32 %v425
        %v952 = vadd.s32 %v948, 3
        %v953 = vand.u32 %v952, 3
        %vm954 = vcmp.lt.s32.totalorder %v953, 2
        %vm955 = vcmp.eq.s32.totalorder %v953, 0
        %v956 = vxor.u32 %v950, 2147483648
        %v957 = vsel %vm955, %v949, %v956
        %vm958 = vcmp.eq.s32.totalorder %v953, 2
        %v959 = vxor.u32 %v949, 2147483648
        %v960 = vsel %vm958, %v959, %v950
        %v961 = vsel %vm954, %v957, %v960
        %v962 = vsel %vm951, nan, %v961
        %v963 = vand.u32 2147483647, %v430
        %vm964 = vcmp.le.f32.partialorder %v963, 0.7853982
        %vm965 = vcmp.lt.s32.totalorder %v430, 0
        %v966 = vand.u32 %v430, 2139095040
        %v967 = vshrl.u32 %v966, 23
        %v968 = vsub.s32 %v967, 127
        %v969 = vand.u32 2147483647, %v430
        %v970 = vand.u32 %v969, 8388607
        %v971 = vor.u32 %v970, 8388608
        %v972 = vsub.s32 0, %v971
        %v973 = vadd.s32 %v968, 1
        %vm974 = vcmp.gt.s32.totalorder %v973, 0
        %v975 = vsel %vm974, %v973, 0
        %v976 = vshrl.u32 %v975, 5
        %v977 = vand.u32 %v975, 31
        %v978 = vsub.s32 32, %v977
        %v979 = vshrl.u32 683565275, %v978
        %v980 = vshll.u32 683565275, %v977
        %v981 = vshrl.u32 2475754826, %v978
        %v982 = vor.u32 %v980, %v981
        %v983 = vshll.u32 2475754826, %v977
        %v984 = vshrl.u32 2131351028, %v978
        %v985 = vor.u32 %v983, %v984
        %v986 = vshll.u32 2131351028, %v977
        %v987 = vshrl.u32 2102212464, %v978
        %v988 = vor.u32 %v986, %v987
        %v989 = vshll.u32 2102212464, %v977
        %v990 = vshrl.u32 920167782, %v978
        %v991 = vor.u32 %v989, %v990
        %v992 = vshll.u32 920167782, %v977
        %v993 = vshrl.u32 1326507024, %v978
        %v994 = vor.u32 %v992, %v993
        %vm995 = vcmp.lt.s32.totalorder %v976, 1
        %vm996 = vcmp.lt.s32.totalorder %v976, 2
        %vm997 = vcmp.lt.s32.totalorder %v976, 3
        %vm998 = vcmp.lt.s32.totalorder %v976, 4
        %v999 = vsel %vm995, %v979, %v982
        %v1000 = vsel %vm998, %v988, 2102212464
        %v1001 = vsel %vm997, %v985, %v1000
        %v1002 = vsel %vm996, %v999, %v1001
        %v1003 = vsel %vm995, %v982, %v985
        %v1004 = vsel %vm998, %v991, 920167782
        %v1005 = vsel %vm997, %v988, %v1004
        %v1006 = vsel %vm996, %v1003, %v1005
        %v1007 = vsel %vm995, %v985, %v988
        %v1008 = vsel %vm998, %v994, 1326507024
        %v1009 = vsel %vm997, %v991, %v1008
        %v1010 = vsel %vm996, %v1007, %v1009
        %v1011 = vshll.u32 %v971, 8
        %v1012 = vmul.u32.u64.compose %v1011, %v1010
        %v1013 = vextract.low.u32 %v1012
        %v1014 = vextract.high.u32 %v1012
        %v1015 = vmul.u32.u64.compose %v1011, %v1006
        %v1016 = vextract.low.u32 %v1015
        %v1017 = vextract.high.u32 %v1015
        %v1018 = vmul.u32 %v1011, %v1002
        %v1019 = vadd.s32 %v1014, %v1016
        %vm1020 = vc.u32 %v1014, %v1016
        %v1021 = vadd.s32 %v1017, 1
        %v1022 = vsel %vm1020, %v1021, %v1017
        %v1023 = vadd.s32 %v1018, %v1022
        %v1024 = vadd.s32 %v1023, 536870912
        %v1025 = vshrl.u32 %v1024, 30
        %v1026 = vshll.u32 %v1025, 30
        %v1027 = vsub.s32 %v1023, %v1026
        %vm1028 = vcmp.lt.s32.totalorder %v1027, 0
        %v1029 = vsub.s32 0, %v1027
        %v1030 = vsel %vm1028, %v1029, %v1027
        %v1031 = vclz %v1030
        %v1032 = vsub.s32 %v1031, 2
        %vm1033 = vcmp.gt.s32.totalorder 0, %v1032
        %v1034 = vsel %vm1033, 0, %v1032
        %v1035 = vsub.s32 32, %v1034
        %v1036 = vshll.u32 %v1027, %v1034
        %v1037 = vshrl.u32 %v1019, %v1035
        %v1038 = vor.u32 %v1036, %v1037
        %v1039 = vsub.s32 4294967266, %v1034
        %v1040 = vadd.s32 %v1039, 127
        %v1041 = vshll.u32 %v1040, 23
        %v1042 = vor.u32 4788187, %v1041
        %v1043 = vand.u32 2147483647, %v1042
        %v1045 = vcvt.s32.f32 %v1038
        %v1046 = vmul.f32 %v1045, %v1043
        %v1047 = vxor.u32 %v1046, 2147483648
        %v1048 = vsel %vm965, %v1047, %v1046
        %v1049 = vsub.s32 4, %v1025
        %v1050 = vsel %vm965, %v1049, %v1025
        %v1051 = vsel %vm964, %v430, %v1048
        %v1052 = vsel %vm964, 0, %v1050
        %v1053 = vcosq.f32.pop %v1051
        %v1054 = vsinq.f32.pop %v1051
        %vm1055 = vweird.f32 %v430
        %v1056 = vadd.s32 %v1052, 3
        %v1057 = vand.u32 %v1056, 3
        %vm1058 = vcmp.lt.s32.totalorder %v1057, 2
        %vm1059 = vcmp.eq.s32.totalorder %v1057, 0
        %v1060 = vxor.u32 %v1054, 2147483648
        %v1061 = vsel %vm1059, %v1053, %v1060
        %vm1062 = vcmp.eq.s32.totalorder %v1057, 2
        %v1063 = vxor.u32 %v1053, 2147483648
        %v1064 = vsel %vm1062, %v1063, %v1054
        %v1065 = vsel %vm1058, %v1061, %v1064
        %v1066 = vsel %vm1055, nan, %v1065
        %v1067 = vand.u32 2147483647, %v435
        %vm1068 = vcmp.le.f32.partialorder %v1067, 0.7853982
        %vm1069 = vcmp.lt.s32.totalorder %v435, 0
        %v1070 = vand.u32 %v435, 2139095040
        %v1071 = vshrl.u32 %v1070, 23
        %v1072 = vsub.s32 %v1071, 127
        %v1073 = vand.u32 2147483647, %v435
        %v1074 = vand.u32 %v1073, 8388607
        %v1075 = vor.u32 %v1074, 8388608
        %v1076 = vsub.s32 0, %v1075
        %v1077 = vadd.s32 %v1072, 1
        %vm1078 = vcmp.gt.s32.totalorder %v1077, 0
        %v1079 = vsel %vm1078, %v1077, 0
        %v1080 = vshrl.u32 %v1079, 5
        %v1081 = vand.u32 %v1079, 31
        %v1082 = vsub.s32 32, %v1081
        %v1083 = vshrl.u32 683565275, %v1082
        %v1084 = vshll.u32 683565275, %v1081
        %v1085 = vshrl.u32 2475754826, %v1082
        %v1086 = vor.u32 %v1084, %v1085
        %v1087 = vshll.u32 2475754826, %v1081
        %v1088 = vshrl.u32 2131351028, %v1082
        %v1089 = vor.u32 %v1087, %v1088
        %v1090 = vshll.u32 2131351028, %v1081
        %v1091 = vshrl.u32 2102212464, %v1082
        %v1092 = vor.u32 %v1090, %v1091
        %v1093 = vshll.u32 2102212464, %v1081
        %v1094 = vshrl.u32 920167782, %v1082
        %v1095 = vor.u32 %v1093, %v1094
        %v1096 = vshll.u32 920167782, %v1081
        %v1097 = vshrl.u32 1326507024, %v1082
        %v1098 = vor.u32 %v1096, %v1097
        %vm1099 = vcmp.lt.s32.totalorder %v1080, 1
        %vm1100 = vcmp.lt.s32.totalorder %v1080, 2
        %vm1101 = vcmp.lt.s32.totalorder %v1080, 3
        %vm1102 = vcmp.lt.s32.totalorder %v1080, 4
        %v1103 = vsel %vm1099, %v1083, %v1086
        %v1104 = vsel %vm1102, %v1092, 2102212464
        %v1105 = vsel %vm1101, %v1089, %v1104
        %v1106 = vsel %vm1100, %v1103, %v1105
        %v1107 = vsel %vm1099, %v1086, %v1089
        %v1108 = vsel %vm1102, %v1095, 920167782
        %v1109 = vsel %vm1101, %v1092, %v1108
        %v1110 = vsel %vm1100, %v1107, %v1109
        %v1111 = vsel %vm1099, %v1089, %v1092
        %v1112 = vsel %vm1102, %v1098, 1326507024
        %v1113 = vsel %vm1101, %v1095, %v1112
        %v1114 = vsel %vm1100, %v1111, %v1113
        %v1115 = vshll.u32 %v1075, 8
        %v1116 = vmul.u32.u64.compose %v1115, %v1114
        %v1117 = vextract.low.u32 %v1116
        %v1118 = vextract.high.u32 %v1116
        %v1119 = vmul.u32.u64.compose %v1115, %v1110
        %v1120 = vextract.low.u32 %v1119
        %v1121 = vextract.high.u32 %v1119
        %v1122 = vmul.u32 %v1115, %v1106
        %v1123 = vadd.s32 %v1118, %v1120
        %vm1124 = vc.u32 %v1118, %v1120
        %v1125 = vadd.s32 %v1121, 1
        %v1126 = vsel %vm1124, %v1125, %v1121
        %v1127 = vadd.s32 %v1122, %v1126
        %v1128 = vadd.s32 %v1127, 536870912
        %v1129 = vshrl.u32 %v1128, 30
        %v1130 = vshll.u32 %v1129, 30
        %v1131 = vsub.s32 %v1127, %v1130
        %vm1132 = vcmp.lt.s32.totalorder %v1131, 0
        %v1133 = vsub.s32 0, %v1131
        %v1134 = vsel %vm1132, %v1133, %v1131
        %v1135 = vclz %v1134
        %v1136 = vsub.s32 %v1135, 2
        %vm1137 = vcmp.gt.s32.totalorder 0, %v1136
        %v1138 = vsel %vm1137, 0, %v1136
        %v1139 = vsub.s32 32, %v1138
        %v1140 = vshll.u32 %v1131, %v1138
        %v1141 = vshrl.u32 %v1123, %v1139
        %v1142 = vor.u32 %v1140, %v1141
        %v1143 = vsub.s32 4294967266, %v1138
        %v1144 = vadd.s32 %v1143, 127
        %v1145 = vshll.u32 %v1144, 23
        %v1146 = vor.u32 4788187, %v1145
        %v1147 = vand.u32 2147483647, %v1146
        %v1149 = vcvt.s32.f32 %v1142
        %v1150 = vmul.f32 %v1149, %v1147
        %v1151 = vxor.u32 %v1150, 2147483648
        %v1152 = vsel %vm1069, %v1151, %v1150
        %v1153 = vsub.s32 4, %v1129
        %v1154 = vsel %vm1069, %v1153, %v1129
        %v1155 = vsel %vm1068, %v435, %v1152
        %v1156 = vsel %vm1068, 0, %v1154
        %v1157 = vcosq.f32.pop %v1155
        %v1158 = vsinq.f32.pop %v1155
        %vm1159 = vweird.f32 %v435
        %v1160 = vadd.s32 %v1156, 3
        %v1161 = vand.u32 %v1160, 3
        %vm1162 = vcmp.lt.s32.totalorder %v1161, 2
        %vm1163 = vcmp.eq.s32.totalorder %v1161, 0
        %v1164 = vxor.u32 %v1158, 2147483648
        %v1165 = vsel %vm1163, %v1157, %v1164
        %vm1166 = vcmp.eq.s32.totalorder %v1161, 2
        %v1167 = vxor.u32 %v1157, 2147483648
        %v1168 = vsel %vm1166, %v1167, %v1158
        %v1169 = vsel %vm1162, %v1165, %v1168
        %v1170 = vsel %vm1159, nan, %v1169
        %v1171 = vand.u32 2147483647, %v440
        %vm1172 = vcmp.le.f32.partialorder %v1171, 0.7853982
        %vm1173 = vcmp.lt.s32.totalorder %v440, 0
        %v1174 = vand.u32 %v440, 2139095040
        %v1175 = vshrl.u32 %v1174, 23
        %v1176 = vsub.s32 %v1175, 127
        %v1177 = vand.u32 2147483647, %v440
        %v1178 = vand.u32 %v1177, 8388607
        %v1179 = vor.u32 %v1178, 8388608
        %v1180 = vsub.s32 0, %v1179
        %v1181 = vadd.s32 %v1176, 1
        %vm1182 = vcmp.gt.s32.totalorder %v1181, 0
        %v1183 = vsel %vm1182, %v1181, 0
        %v1184 = vshrl.u32 %v1183, 5
        %v1185 = vand.u32 %v1183, 31
        %v1186 = vsub.s32 32, %v1185
        %v1187 = vshrl.u32 683565275, %v1186
        %v1188 = vshll.u32 683565275, %v1185
        %v1189 = vshrl.u32 2475754826, %v1186
        %v1190 = vor.u32 %v1188, %v1189
        %v1191 = vshll.u32 2475754826, %v1185
        %v1192 = vshrl.u32 2131351028, %v1186
        %v1193 = vor.u32 %v1191, %v1192
        %v1194 = vshll.u32 2131351028, %v1185
        %v1195 = vshrl.u32 2102212464, %v1186
        %v1196 = vor.u32 %v1194, %v1195
        %v1197 = vshll.u32 2102212464, %v1185
        %v1198 = vshrl.u32 920167782, %v1186
        %v1199 = vor.u32 %v1197, %v1198
        %v1200 = vshll.u32 920167782, %v1185
        %v1201 = vshrl.u32 1326507024, %v1186
        %v1202 = vor.u32 %v1200, %v1201
        %vm1203 = vcmp.lt.s32.totalorder %v1184, 1
        %vm1204 = vcmp.lt.s32.totalorder %v1184, 2
        %vm1205 = vcmp.lt.s32.totalorder %v1184, 3
        %vm1206 = vcmp.lt.s32.totalorder %v1184, 4
        %v1207 = vsel %vm1203, %v1187, %v1190
        %v1208 = vsel %vm1206, %v1196, 2102212464
        %v1209 = vsel %vm1205, %v1193, %v1208
        %v1210 = vsel %vm1204, %v1207, %v1209
        %v1211 = vsel %vm1203, %v1190, %v1193
        %v1212 = vsel %vm1206, %v1199, 920167782
        %v1213 = vsel %vm1205, %v1196, %v1212
        %v1214 = vsel %vm1204, %v1211, %v1213
        %v1215 = vsel %vm1203, %v1193, %v1196
        %v1216 = vsel %vm1206, %v1202, 1326507024
        %v1217 = vsel %vm1205, %v1199, %v1216
        %v1218 = vsel %vm1204, %v1215, %v1217
        %v1219 = vshll.u32 %v1179, 8
        %v1220 = vmul.u32.u64.compose %v1219, %v1218
        %v1221 = vextract.low.u32 %v1220
        %v1222 = vextract.high.u32 %v1220
        %v1223 = vmul.u32.u64.compose %v1219, %v1214
        %v1224 = vextract.low.u32 %v1223
        %v1225 = vextract.high.u32 %v1223
        %v1226 = vmul.u32 %v1219, %v1210
        %v1227 = vadd.s32 %v1222, %v1224
        %vm1228 = vc.u32 %v1222, %v1224
        %v1229 = vadd.s32 %v1225, 1
        %v1230 = vsel %vm1228, %v1229, %v1225
        %v1231 = vadd.s32 %v1226, %v1230
        %v1232 = vadd.s32 %v1231, 536870912
        %v1233 = vshrl.u32 %v1232, 30
        %v1234 = vshll.u32 %v1233, 30
        %v1235 = vsub.s32 %v1231, %v1234
        %vm1236 = vcmp.lt.s32.totalorder %v1235, 0
        %v1237 = vsub.s32 0, %v1235
        %v1238 = vsel %vm1236, %v1237, %v1235
        %v1239 = vclz %v1238
        %v1240 = vsub.s32 %v1239, 2
        %vm1241 = vcmp.gt.s32.totalorder 0, %v1240
        %v1242 = vsel %vm1241, 0, %v1240
        %v1243 = vsub.s32 32, %v1242
        %v1244 = vshll.u32 %v1235, %v1242
        %v1245 = vshrl.u32 %v1227, %v1243
        %v1246 = vor.u32 %v1244, %v1245
        %v1247 = vsub.s32 4294967266, %v1242
        %v1248 = vadd.s32 %v1247, 127
        %v1249 = vshll.u32 %v1248, 23
        %v1250 = vor.u32 4788187, %v1249
        %v1251 = vand.u32 2147483647, %v1250
        %v1253 = vcvt.s32.f32 %v1246
        %v1254 = vmul.f32 %v1253, %v1251
        %v1255 = vxor.u32 %v1254, 2147483648
        %v1256 = vsel %vm1173, %v1255, %v1254
        %v1257 = vsub.s32 4, %v1233
        %v1258 = vsel %vm1173, %v1257, %v1233
        %v1259 = vsel %vm1172, %v440, %v1256
        %v1260 = vsel %vm1172, 0, %v1258
        %v1261 = vcosq.f32.pop %v1259
        %v1262 = vsinq.f32.pop %v1259
        %vm1263 = vweird.f32 %v440
        %v1264 = vadd.s32 %v1260, 3
        %v1265 = vand.u32 %v1264, 3
        %vm1266 = vcmp.lt.s32.totalorder %v1265, 2
        %vm1267 = vcmp.eq.s32.totalorder %v1265, 0
        %v1268 = vxor.u32 %v1262, 2147483648
        %v1269 = vsel %vm1267, %v1261, %v1268
        %vm1270 = vcmp.eq.s32.totalorder %v1265, 2
        %v1271 = vxor.u32 %v1261, 2147483648
        %v1272 = vsel %vm1270, %v1271, %v1262
        %v1273 = vsel %vm1266, %v1269, %v1272
        %v1274 = vsel %vm1263, nan, %v1273
        %v1275 = vld [vmem:[#allocation2] sm:$0xff]
        %v1276 = vld [vmem:[#allocation2 + $0x8] sm:$0xff]
        %v1277 = vld [vmem:[#allocation2 + $0x10] sm:$0xff]
        %v1278 = vld [vmem:[#allocation2 + $0x18] sm:$0xff]
        %v1279 = vld [vmem:[#allocation2 + $0x20] sm:$0xff]
        %v1280 = vld [vmem:[#allocation2 + $0x28] sm:$0xff]
        %v1281 = vld [vmem:[#allocation2 + $0x30] sm:$0xff]
        %v1282 = vld [vmem:[#allocation2 + $0x38] sm:$0xff]
        %v1283 = vld [vmem:[#allocation2 + $0x40] sm:$0xff]
        %v1284 = vld [vmem:[#allocation2 + $0x48] sm:$0xff]
        %v1285 = vld [vmem:[#allocation2 + $0x50] sm:$0xff]
        %v1286 = vld [vmem:[#allocation2 + $0x58] sm:$0xff]
        %v1287 = vld [vmem:[#allocation2 + $0x60] sm:$0xff]
        %v1288 = vld [vmem:[#allocation2 + $0x68] sm:$0xff]
        %v1289 = vld [vmem:[#allocation2 + $0x70] sm:$0xff]
        %v1290 = vld [vmem:[#allocation2 + $0x78] sm:$0xff]
        %v1291 = vld [vmem:[%s4] sm:$0x1]
        %v1293 = vlaneseq
        %v1294 = vshrl.u32 %v1293, 7
        %v1295 = vsub.s32 0, %v1294
        %v1296 = vrot.slane %v1291, %v1295
        %1298 = vmatprep.subr.mxu0 0.0
        %1299 = vmatpush1.msra.mxu0 %v1275
        %1300 = vmatprep.subr.mxu0 0.0
        %1301 = vmatpush1.msra.mxu0 %v1276
        %1302 = vmatprep.subr.mxu0 0.0
        %1303 = vmatpush1.msra.mxu0 %v1277
        %1304 = vmatprep.subr.mxu0 0.0
        %1305 = vmatpush1.msra.mxu0 %v1278
        %1306 = vmatprep.subr.mxu0 0.0
        %1307 = vmatpush1.msra.mxu0 %v1279
        %1308 = vmatprep.subr.mxu0 0.0
        %1309 = vmatpush1.msra.mxu0 %v1280
        %1310 = vmatprep.subr.mxu0 0.0
        %1311 = vmatpush1.msra.mxu0 %v1281
        %1312 = vmatprep.subr.mxu0 0.0
        %1313 = vmatpush1.msra.mxu0 %v1282
        %1314 = vmatprep.subr.mxu0 0.0
        %1315 = vmatpush1.msra.mxu0 %v1283
        %1316 = vmatprep.subr.mxu0 0.0
        %1317 = vmatpush1.msra.mxu0 %v1284
        %1318 = vmatprep.subr.mxu0 0.0
        %1319 = vmatpush1.msra.mxu0 %v1285
        %1320 = vmatprep.subr.mxu0 0.0
        %1321 = vmatpush1.msra.mxu0 %v1286
        %1322 = vmatprep.subr.mxu0 0.0
        %1323 = vmatpush1.msra.mxu0 %v1287
        %1324 = vmatprep.subr.mxu0 0.0
        %1325 = vmatpush1.msra.mxu0 %v1288
        %1326 = vmatprep.subr.mxu0 0.0
        %1327 = vmatpush1.msra.mxu0 %v1289
        %1328 = vmatprep.subr.mxu0 0.0
        %1329 = vmatpush1.msra.mxu0 %v1290
        %1330 = vmatprep.subr.mxu0 0.0
        %1331 = vmatpush1.msra.mxu0 0.0
        %1332 = vmatprep.subr.mxu0 0.0
        %1333 = vmatpush1.msra.mxu0 0.0
        %1334 = vmatprep.subr.mxu0 0.0
        %1335 = vmatpush1.msra.mxu0 0.0
        %1336 = vmatprep.subr.mxu0 0.0
        %1337 = vmatpush1.msra.mxu0 0.0
        %1338 = vmatprep.subr.mxu0 0.0
        %1339 = vmatpush1.msra.mxu0 0.0
        %1340 = vmatprep.subr.mxu0 0.0
        %1341 = vmatpush1.msra.mxu0 0.0
        %1342 = vmatprep.subr.mxu0 0.0
        %1343 = vmatpush1.msra.mxu0 0.0
        %1344 = vmatprep.subr.mxu0 0.0
        %1345 = vmatpush1.msra.mxu0 0.0
        %1346 = vmatprep.subr.mxu0 0.0
        %1347 = vmatpush1.msra.mxu0 0.0
        %1348 = vmatprep.subr.mxu0 0.0
        %1349 = vmatpush1.msra.mxu0 0.0
        %1350 = vmatprep.subr.mxu0 0.0
        %1351 = vmatpush1.msra.mxu0 0.0
        %1352 = vmatprep.subr.mxu0 0.0
        %1353 = vmatpush1.msra.mxu0 0.0
        %1354 = vmatprep.subr.mxu0 0.0
        %1355 = vmatpush1.msra.mxu0 0.0
        %1356 = vmatprep.subr.mxu0 0.0
        %1357 = vmatpush1.msra.mxu0 0.0
        %1358 = vmatprep.subr.mxu0 0.0
        %1359 = vmatpush1.msra.mxu0 0.0
        %1360 = vmatprep.subr.mxu0 0.0
        %1361 = vmatpush1.msra.mxu0 0.0
        %1362 = vmatprep.mubr.f32.mxu0 0.0
        %1363 = vmatmul.mubr.f32.gmra.mrb[0].mxu0 %v546
        %v1364 = vpop.f32.mrb[0].mxu0
        %v1365 = vadd.f32 %v1296, %v1364
        %v1366 = vpop.f32.mrb[0].mxu0
        %1367 = vmatprep.mubr.f32.mxu0 0.0
        %1368 = vmatmul.mubr.f32.gmra.mrb[0].mxu0 %v650
        %v1369 = vpop.f32.mrb[0].mxu0
        %v1370 = vadd.f32 %v1296, %v1369
        %v1371 = vpop.f32.mrb[0].mxu0
        %1372 = vmatprep.mubr.f32.mxu0 0.0
        %1373 = vmatmul.mubr.f32.gmra.mrb[0].mxu0 %v754
        %v1374 = vpop.f32.mrb[0].mxu0
        %v1375 = vadd.f32 %v1296, %v1374
        %v1376 = vpop.f32.mrb[0].mxu0
        %1377 = vmatprep.mubr.f32.mxu0 0.0
        %1378 = vmatmul.mubr.f32.gmra.mrb[0].mxu0 %v858
        %v1379 = vpop.f32.mrb[0].mxu0
        %v1380 = vadd.f32 %v1296, %v1379
        %v1381 = vpop.f32.mrb[0].mxu0
        %1382 = vmatprep.mubr.f32.mxu0 0.0
        %1383 = vmatmul.mubr.f32.gmra.mrb[0].mxu0 %v962
        %v1384 = vpop.f32.mrb[0].mxu0
        %v1385 = vadd.f32 %v1296, %v1384
        %v1386 = vpop.f32.mrb[0].mxu0
        %1387 = vmatprep.mubr.f32.mxu0 0.0
        %1388 = vmatmul.mubr.f32.gmra.mrb[0].mxu0 %v1066
        %v1389 = vpop.f32.mrb[0].mxu0
        %v1390 = vadd.f32 %v1296, %v1389
        %v1391 = vpop.f32.mrb[0].mxu0
        %1392 = vmatprep.mubr.f32.mxu0 0.0
        %1393 = vmatmul.mubr.f32.gmra.mrb[0].mxu0 %v1170
        %v1394 = vpop.f32.mrb[0].mxu0
        %v1395 = vadd.f32 %v1296, %v1394
        %v1396 = vpop.f32.mrb[0].mxu0
        %1397 = vmatprep.mubr.f32.mxu0 0.0
        %1398 = vmatmul.mubr.f32.gmra.mrb[0].mxu0 %v1274
        %v1399 = vpop.f32.mrb[0].mxu0
        %v1400 = vadd.f32 %v1296, %v1399
        %v1401 = vpop.f32.mrb[0].mxu0
        %1402 = vdwg.mxu0
        %v1403 = vand.u32 2147483647, %v1365
        %vm1404 = vcmp.le.f32.partialorder %v1403, 0.7853982
        %vm1405 = vcmp.lt.s32.totalorder %v1365, 0
        %v1406 = vand.u32 %v1365, 2139095040
        %v1407 = vshrl.u32 %v1406, 23
        %v1408 = vsub.s32 %v1407, 127
        %v1409 = vand.u32 2147483647, %v1365
        %v1410 = vand.u32 %v1409, 8388607
        %v1411 = vor.u32 %v1410, 8388608
        %v1412 = vsub.s32 0, %v1411
        %v1413 = vadd.s32 %v1408, 1
        %vm1414 = vcmp.gt.s32.totalorder %v1413, 0
        %v1415 = vsel %vm1414, %v1413, 0
        %v1416 = vshrl.u32 %v1415, 5
        %v1417 = vand.u32 %v1415, 31
        %v1418 = vsub.s32 32, %v1417
        %v1419 = vshrl.u32 683565275, %v1418
        %v1420 = vshll.u32 683565275, %v1417
        %v1421 = vshrl.u32 2475754826, %v1418
        %v1422 = vor.u32 %v1420, %v1421
        %v1423 = vshll.u32 2475754826, %v1417
        %v1424 = vshrl.u32 2131351028, %v1418
        %v1425 = vor.u32 %v1423, %v1424
        %v1426 = vshll.u32 2131351028, %v1417
        %v1427 = vshrl.u32 2102212464, %v1418
        %v1428 = vor.u32 %v1426, %v1427
        %v1429 = vshll.u32 2102212464, %v1417
        %v1430 = vshrl.u32 920167782, %v1418
        %v1431 = vor.u32 %v1429, %v1430
        %v1432 = vshll.u32 920167782, %v1417
        %v1433 = vshrl.u32 1326507024, %v1418
        %v1434 = vor.u32 %v1432, %v1433
        %vm1435 = vcmp.lt.s32.totalorder %v1416, 1
        %vm1436 = vcmp.lt.s32.totalorder %v1416, 2
        %vm1437 = vcmp.lt.s32.totalorder %v1416, 3
        %vm1438 = vcmp.lt.s32.totalorder %v1416, 4
        %v1439 = vsel %vm1435, %v1419, %v1422
        %v1440 = vsel %vm1438, %v1428, 2102212464
        %v1441 = vsel %vm1437, %v1425, %v1440
        %v1442 = vsel %vm1436, %v1439, %v1441
        %v1443 = vsel %vm1435, %v1422, %v1425
        %v1444 = vsel %vm1438, %v1431, 920167782
        %v1445 = vsel %vm1437, %v1428, %v1444
        %v1446 = vsel %vm1436, %v1443, %v1445
        %v1447 = vsel %vm1435, %v1425, %v1428
        %v1448 = vsel %vm1438, %v1434, 1326507024
        %v1449 = vsel %vm1437, %v1431, %v1448
        %v1450 = vsel %vm1436, %v1447, %v1449
        %v1451 = vshll.u32 %v1411, 8
        %v1452 = vmul.u32.u64.compose %v1451, %v1450
        %v1453 = vextract.low.u32 %v1452
        %v1454 = vextract.high.u32 %v1452
        %v1455 = vmul.u32.u64.compose %v1451, %v1446
        %v1456 = vextract.low.u32 %v1455
        %v1457 = vextract.high.u32 %v1455
        %v1458 = vmul.u32 %v1451, %v1442
        %v1459 = vadd.s32 %v1454, %v1456
        %vm1460 = vc.u32 %v1454, %v1456
        %v1461 = vadd.s32 %v1457, 1
        %v1462 = vsel %vm1460, %v1461, %v1457
        %v1463 = vadd.s32 %v1458, %v1462
        %v1464 = vadd.s32 %v1463, 536870912
        %v1465 = vshrl.u32 %v1464, 30
        %v1466 = vshll.u32 %v1465, 30
        %v1467 = vsub.s32 %v1463, %v1466
        %vm1468 = vcmp.lt.s32.totalorder %v1467, 0
        %v1469 = vsub.s32 0, %v1467
        %v1470 = vsel %vm1468, %v1469, %v1467
        %v1471 = vclz %v1470
        %v1472 = vsub.s32 %v1471, 2
        %vm1473 = vcmp.gt.s32.totalorder 0, %v1472
        %v1474 = vsel %vm1473, 0, %v1472
        %v1475 = vsub.s32 32, %v1474
        %v1476 = vshll.u32 %v1467, %v1474
        %v1477 = vshrl.u32 %v1459, %v1475
        %v1478 = vor.u32 %v1476, %v1477
        %v1479 = vsub.s32 4294967266, %v1474
        %v1480 = vadd.s32 %v1479, 127
        %v1481 = vshll.u32 %v1480, 23
        %v1482 = vor.u32 4788187, %v1481
        %v1483 = vand.u32 2147483647, %v1482
        %v1485 = vcvt.s32.f32 %v1478
        %v1486 = vmul.f32 %v1485, %v1483
        %v1487 = vxor.u32 %v1486, 2147483648
        %v1488 = vsel %vm1405, %v1487, %v1486
        %v1489 = vsub.s32 4, %v1465
        %v1490 = vsel %vm1405, %v1489, %v1465
        %v1491 = vsel %vm1404, %v1365, %v1488
        %v1492 = vsel %vm1404, 0, %v1490
        %v1493 = vcosq.f32.pop %v1491
        %v1494 = vsinq.f32.pop %v1491
        %vm1495 = vweird.f32 %v1365
        %v1496 = vadd.s32 %v1492, 3
        %v1497 = vand.u32 %v1496, 3
        %vm1498 = vcmp.lt.s32.totalorder %v1497, 2
        %vm1499 = vcmp.eq.s32.totalorder %v1497, 0
        %v1500 = vxor.u32 %v1494, 2147483648
        %v1501 = vsel %vm1499, %v1493, %v1500
        %vm1502 = vcmp.eq.s32.totalorder %v1497, 2
        %v1503 = vxor.u32 %v1493, 2147483648
        %v1504 = vsel %vm1502, %v1503, %v1494
        %v1505 = vsel %vm1498, %v1501, %v1504
        %v1506 = vsel %vm1495, nan, %v1505
        %v1507 = vand.u32 2147483647, %v1370
        %vm1508 = vcmp.le.f32.partialorder %v1507, 0.7853982
        %vm1509 = vcmp.lt.s32.totalorder %v1370, 0
        %v1510 = vand.u32 %v1370, 2139095040
        %v1511 = vshrl.u32 %v1510, 23
        %v1512 = vsub.s32 %v1511, 127
        %v1513 = vand.u32 2147483647, %v1370
        %v1514 = vand.u32 %v1513, 8388607
        %v1515 = vor.u32 %v1514, 8388608
        %v1516 = vsub.s32 0, %v1515
        %v1517 = vadd.s32 %v1512, 1
        %vm1518 = vcmp.gt.s32.totalorder %v1517, 0
        %v1519 = vsel %vm1518, %v1517, 0
        %v1520 = vshrl.u32 %v1519, 5
        %v1521 = vand.u32 %v1519, 31
        %v1522 = vsub.s32 32, %v1521
        %v1523 = vshrl.u32 683565275, %v1522
        %v1524 = vshll.u32 683565275, %v1521
        %v1525 = vshrl.u32 2475754826, %v1522
        %v1526 = vor.u32 %v1524, %v1525
        %v1527 = vshll.u32 2475754826, %v1521
        %v1528 = vshrl.u32 2131351028, %v1522
        %v1529 = vor.u32 %v1527, %v1528
        %v1530 = vshll.u32 2131351028, %v1521
        %v1531 = vshrl.u32 2102212464, %v1522
        %v1532 = vor.u32 %v1530, %v1531
        %v1533 = vshll.u32 2102212464, %v1521
        %v1534 = vshrl.u32 920167782, %v1522
        %v1535 = vor.u32 %v1533, %v1534
        %v1536 = vshll.u32 920167782, %v1521
        %v1537 = vshrl.u32 1326507024, %v1522
        %v1538 = vor.u32 %v1536, %v1537
        %vm1539 = vcmp.lt.s32.totalorder %v1520, 1
        %vm1540 = vcmp.lt.s32.totalorder %v1520, 2
        %vm1541 = vcmp.lt.s32.totalorder %v1520, 3
        %vm1542 = vcmp.lt.s32.totalorder %v1520, 4
        %v1543 = vsel %vm1539, %v1523, %v1526
        %v1544 = vsel %vm1542, %v1532, 2102212464
        %v1545 = vsel %vm1541, %v1529, %v1544
        %v1546 = vsel %vm1540, %v1543, %v1545
        %v1547 = vsel %vm1539, %v1526, %v1529
        %v1548 = vsel %vm1542, %v1535, 920167782
        %v1549 = vsel %vm1541, %v1532, %v1548
        %v1550 = vsel %vm1540, %v1547, %v1549
        %v1551 = vsel %vm1539, %v1529, %v1532
        %v1552 = vsel %vm1542, %v1538, 1326507024
        %v1553 = vsel %vm1541, %v1535, %v1552
        %v1554 = vsel %vm1540, %v1551, %v1553
        %v1555 = vshll.u32 %v1515, 8
        %v1556 = vmul.u32.u64.compose %v1555, %v1554
        %v1557 = vextract.low.u32 %v1556
        %v1558 = vextract.high.u32 %v1556
        %v1559 = vmul.u32.u64.compose %v1555, %v1550
        %v1560 = vextract.low.u32 %v1559
        %v1561 = vextract.high.u32 %v1559
        %v1562 = vmul.u32 %v1555, %v1546
        %v1563 = vadd.s32 %v1558, %v1560
        %vm1564 = vc.u32 %v1558, %v1560
        %v1565 = vadd.s32 %v1561, 1
        %v1566 = vsel %vm1564, %v1565, %v1561
        %v1567 = vadd.s32 %v1562, %v1566
        %v1568 = vadd.s32 %v1567, 536870912
        %v1569 = vshrl.u32 %v1568, 30
        %v1570 = vshll.u32 %v1569, 30
        %v1571 = vsub.s32 %v1567, %v1570
        %vm1572 = vcmp.lt.s32.totalorder %v1571, 0
        %v1573 = vsub.s32 0, %v1571
        %v1574 = vsel %vm1572, %v1573, %v1571
        %v1575 = vclz %v1574
        %v1576 = vsub.s32 %v1575, 2
        %vm1577 = vcmp.gt.s32.totalorder 0, %v1576
        %v1578 = vsel %vm1577, 0, %v1576
        %v1579 = vsub.s32 32, %v1578
        %v1580 = vshll.u32 %v1571, %v1578
        %v1581 = vshrl.u32 %v1563, %v1579
        %v1582 = vor.u32 %v1580, %v1581
        %v1583 = vsub.s32 4294967266, %v1578
        %v1584 = vadd.s32 %v1583, 127
        %v1585 = vshll.u32 %v1584, 23
        %v1586 = vor.u32 4788187, %v1585
        %v1587 = vand.u32 2147483647, %v1586
        %v1589 = vcvt.s32.f32 %v1582
        %v1590 = vmul.f32 %v1589, %v1587
        %v1591 = vxor.u32 %v1590, 2147483648
        %v1592 = vsel %vm1509, %v1591, %v1590
        %v1593 = vsub.s32 4, %v1569
        %v1594 = vsel %vm1509, %v1593, %v1569
        %v1595 = vsel %vm1508, %v1370, %v1592
        %v1596 = vsel %vm1508, 0, %v1594
        %v1597 = vcosq.f32.pop %v1595
        %v1598 = vsinq.f32.pop %v1595
        %vm1599 = vweird.f32 %v1370
        %v1600 = vadd.s32 %v1596, 3
        %v1601 = vand.u32 %v1600, 3
        %vm1602 = vcmp.lt.s32.totalorder %v1601, 2
        %vm1603 = vcmp.eq.s32.totalorder %v1601, 0
        %v1604 = vxor.u32 %v1598, 2147483648
        %v1605 = vsel %vm1603, %v1597, %v1604
        %vm1606 = vcmp.eq.s32.totalorder %v1601, 2
        %v1607 = vxor.u32 %v1597, 2147483648
        %v1608 = vsel %vm1606, %v1607, %v1598
        %v1609 = vsel %vm1602, %v1605, %v1608
        %v1610 = vsel %vm1599, nan, %v1609
        %v1611 = vand.u32 2147483647, %v1375
        %vm1612 = vcmp.le.f32.partialorder %v1611, 0.7853982
        %vm1613 = vcmp.lt.s32.totalorder %v1375, 0
        %v1614 = vand.u32 %v1375, 2139095040
        %v1615 = vshrl.u32 %v1614, 23
        %v1616 = vsub.s32 %v1615, 127
        %v1617 = vand.u32 2147483647, %v1375
        %v1618 = vand.u32 %v1617, 8388607
        %v1619 = vor.u32 %v1618, 8388608
        %v1620 = vsub.s32 0, %v1619
        %v1621 = vadd.s32 %v1616, 1
        %vm1622 = vcmp.gt.s32.totalorder %v1621, 0
        %v1623 = vsel %vm1622, %v1621, 0
        %v1624 = vshrl.u32 %v1623, 5
        %v1625 = vand.u32 %v1623, 31
        %v1626 = vsub.s32 32, %v1625
        %v1627 = vshrl.u32 683565275, %v1626
        %v1628 = vshll.u32 683565275, %v1625
        %v1629 = vshrl.u32 2475754826, %v1626
        %v1630 = vor.u32 %v1628, %v1629
        %v1631 = vshll.u32 2475754826, %v1625
        %v1632 = vshrl.u32 2131351028, %v1626
        %v1633 = vor.u32 %v1631, %v1632
        %v1634 = vshll.u32 2131351028, %v1625
        %v1635 = vshrl.u32 2102212464, %v1626
        %v1636 = vor.u32 %v1634, %v1635
        %v1637 = vshll.u32 2102212464, %v1625
        %v1638 = vshrl.u32 920167782, %v1626
        %v1639 = vor.u32 %v1637, %v1638
        %v1640 = vshll.u32 920167782, %v1625
        %v1641 = vshrl.u32 1326507024, %v1626
        %v1642 = vor.u32 %v1640, %v1641
        %vm1643 = vcmp.lt.s32.totalorder %v1624, 1
        %vm1644 = vcmp.lt.s32.totalorder %v1624, 2
        %vm1645 = vcmp.lt.s32.totalorder %v1624, 3
        %vm1646 = vcmp.lt.s32.totalorder %v1624, 4
        %v1647 = vsel %vm1643, %v1627, %v1630
        %v1648 = vsel %vm1646, %v1636, 2102212464
        %v1649 = vsel %vm1645, %v1633, %v1648
        %v1650 = vsel %vm1644, %v1647, %v1649
        %v1651 = vsel %vm1643, %v1630, %v1633
        %v1652 = vsel %vm1646, %v1639, 920167782
        %v1653 = vsel %vm1645, %v1636, %v1652
        %v1654 = vsel %vm1644, %v1651, %v1653
        %v1655 = vsel %vm1643, %v1633, %v1636
        %v1656 = vsel %vm1646, %v1642, 1326507024
        %v1657 = vsel %vm1645, %v1639, %v1656
        %v1658 = vsel %vm1644, %v1655, %v1657
        %v1659 = vshll.u32 %v1619, 8
        %v1660 = vmul.u32.u64.compose %v1659, %v1658
        %v1661 = vextract.low.u32 %v1660
        %v1662 = vextract.high.u32 %v1660
        %v1663 = vmul.u32.u64.compose %v1659, %v1654
        %v1664 = vextract.low.u32 %v1663
        %v1665 = vextract.high.u32 %v1663
        %v1666 = vmul.u32 %v1659, %v1650
        %v1667 = vadd.s32 %v1662, %v1664
        %vm1668 = vc.u32 %v1662, %v1664
        %v1669 = vadd.s32 %v1665, 1
        %v1670 = vsel %vm1668, %v1669, %v1665
        %v1671 = vadd.s32 %v1666, %v1670
        %v1672 = vadd.s32 %v1671, 536870912
        %v1673 = vshrl.u32 %v1672, 30
        %v1674 = vshll.u32 %v1673, 30
        %v1675 = vsub.s32 %v1671, %v1674
        %vm1676 = vcmp.lt.s32.totalorder %v1675, 0
        %v1677 = vsub.s32 0, %v1675
        %v1678 = vsel %vm1676, %v1677, %v1675
        %v1679 = vclz %v1678
        %v1680 = vsub.s32 %v1679, 2
        %vm1681 = vcmp.gt.s32.totalorder 0, %v1680
        %v1682 = vsel %vm1681, 0, %v1680
        %v1683 = vsub.s32 32, %v1682
        %v1684 = vshll.u32 %v1675, %v1682
        %v1685 = vshrl.u32 %v1667, %v1683
        %v1686 = vor.u32 %v1684, %v1685
        %v1687 = vsub.s32 4294967266, %v1682
        %v1688 = vadd.s32 %v1687, 127
        %v1689 = vshll.u32 %v1688, 23
        %v1690 = vor.u32 4788187, %v1689
        %v1691 = vand.u32 2147483647, %v1690
        %v1693 = vcvt.s32.f32 %v1686
        %v1694 = vmul.f32 %v1693, %v1691
        %v1695 = vxor.u32 %v1694, 2147483648
        %v1696 = vsel %vm1613, %v1695, %v1694
        %v1697 = vsub.s32 4, %v1673
        %v1698 = vsel %vm1613, %v1697, %v1673
        %v1699 = vsel %vm1612, %v1375, %v1696
        %v1700 = vsel %vm1612, 0, %v1698
        %v1701 = vcosq.f32.pop %v1699
        %v1702 = vsinq.f32.pop %v1699
        %vm1703 = vweird.f32 %v1375
        %v1704 = vadd.s32 %v1700, 3
        %v1705 = vand.u32 %v1704, 3
        %vm1706 = vcmp.lt.s32.totalorder %v1705, 2
        %vm1707 = vcmp.eq.s32.totalorder %v1705, 0
        %v1708 = vxor.u32 %v1702, 2147483648
        %v1709 = vsel %vm1707, %v1701, %v1708
        %vm1710 = vcmp.eq.s32.totalorder %v1705, 2
        %v1711 = vxor.u32 %v1701, 2147483648
        %v1712 = vsel %vm1710, %v1711, %v1702
        %v1713 = vsel %vm1706, %v1709, %v1712
        %v1714 = vsel %vm1703, nan, %v1713
        %v1715 = vand.u32 2147483647, %v1380
        %vm1716 = vcmp.le.f32.partialorder %v1715, 0.7853982
        %vm1717 = vcmp.lt.s32.totalorder %v1380, 0
        %v1718 = vand.u32 %v1380, 2139095040
        %v1719 = vshrl.u32 %v1718, 23
        %v1720 = vsub.s32 %v1719, 127
        %v1721 = vand.u32 2147483647, %v1380
        %v1722 = vand.u32 %v1721, 8388607
        %v1723 = vor.u32 %v1722, 8388608
        %v1724 = vsub.s32 0, %v1723
        %v1725 = vadd.s32 %v1720, 1
        %vm1726 = vcmp.gt.s32.totalorder %v1725, 0
        %v1727 = vsel %vm1726, %v1725, 0
        %v1728 = vshrl.u32 %v1727, 5
        %v1729 = vand.u32 %v1727, 31
        %v1730 = vsub.s32 32, %v1729
        %v1731 = vshrl.u32 683565275, %v1730
        %v1732 = vshll.u32 683565275, %v1729
        %v1733 = vshrl.u32 2475754826, %v1730
        %v1734 = vor.u32 %v1732, %v1733
        %v1735 = vshll.u32 2475754826, %v1729
        %v1736 = vshrl.u32 2131351028, %v1730
        %v1737 = vor.u32 %v1735, %v1736
        %v1738 = vshll.u32 2131351028, %v1729
        %v1739 = vshrl.u32 2102212464, %v1730
        %v1740 = vor.u32 %v1738, %v1739
        %v1741 = vshll.u32 2102212464, %v1729
        %v1742 = vshrl.u32 920167782, %v1730
        %v1743 = vor.u32 %v1741, %v1742
        %v1744 = vshll.u32 920167782, %v1729
        %v1745 = vshrl.u32 1326507024, %v1730
        %v1746 = vor.u32 %v1744, %v1745
        %vm1747 = vcmp.lt.s32.totalorder %v1728, 1
        %vm1748 = vcmp.lt.s32.totalorder %v1728, 2
        %vm1749 = vcmp.lt.s32.totalorder %v1728, 3
        %vm1750 = vcmp.lt.s32.totalorder %v1728, 4
        %v1751 = vsel %vm1747, %v1731, %v1734
        %v1752 = vsel %vm1750, %v1740, 2102212464
        %v1753 = vsel %vm1749, %v1737, %v1752
        %v1754 = vsel %vm1748, %v1751, %v1753
        %v1755 = vsel %vm1747, %v1734, %v1737
        %v1756 = vsel %vm1750, %v1743, 920167782
        %v1757 = vsel %vm1749, %v1740, %v1756
        %v1758 = vsel %vm1748, %v1755, %v1757
        %v1759 = vsel %vm1747, %v1737, %v1740
        %v1760 = vsel %vm1750, %v1746, 1326507024
        %v1761 = vsel %vm1749, %v1743, %v1760
        %v1762 = vsel %vm1748, %v1759, %v1761
        %v1763 = vshll.u32 %v1723, 8
        %v1764 = vmul.u32.u64.compose %v1763, %v1762
        %v1765 = vextract.low.u32 %v1764
        %v1766 = vextract.high.u32 %v1764
        %v1767 = vmul.u32.u64.compose %v1763, %v1758
        %v1768 = vextract.low.u32 %v1767
        %v1769 = vextract.high.u32 %v1767
        %v1770 = vmul.u32 %v1763, %v1754
        %v1771 = vadd.s32 %v1766, %v1768
        %vm1772 = vc.u32 %v1766, %v1768
        %v1773 = vadd.s32 %v1769, 1
        %v1774 = vsel %vm1772, %v1773, %v1769
        %v1775 = vadd.s32 %v1770, %v1774
        %v1776 = vadd.s32 %v1775, 536870912
        %v1777 = vshrl.u32 %v1776, 30
        %v1778 = vshll.u32 %v1777, 30
        %v1779 = vsub.s32 %v1775, %v1778
        %vm1780 = vcmp.lt.s32.totalorder %v1779, 0
        %v1781 = vsub.s32 0, %v1779
        %v1782 = vsel %vm1780, %v1781, %v1779
        %v1783 = vclz %v1782
        %v1784 = vsub.s32 %v1783, 2
        %vm1785 = vcmp.gt.s32.totalorder 0, %v1784
        %v1786 = vsel %vm1785, 0, %v1784
        %v1787 = vsub.s32 32, %v1786
        %v1788 = vshll.u32 %v1779, %v1786
        %v1789 = vshrl.u32 %v1771, %v1787
        %v1790 = vor.u32 %v1788, %v1789
        %v1791 = vsub.s32 4294967266, %v1786
        %v1792 = vadd.s32 %v1791, 127
        %v1793 = vshll.u32 %v1792, 23
        %v1794 = vor.u32 4788187, %v1793
        %v1795 = vand.u32 2147483647, %v1794
        %v1797 = vcvt.s32.f32 %v1790
        %v1798 = vmul.f32 %v1797, %v1795
        %v1799 = vxor.u32 %v1798, 2147483648
        %v1800 = vsel %vm1717, %v1799, %v1798
        %v1801 = vsub.s32 4, %v1777
        %v1802 = vsel %vm1717, %v1801, %v1777
        %v1803 = vsel %vm1716, %v1380, %v1800
        %v1804 = vsel %vm1716, 0, %v1802
        %v1805 = vcosq.f32.pop %v1803
        %v1806 = vsinq.f32.pop %v1803
        %vm1807 = vweird.f32 %v1380
        %v1808 = vadd.s32 %v1804, 3
        %v1809 = vand.u32 %v1808, 3
        %vm1810 = vcmp.lt.s32.totalorder %v1809, 2
        %vm1811 = vcmp.eq.s32.totalorder %v1809, 0
        %v1812 = vxor.u32 %v1806, 2147483648
        %v1813 = vsel %vm1811, %v1805, %v1812
        %vm1814 = vcmp.eq.s32.totalorder %v1809, 2
        %v1815 = vxor.u32 %v1805, 2147483648
        %v1816 = vsel %vm1814, %v1815, %v1806
        %v1817 = vsel %vm1810, %v1813, %v1816
        %v1818 = vsel %vm1807, nan, %v1817
        %v1819 = vand.u32 2147483647, %v1385
        %vm1820 = vcmp.le.f32.partialorder %v1819, 0.7853982
        %vm1821 = vcmp.lt.s32.totalorder %v1385, 0
        %v1822 = vand.u32 %v1385, 2139095040
        %v1823 = vshrl.u32 %v1822, 23
        %v1824 = vsub.s32 %v1823, 127
        %v1825 = vand.u32 2147483647, %v1385
        %v1826 = vand.u32 %v1825, 8388607
        %v1827 = vor.u32 %v1826, 8388608
        %v1828 = vsub.s32 0, %v1827
        %v1829 = vadd.s32 %v1824, 1
        %vm1830 = vcmp.gt.s32.totalorder %v1829, 0
        %v1831 = vsel %vm1830, %v1829, 0
        %v1832 = vshrl.u32 %v1831, 5
        %v1833 = vand.u32 %v1831, 31
        %v1834 = vsub.s32 32, %v1833
        %v1835 = vshrl.u32 683565275, %v1834
        %v1836 = vshll.u32 683565275, %v1833
        %v1837 = vshrl.u32 2475754826, %v1834
        %v1838 = vor.u32 %v1836, %v1837
        %v1839 = vshll.u32 2475754826, %v1833
        %v1840 = vshrl.u32 2131351028, %v1834
        %v1841 = vor.u32 %v1839, %v1840
        %v1842 = vshll.u32 2131351028, %v1833
        %v1843 = vshrl.u32 2102212464, %v1834
        %v1844 = vor.u32 %v1842, %v1843
        %v1845 = vshll.u32 2102212464, %v1833
        %v1846 = vshrl.u32 920167782, %v1834
        %v1847 = vor.u32 %v1845, %v1846
        %v1848 = vshll.u32 920167782, %v1833
        %v1849 = vshrl.u32 1326507024, %v1834
        %v1850 = vor.u32 %v1848, %v1849
        %vm1851 = vcmp.lt.s32.totalorder %v1832, 1
        %vm1852 = vcmp.lt.s32.totalorder %v1832, 2
        %vm1853 = vcmp.lt.s32.totalorder %v1832, 3
        %vm1854 = vcmp.lt.s32.totalorder %v1832, 4
        %v1855 = vsel %vm1851, %v1835, %v1838
        %v1856 = vsel %vm1854, %v1844, 2102212464
        %v1857 = vsel %vm1853, %v1841, %v1856
        %v1858 = vsel %vm1852, %v1855, %v1857
        %v1859 = vsel %vm1851, %v1838, %v1841
        %v1860 = vsel %vm1854, %v1847, 920167782
        %v1861 = vsel %vm1853, %v1844, %v1860
        %v1862 = vsel %vm1852, %v1859, %v1861
        %v1863 = vsel %vm1851, %v1841, %v1844
        %v1864 = vsel %vm1854, %v1850, 1326507024
        %v1865 = vsel %vm1853, %v1847, %v1864
        %v1866 = vsel %vm1852, %v1863, %v1865
        %v1867 = vshll.u32 %v1827, 8
        %v1868 = vmul.u32.u64.compose %v1867, %v1866
        %v1869 = vextract.low.u32 %v1868
        %v1870 = vextract.high.u32 %v1868
        %v1871 = vmul.u32.u64.compose %v1867, %v1862
        %v1872 = vextract.low.u32 %v1871
        %v1873 = vextract.high.u32 %v1871
        %v1874 = vmul.u32 %v1867, %v1858
        %v1875 = vadd.s32 %v1870, %v1872
        %vm1876 = vc.u32 %v1870, %v1872
        %v1877 = vadd.s32 %v1873, 1
        %v1878 = vsel %vm1876, %v1877, %v1873
        %v1879 = vadd.s32 %v1874, %v1878
        %v1880 = vadd.s32 %v1879, 536870912
        %v1881 = vshrl.u32 %v1880, 30
        %v1882 = vshll.u32 %v1881, 30
        %v1883 = vsub.s32 %v1879, %v1882
        %vm1884 = vcmp.lt.s32.totalorder %v1883, 0
        %v1885 = vsub.s32 0, %v1883
        %v1886 = vsel %vm1884, %v1885, %v1883
        %v1887 = vclz %v1886
        %v1888 = vsub.s32 %v1887, 2
        %vm1889 = vcmp.gt.s32.totalorder 0, %v1888
        %v1890 = vsel %vm1889, 0, %v1888
        %v1891 = vsub.s32 32, %v1890
        %v1892 = vshll.u32 %v1883, %v1890
        %v1893 = vshrl.u32 %v1875, %v1891
        %v1894 = vor.u32 %v1892, %v1893
        %v1895 = vsub.s32 4294967266, %v1890
        %v1896 = vadd.s32 %v1895, 127
        %v1897 = vshll.u32 %v1896, 23
        %v1898 = vor.u32 4788187, %v1897
        %v1899 = vand.u32 2147483647, %v1898
        %v1901 = vcvt.s32.f32 %v1894
        %v1902 = vmul.f32 %v1901, %v1899
        %v1903 = vxor.u32 %v1902, 2147483648
        %v1904 = vsel %vm1821, %v1903, %v1902
        %v1905 = vsub.s32 4, %v1881
        %v1906 = vsel %vm1821, %v1905, %v1881
        %v1907 = vsel %vm1820, %v1385, %v1904
        %v1908 = vsel %vm1820, 0, %v1906
        %v1909 = vcosq.f32.pop %v1907
        %v1910 = vsinq.f32.pop %v1907
        %vm1911 = vweird.f32 %v1385
        %v1912 = vadd.s32 %v1908, 3
        %v1913 = vand.u32 %v1912, 3
        %vm1914 = vcmp.lt.s32.totalorder %v1913, 2
        %vm1915 = vcmp.eq.s32.totalorder %v1913, 0
        %v1916 = vxor.u32 %v1910, 2147483648
        %v1917 = vsel %vm1915, %v1909, %v1916
        %vm1918 = vcmp.eq.s32.totalorder %v1913, 2
        %v1919 = vxor.u32 %v1909, 2147483648
        %v1920 = vsel %vm1918, %v1919, %v1910
        %v1921 = vsel %vm1914, %v1917, %v1920
        %v1922 = vsel %vm1911, nan, %v1921
        %v1923 = vand.u32 2147483647, %v1390
        %vm1924 = vcmp.le.f32.partialorder %v1923, 0.7853982
        %vm1925 = vcmp.lt.s32.totalorder %v1390, 0
        %v1926 = vand.u32 %v1390, 2139095040
        %v1927 = vshrl.u32 %v1926, 23
        %v1928 = vsub.s32 %v1927, 127
        %v1929 = vand.u32 2147483647, %v1390
        %v1930 = vand.u32 %v1929, 8388607
        %v1931 = vor.u32 %v1930, 8388608
        %v1932 = vsub.s32 0, %v1931
        %v1933 = vadd.s32 %v1928, 1
        %vm1934 = vcmp.gt.s32.totalorder %v1933, 0
        %v1935 = vsel %vm1934, %v1933, 0
        %v1936 = vshrl.u32 %v1935, 5
        %v1937 = vand.u32 %v1935, 31
        %v1938 = vsub.s32 32, %v1937
        %v1939 = vshrl.u32 683565275, %v1938
        %v1940 = vshll.u32 683565275, %v1937
        %v1941 = vshrl.u32 2475754826, %v1938
        %v1942 = vor.u32 %v1940, %v1941
        %v1943 = vshll.u32 2475754826, %v1937
        %v1944 = vshrl.u32 2131351028, %v1938
        %v1945 = vor.u32 %v1943, %v1944
        %v1946 = vshll.u32 2131351028, %v1937
        %v1947 = vshrl.u32 2102212464, %v1938
        %v1948 = vor.u32 %v1946, %v1947
        %v1949 = vshll.u32 2102212464, %v1937
        %v1950 = vshrl.u32 920167782, %v1938
        %v1951 = vor.u32 %v1949, %v1950
        %v1952 = vshll.u32 920167782, %v1937
        %v1953 = vshrl.u32 1326507024, %v1938
        %v1954 = vor.u32 %v1952, %v1953
        %vm1955 = vcmp.lt.s32.totalorder %v1936, 1
        %vm1956 = vcmp.lt.s32.totalorder %v1936, 2
        %vm1957 = vcmp.lt.s32.totalorder %v1936, 3
        %vm1958 = vcmp.lt.s32.totalorder %v1936, 4
        %v1959 = vsel %vm1955, %v1939, %v1942
        %v1960 = vsel %vm1958, %v1948, 2102212464
        %v1961 = vsel %vm1957, %v1945, %v1960
        %v1962 = vsel %vm1956, %v1959, %v1961
        %v1963 = vsel %vm1955, %v1942, %v1945
        %v1964 = vsel %vm1958, %v1951, 920167782
        %v1965 = vsel %vm1957, %v1948, %v1964
        %v1966 = vsel %vm1956, %v1963, %v1965
        %v1967 = vsel %vm1955, %v1945, %v1948
        %v1968 = vsel %vm1958, %v1954, 1326507024
        %v1969 = vsel %vm1957, %v1951, %v1968
        %v1970 = vsel %vm1956, %v1967, %v1969
        %v1971 = vshll.u32 %v1931, 8
        %v1972 = vmul.u32.u64.compose %v1971, %v1970
        %v1973 = vextract.low.u32 %v1972
        %v1974 = vextract.high.u32 %v1972
        %v1975 = vmul.u32.u64.compose %v1971, %v1966
        %v1976 = vextract.low.u32 %v1975
        %v1977 = vextract.high.u32 %v1975
        %v1978 = vmul.u32 %v1971, %v1962
        %v1979 = vadd.s32 %v1974, %v1976
        %vm1980 = vc.u32 %v1974, %v1976
        %v1981 = vadd.s32 %v1977, 1
        %v1982 = vsel %vm1980, %v1981, %v1977
        %v1983 = vadd.s32 %v1978, %v1982
        %v1984 = vadd.s32 %v1983, 536870912
        %v1985 = vshrl.u32 %v1984, 30
        %v1986 = vshll.u32 %v1985, 30
        %v1987 = vsub.s32 %v1983, %v1986
        %vm1988 = vcmp.lt.s32.totalorder %v1987, 0
        %v1989 = vsub.s32 0, %v1987
        %v1990 = vsel %vm1988, %v1989, %v1987
        %v1991 = vclz %v1990
        %v1992 = vsub.s32 %v1991, 2
        %vm1993 = vcmp.gt.s32.totalorder 0, %v1992
        %v1994 = vsel %vm1993, 0, %v1992
        %v1995 = vsub.s32 32, %v1994
        %v1996 = vshll.u32 %v1987, %v1994
        %v1997 = vshrl.u32 %v1979, %v1995
        %v1998 = vor.u32 %v1996, %v1997
        %v1999 = vsub.s32 4294967266, %v1994
        %v2000 = vadd.s32 %v1999, 127
        %v2001 = vshll.u32 %v2000, 23
        %v2002 = vor.u32 4788187, %v2001
        %v2003 = vand.u32 2147483647, %v2002
        %v2005 = vcvt.s32.f32 %v1998
        %v2006 = vmul.f32 %v2005, %v2003
        %v2007 = vxor.u32 %v2006, 2147483648
        %v2008 = vsel %vm1925, %v2007, %v2006
        %v2009 = vsub.s32 4, %v1985
        %v2010 = vsel %vm1925, %v2009, %v1985
        %v2011 = vsel %vm1924, %v1390, %v2008
        %v2012 = vsel %vm1924, 0, %v2010
        %v2013 = vcosq.f32.pop %v2011
        %v2014 = vsinq.f32.pop %v2011
        %vm2015 = vweird.f32 %v1390
        %v2016 = vadd.s32 %v2012, 3
        %v2017 = vand.u32 %v2016, 3
        %vm2018 = vcmp.lt.s32.totalorder %v2017, 2
        %vm2019 = vcmp.eq.s32.totalorder %v2017, 0
        %v2020 = vxor.u32 %v2014, 2147483648
        %v2021 = vsel %vm2019, %v2013, %v2020
        %vm2022 = vcmp.eq.s32.totalorder %v2017, 2
        %v2023 = vxor.u32 %v2013, 2147483648
        %v2024 = vsel %vm2022, %v2023, %v2014
        %v2025 = vsel %vm2018, %v2021, %v2024
        %v2026 = vsel %vm2015, nan, %v2025
        %v2027 = vand.u32 2147483647, %v1395
        %vm2028 = vcmp.le.f32.partialorder %v2027, 0.7853982
        %vm2029 = vcmp.lt.s32.totalorder %v1395, 0
        %v2030 = vand.u32 %v1395, 2139095040
        %v2031 = vshrl.u32 %v2030, 23
        %v2032 = vsub.s32 %v2031, 127
        %v2033 = vand.u32 2147483647, %v1395
        %v2034 = vand.u32 %v2033, 8388607
        %v2035 = vor.u32 %v2034, 8388608
        %v2036 = vsub.s32 0, %v2035
        %v2037 = vadd.s32 %v2032, 1
        %vm2038 = vcmp.gt.s32.totalorder %v2037, 0
        %v2039 = vsel %vm2038, %v2037, 0
        %v2040 = vshrl.u32 %v2039, 5
        %v2041 = vand.u32 %v2039, 31
        %v2042 = vsub.s32 32, %v2041
        %v2043 = vshrl.u32 683565275, %v2042
        %v2044 = vshll.u32 683565275, %v2041
        %v2045 = vshrl.u32 2475754826, %v2042
        %v2046 = vor.u32 %v2044, %v2045
        %v2047 = vshll.u32 2475754826, %v2041
        %v2048 = vshrl.u32 2131351028, %v2042
        %v2049 = vor.u32 %v2047, %v2048
        %v2050 = vshll.u32 2131351028, %v2041
        %v2051 = vshrl.u32 2102212464, %v2042
        %v2052 = vor.u32 %v2050, %v2051
        %v2053 = vshll.u32 2102212464, %v2041
        %v2054 = vshrl.u32 920167782, %v2042
        %v2055 = vor.u32 %v2053, %v2054
        %v2056 = vshll.u32 920167782, %v2041
        %v2057 = vshrl.u32 1326507024, %v2042
        %v2058 = vor.u32 %v2056, %v2057
        %vm2059 = vcmp.lt.s32.totalorder %v2040, 1
        %vm2060 = vcmp.lt.s32.totalorder %v2040, 2
        %vm2061 = vcmp.lt.s32.totalorder %v2040, 3
        %vm2062 = vcmp.lt.s32.totalorder %v2040, 4
        %v2063 = vsel %vm2059, %v2043, %v2046
        %v2064 = vsel %vm2062, %v2052, 2102212464
        %v2065 = vsel %vm2061, %v2049, %v2064
        %v2066 = vsel %vm2060, %v2063, %v2065
        %v2067 = vsel %vm2059, %v2046, %v2049
        %v2068 = vsel %vm2062, %v2055, 920167782
        %v2069 = vsel %vm2061, %v2052, %v2068
        %v2070 = vsel %vm2060, %v2067, %v2069
        %v2071 = vsel %vm2059, %v2049, %v2052
        %v2072 = vsel %vm2062, %v2058, 1326507024
        %v2073 = vsel %vm2061, %v2055, %v2072
        %v2074 = vsel %vm2060, %v2071, %v2073
        %v2075 = vshll.u32 %v2035, 8
        %v2076 = vmul.u32.u64.compose %v2075, %v2074
        %v2077 = vextract.low.u32 %v2076
        %v2078 = vextract.high.u32 %v2076
        %v2079 = vmul.u32.u64.compose %v2075, %v2070
        %v2080 = vextract.low.u32 %v2079
        %v2081 = vextract.high.u32 %v2079
        %v2082 = vmul.u32 %v2075, %v2066
        %v2083 = vadd.s32 %v2078, %v2080
        %vm2084 = vc.u32 %v2078, %v2080
        %v2085 = vadd.s32 %v2081, 1
        %v2086 = vsel %vm2084, %v2085, %v2081
        %v2087 = vadd.s32 %v2082, %v2086
        %v2088 = vadd.s32 %v2087, 536870912
        %v2089 = vshrl.u32 %v2088, 30
        %v2090 = vshll.u32 %v2089, 30
        %v2091 = vsub.s32 %v2087, %v2090
        %vm2092 = vcmp.lt.s32.totalorder %v2091, 0
        %v2093 = vsub.s32 0, %v2091
        %v2094 = vsel %vm2092, %v2093, %v2091
        %v2095 = vclz %v2094
        %v2096 = vsub.s32 %v2095, 2
        %vm2097 = vcmp.gt.s32.totalorder 0, %v2096
        %v2098 = vsel %vm2097, 0, %v2096
        %v2099 = vsub.s32 32, %v2098
        %v2100 = vshll.u32 %v2091, %v2098
        %v2101 = vshrl.u32 %v2083, %v2099
        %v2102 = vor.u32 %v2100, %v2101
        %v2103 = vsub.s32 4294967266, %v2098
        %v2104 = vadd.s32 %v2103, 127
        %v2105 = vshll.u32 %v2104, 23
        %v2106 = vor.u32 4788187, %v2105
        %v2107 = vand.u32 2147483647, %v2106
        %v2109 = vcvt.s32.f32 %v2102
        %v2110 = vmul.f32 %v2109, %v2107
        %v2111 = vxor.u32 %v2110, 2147483648
        %v2112 = vsel %vm2029, %v2111, %v2110
        %v2113 = vsub.s32 4, %v2089
        %v2114 = vsel %vm2029, %v2113, %v2089
        %v2115 = vsel %vm2028, %v1395, %v2112
        %v2116 = vsel %vm2028, 0, %v2114
        %v2117 = vcosq.f32.pop %v2115
        %v2118 = vsinq.f32.pop %v2115
        %vm2119 = vweird.f32 %v1395
        %v2120 = vadd.s32 %v2116, 3
        %v2121 = vand.u32 %v2120, 3
        %vm2122 = vcmp.lt.s32.totalorder %v2121, 2
        %vm2123 = vcmp.eq.s32.totalorder %v2121, 0
        %v2124 = vxor.u32 %v2118, 2147483648
        %v2125 = vsel %vm2123, %v2117, %v2124
        %vm2126 = vcmp.eq.s32.totalorder %v2121, 2
        %v2127 = vxor.u32 %v2117, 2147483648
        %v2128 = vsel %vm2126, %v2127, %v2118
        %v2129 = vsel %vm2122, %v2125, %v2128
        %v2130 = vsel %vm2119, nan, %v2129
        %v2131 = vand.u32 2147483647, %v1400
        %vm2132 = vcmp.le.f32.partialorder %v2131, 0.7853982
        %vm2133 = vcmp.lt.s32.totalorder %v1400, 0
        %v2134 = vand.u32 %v1400, 2139095040
        %v2135 = vshrl.u32 %v2134, 23
        %v2136 = vsub.s32 %v2135, 127
        %v2137 = vand.u32 2147483647, %v1400
        %v2138 = vand.u32 %v2137, 8388607
        %v2139 = vor.u32 %v2138, 8388608
        %v2140 = vsub.s32 0, %v2139
        %v2141 = vadd.s32 %v2136, 1
        %vm2142 = vcmp.gt.s32.totalorder %v2141, 0
        %v2143 = vsel %vm2142, %v2141, 0
        %v2144 = vshrl.u32 %v2143, 5
        %v2145 = vand.u32 %v2143, 31
        %v2146 = vsub.s32 32, %v2145
        %v2147 = vshrl.u32 683565275, %v2146
        %v2148 = vshll.u32 683565275, %v2145
        %v2149 = vshrl.u32 2475754826, %v2146
        %v2150 = vor.u32 %v2148, %v2149
        %v2151 = vshll.u32 2475754826, %v2145
        %v2152 = vshrl.u32 2131351028, %v2146
        %v2153 = vor.u32 %v2151, %v2152
        %v2154 = vshll.u32 2131351028, %v2145
        %v2155 = vshrl.u32 2102212464, %v2146
        %v2156 = vor.u32 %v2154, %v2155
        %v2157 = vshll.u32 2102212464, %v2145
        %v2158 = vshrl.u32 920167782, %v2146
        %v2159 = vor.u32 %v2157, %v2158
        %v2160 = vshll.u32 920167782, %v2145
        %v2161 = vshrl.u32 1326507024, %v2146
        %v2162 = vor.u32 %v2160, %v2161
        %vm2163 = vcmp.lt.s32.totalorder %v2144, 1
        %vm2164 = vcmp.lt.s32.totalorder %v2144, 2
        %vm2165 = vcmp.lt.s32.totalorder %v2144, 3
        %vm2166 = vcmp.lt.s32.totalorder %v2144, 4
        %v2167 = vsel %vm2163, %v2147, %v2150
        %v2168 = vsel %vm2166, %v2156, 2102212464
        %v2169 = vsel %vm2165, %v2153, %v2168
        %v2170 = vsel %vm2164, %v2167, %v2169
        %v2171 = vsel %vm2163, %v2150, %v2153
        %v2172 = vsel %vm2166, %v2159, 920167782
        %v2173 = vsel %vm2165, %v2156, %v2172
        %v2174 = vsel %vm2164, %v2171, %v2173
        %v2175 = vsel %vm2163, %v2153, %v2156
        %v2176 = vsel %vm2166, %v2162, 1326507024
        %v2177 = vsel %vm2165, %v2159, %v2176
        %v2178 = vsel %vm2164, %v2175, %v2177
        %v2179 = vshll.u32 %v2139, 8
        %v2180 = vmul.u32.u64.compose %v2179, %v2178
        %v2181 = vextract.low.u32 %v2180
        %v2182 = vextract.high.u32 %v2180
        %v2183 = vmul.u32.u64.compose %v2179, %v2174
        %v2184 = vextract.low.u32 %v2183
        %v2185 = vextract.high.u32 %v2183
        %v2186 = vmul.u32 %v2179, %v2170
        %v2187 = vadd.s32 %v2182, %v2184
        %vm2188 = vc.u32 %v2182, %v2184
        %v2189 = vadd.s32 %v2185, 1
        %v2190 = vsel %vm2188, %v2189, %v2185
        %v2191 = vadd.s32 %v2186, %v2190
        %v2192 = vadd.s32 %v2191, 536870912
        %v2193 = vshrl.u32 %v2192, 30
        %v2194 = vshll.u32 %v2193, 30
        %v2195 = vsub.s32 %v2191, %v2194
        %vm2196 = vcmp.lt.s32.totalorder %v2195, 0
        %v2197 = vsub.s32 0, %v2195
        %v2198 = vsel %vm2196, %v2197, %v2195
        %v2199 = vclz %v2198
        %v2200 = vsub.s32 %v2199, 2
        %vm2201 = vcmp.gt.s32.totalorder 0, %v2200
        %v2202 = vsel %vm2201, 0, %v2200
        %v2203 = vsub.s32 32, %v2202
        %v2204 = vshll.u32 %v2195, %v2202
        %v2205 = vshrl.u32 %v2187, %v2203
        %v2206 = vor.u32 %v2204, %v2205
        %v2207 = vsub.s32 4294967266, %v2202
        %v2208 = vadd.s32 %v2207, 127
        %v2209 = vshll.u32 %v2208, 23
        %v2210 = vor.u32 4788187, %v2209
        %v2211 = vand.u32 2147483647, %v2210
        %v2213 = vcvt.s32.f32 %v2206
        %v2214 = vmul.f32 %v2213, %v2211
        %v2215 = vxor.u32 %v2214, 2147483648
        %v2216 = vsel %vm2133, %v2215, %v2214
        %v2217 = vsub.s32 4, %v2193
        %v2218 = vsel %vm2133, %v2217, %v2193
        %v2219 = vsel %vm2132, %v1400, %v2216
        %v2220 = vsel %vm2132, 0, %v2218
        %v2221 = vcosq.f32.pop %v2219
        %v2222 = vsinq.f32.pop %v2219
        %vm2223 = vweird.f32 %v1400
        %v2224 = vadd.s32 %v2220, 3
        %v2225 = vand.u32 %v2224, 3
        %vm2226 = vcmp.lt.s32.totalorder %v2225, 2
        %vm2227 = vcmp.eq.s32.totalorder %v2225, 0
        %v2228 = vxor.u32 %v2222, 2147483648
        %v2229 = vsel %vm2227, %v2221, %v2228
        %vm2230 = vcmp.eq.s32.totalorder %v2225, 2
        %v2231 = vxor.u32 %v2221, 2147483648
        %v2232 = vsel %vm2230, %v2231, %v2222
        %v2233 = vsel %vm2226, %v2229, %v2232
        %v2234 = vsel %vm2223, nan, %v2233
        %s2235 = scalar_lea.vmem [#allocation2], 128
        %v2236 = vld [vmem:[%s2235] sm:$0xff]
        %v2237 = vld [vmem:[%s2235 + $0x8] sm:$0xff]
        %v2238 = vld [vmem:[%s2235 + $0x10] sm:$0xff]
        %v2239 = vld [vmem:[%s2235 + $0x18] sm:$0xff]
        %v2240 = vld [vmem:[%s2235 + $0x20] sm:$0xff]
        %v2241 = vld [vmem:[%s2235 + $0x28] sm:$0xff]
        %v2242 = vld [vmem:[%s2235 + $0x30] sm:$0xff]
        %v2243 = vld [vmem:[%s2235 + $0x38] sm:$0xff]
        %v2244 = vld [vmem:[%s2235 + $0x40] sm:$0xff]
        %v2245 = vld [vmem:[%s2235 + $0x48] sm:$0xff]
        %v2246 = vld [vmem:[%s2235 + $0x50] sm:$0xff]
        %v2247 = vld [vmem:[%s2235 + $0x58] sm:$0xff]
        %v2248 = vld [vmem:[%s2235 + $0x60] sm:$0xff]
        %v2249 = vld [vmem:[%s2235 + $0x68] sm:$0xff]
        %v2250 = vld [vmem:[%s2235 + $0x70] sm:$0xff]
        %v2251 = vld [vmem:[%s2235 + $0x78] sm:$0xff]
        %s2252 = scalar_lea.vmem %s4, 1
        %v2253 = vld [vmem:[%s2252] sm:$0x1]
        %v2255 = vlaneseq
        %v2256 = vshrl.u32 %v2255, 7
        %v2257 = vsub.s32 0, %v2256
        %v2258 = vrot.slane %v2253, %v2257
        %2260 = vmatprep.subr.mxu0 0.0
        %2261 = vmatpush1.msra.mxu0 %v2236
        %2262 = vmatprep.subr.mxu0 0.0
        %2263 = vmatpush1.msra.mxu0 %v2237
        %2264 = vmatprep.subr.mxu0 0.0
        %2265 = vmatpush1.msra.mxu0 %v2238
        %2266 = vmatprep.subr.mxu0 0.0
        %2267 = vmatpush1.msra.mxu0 %v2239
        %2268 = vmatprep.subr.mxu0 0.0
        %2269 = vmatpush1.msra.mxu0 %v2240
        %2270 = vmatprep.subr.mxu0 0.0
        %2271 = vmatpush1.msra.mxu0 %v2241
        %2272 = vmatprep.subr.mxu0 0.0
        %2273 = vmatpush1.msra.mxu0 %v2242
        %2274 = vmatprep.subr.mxu0 0.0
        %2275 = vmatpush1.msra.mxu0 %v2243
        %2276 = vmatprep.subr.mxu0 0.0
        %2277 = vmatpush1.msra.mxu0 %v2244
        %2278 = vmatprep.subr.mxu0 0.0
        %2279 = vmatpush1.msra.mxu0 %v2245
        %2280 = vmatprep.subr.mxu0 0.0
        %2281 = vmatpush1.msra.mxu0 %v2246
        %2282 = vmatprep.subr.mxu0 0.0
        %2283 = vmatpush1.msra.mxu0 %v2247
        %2284 = vmatprep.subr.mxu0 0.0
        %2285 = vmatpush1.msra.mxu0 %v2248
        %2286 = vmatprep.subr.mxu0 0.0
        %2287 = vmatpush1.msra.mxu0 %v2249
        %2288 = vmatprep.subr.mxu0 0.0
        %2289 = vmatpush1.msra.mxu0 %v2250
        %2290 = vmatprep.subr.mxu0 0.0
        %2291 = vmatpush1.msra.mxu0 %v2251
        %2292 = vmatprep.subr.mxu0 0.0
        %2293 = vmatpush1.msra.mxu0 0.0
        %2294 = vmatprep.subr.mxu0 0.0
        %2295 = vmatpush1.msra.mxu0 0.0
        %2296 = vmatprep.subr.mxu0 0.0
        %2297 = vmatpush1.msra.mxu0 0.0
        %2298 = vmatprep.subr.mxu0 0.0
        %2299 = vmatpush1.msra.mxu0 0.0
        %2300 = vmatprep.subr.mxu0 0.0
        %2301 = vmatpush1.msra.mxu0 0.0
        %2302 = vmatprep.subr.mxu0 0.0
        %2303 = vmatpush1.msra.mxu0 0.0
        %2304 = vmatprep.subr.mxu0 0.0
        %2305 = vmatpush1.msra.mxu0 0.0
        %2306 = vmatprep.subr.mxu0 0.0
        %2307 = vmatpush1.msra.mxu0 0.0
        %2308 = vmatprep.subr.mxu0 0.0
        %2309 = vmatpush1.msra.mxu0 0.0
        %2310 = vmatprep.subr.mxu0 0.0
        %2311 = vmatpush1.msra.mxu0 0.0
        %2312 = vmatprep.subr.mxu0 0.0
        %2313 = vmatpush1.msra.mxu0 0.0
        %2314 = vmatprep.subr.mxu0 0.0
        %2315 = vmatpush1.msra.mxu0 0.0
        %2316 = vmatprep.subr.mxu0 0.0
        %2317 = vmatpush1.msra.mxu0 0.0
        %2318 = vmatprep.subr.mxu0 0.0
        %2319 = vmatpush1.msra.mxu0 0.0
        %2320 = vmatprep.subr.mxu0 0.0
        %2321 = vmatpush1.msra.mxu0 0.0
        %2322 = vmatprep.subr.mxu0 0.0
        %2323 = vmatpush1.msra.mxu0 0.0
        %2324 = vmatprep.mubr.f32.mxu0 0.0
        %2325 = vmatmul.mubr.f32.gmra.mrb[0].mxu0 %v1506
        %v2326 = vpop.f32.mrb[0].mxu0
        %v2327 = vadd.f32 %v2258, %v2326
        %v2328 = vpop.f32.mrb[0].mxu0
        %2329 = vmatprep.mubr.f32.mxu0 0.0
        %2330 = vmatmul.mubr.f32.gmra.mrb[0].mxu0 %v1610
        %v2331 = vpop.f32.mrb[0].mxu0
        %v2332 = vadd.f32 %v2258, %v2331
        %v2333 = vpop.f32.mrb[0].mxu0
        %2334 = vmatprep.mubr.f32.mxu0 0.0
        %2335 = vmatmul.mubr.f32.gmra.mrb[0].mxu0 %v1714
        %v2336 = vpop.f32.mrb[0].mxu0
        %v2337 = vadd.f32 %v2258, %v2336
        %v2338 = vpop.f32.mrb[0].mxu0
        %2339 = vmatprep.mubr.f32.mxu0 0.0
        %2340 = vmatmul.mubr.f32.gmra.mrb[0].mxu0 %v1818
        %v2341 = vpop.f32.mrb[0].mxu0
        %v2342 = vadd.f32 %v2258, %v2341
        %v2343 = vpop.f32.mrb[0].mxu0
        %2344 = vmatprep.mubr.f32.mxu0 0.0
        %2345 = vmatmul.mubr.f32.gmra.mrb[0].mxu0 %v1922
        %v2346 = vpop.f32.mrb[0].mxu0
        %v2347 = vadd.f32 %v2258, %v2346
        %v2348 = vpop.f32.mrb[0].mxu0
        %2349 = vmatprep.mubr.f32.mxu0 0.0
        %2350 = vmatmul.mubr.f32.gmra.mrb[0].mxu0 %v2026
        %v2351 = vpop.f32.mrb[0].mxu0
        %v2352 = vadd.f32 %v2258, %v2351
        %v2353 = vpop.f32.mrb[0].mxu0
        %2354 = vmatprep.mubr.f32.mxu0 0.0
        %2355 = vmatmul.mubr.f32.gmra.mrb[0].mxu0 %v2130
        %v2356 = vpop.f32.mrb[0].mxu0
        %v2357 = vadd.f32 %v2258, %v2356
        %v2358 = vpop.f32.mrb[0].mxu0
        %2359 = vmatprep.mubr.f32.mxu0 0.0
        %2360 = vmatmul.mubr.f32.gmra.mrb[0].mxu0 %v2234
        %v2361 = vpop.f32.mrb[0].mxu0
        %v2362 = vadd.f32 %v2258, %v2361
        %v2363 = vpop.f32.mrb[0].mxu0
        %2364 = vdwg.mxu0
        %v2365 = vand.u32 2147483647, %v2327
        %vm2366 = vcmp.le.f32.partialorder %v2365, 0.7853982
        %vm2367 = vcmp.lt.s32.totalorder %v2327, 0
        %v2368 = vand.u32 %v2327, 2139095040
        %v2369 = vshrl.u32 %v2368, 23
        %v2370 = vsub.s32 %v2369, 127
        %v2371 = vand.u32 2147483647, %v2327
        %v2372 = vand.u32 %v2371, 8388607
        %v2373 = vor.u32 %v2372, 8388608
        %v2374 = vsub.s32 0, %v2373
        %v2375 = vadd.s32 %v2370, 1
        %vm2376 = vcmp.gt.s32.totalorder %v2375, 0
        %v2377 = vsel %vm2376, %v2375, 0
        %v2378 = vshrl.u32 %v2377, 5
        %v2379 = vand.u32 %v2377, 31
        %v2380 = vsub.s32 32, %v2379
        %v2381 = vshrl.u32 683565275, %v2380
        %v2382 = vshll.u32 683565275, %v2379
        %v2383 = vshrl.u32 2475754826, %v2380
        %v2384 = vor.u32 %v2382, %v2383
        %v2385 = vshll.u32 2475754826, %v2379
        %v2386 = vshrl.u32 2131351028, %v2380
        %v2387 = vor.u32 %v2385, %v2386
        %v2388 = vshll.u32 2131351028, %v2379
        %v2389 = vshrl.u32 2102212464, %v2380
        %v2390 = vor.u32 %v2388, %v2389
        %v2391 = vshll.u32 2102212464, %v2379
        %v2392 = vshrl.u32 920167782, %v2380
        %v2393 = vor.u32 %v2391, %v2392
        %v2394 = vshll.u32 920167782, %v2379
        %v2395 = vshrl.u32 1326507024, %v2380
        %v2396 = vor.u32 %v2394, %v2395
        %vm2397 = vcmp.lt.s32.totalorder %v2378, 1
        %vm2398 = vcmp.lt.s32.totalorder %v2378, 2
        %vm2399 = vcmp.lt.s32.totalorder %v2378, 3
        %vm2400 = vcmp.lt.s32.totalorder %v2378, 4
        %v2401 = vsel %vm2397, %v2381, %v2384
        %v2402 = vsel %vm2400, %v2390, 2102212464
        %v2403 = vsel %vm2399, %v2387, %v2402
        %v2404 = vsel %vm2398, %v2401, %v2403
        %v2405 = vsel %vm2397, %v2384, %v2387
        %v2406 = vsel %vm2400, %v2393, 920167782
        %v2407 = vsel %vm2399, %v2390, %v2406
        %v2408 = vsel %vm2398, %v2405, %v2407
        %v2409 = vsel %vm2397, %v2387, %v2390
        %v2410 = vsel %vm2400, %v2396, 1326507024
        %v2411 = vsel %vm2399, %v2393, %v2410
        %v2412 = vsel %vm2398, %v2409, %v2411
        %v2413 = vshll.u32 %v2373, 8
        %v2414 = vmul.u32.u64.compose %v2413, %v2412
        %v2415 = vextract.low.u32 %v2414
        %v2416 = vextract.high.u32 %v2414
        %v2417 = vmul.u32.u64.compose %v2413, %v2408
        %v2418 = vextract.low.u32 %v2417
        %v2419 = vextract.high.u32 %v2417
        %v2420 = vmul.u32 %v2413, %v2404
        %v2421 = vadd.s32 %v2416, %v2418
        %vm2422 = vc.u32 %v2416, %v2418
        %v2423 = vadd.s32 %v2419, 1
        %v2424 = vsel %vm2422, %v2423, %v2419
        %v2425 = vadd.s32 %v2420, %v2424
        %v2426 = vadd.s32 %v2425, 536870912
        %v2427 = vshrl.u32 %v2426, 30
        %v2428 = vshll.u32 %v2427, 30
        %v2429 = vsub.s32 %v2425, %v2428
        %vm2430 = vcmp.lt.s32.totalorder %v2429, 0
        %v2431 = vsub.s32 0, %v2429
        %v2432 = vsel %vm2430, %v2431, %v2429
        %v2433 = vclz %v2432
        %v2434 = vsub.s32 %v2433, 2
        %vm2435 = vcmp.gt.s32.totalorder 0, %v2434
        %v2436 = vsel %vm2435, 0, %v2434
        %v2437 = vsub.s32 32, %v2436
        %v2438 = vshll.u32 %v2429, %v2436
        %v2439 = vshrl.u32 %v2421, %v2437
        %v2440 = vor.u32 %v2438, %v2439
        %v2441 = vsub.s32 4294967266, %v2436
        %v2442 = vadd.s32 %v2441, 127
        %v2443 = vshll.u32 %v2442, 23
        %v2444 = vor.u32 4788187, %v2443
        %v2445 = vand.u32 2147483647, %v2444
        %v2447 = vcvt.s32.f32 %v2440
        %v2448 = vmul.f32 %v2447, %v2445
        %v2449 = vxor.u32 %v2448, 2147483648
        %v2450 = vsel %vm2367, %v2449, %v2448
        %v2451 = vsub.s32 4, %v2427
        %v2452 = vsel %vm2367, %v2451, %v2427
        %v2453 = vsel %vm2366, %v2327, %v2450
        %v2454 = vsel %vm2366, 0, %v2452
        %v2455 = vcosq.f32.pop %v2453
        %v2456 = vsinq.f32.pop %v2453
        %vm2457 = vweird.f32 %v2327
        %v2458 = vadd.s32 %v2454, 3
        %v2459 = vand.u32 %v2458, 3
        %vm2460 = vcmp.lt.s32.totalorder %v2459, 2
        %vm2461 = vcmp.eq.s32.totalorder %v2459, 0
        %v2462 = vxor.u32 %v2456, 2147483648
        %v2463 = vsel %vm2461, %v2455, %v2462
        %vm2464 = vcmp.eq.s32.totalorder %v2459, 2
        %v2465 = vxor.u32 %v2455, 2147483648
        %v2466 = vsel %vm2464, %v2465, %v2456
        %v2467 = vsel %vm2460, %v2463, %v2466
        %v2468 = vsel %vm2457, nan, %v2467
        %v2469 = vand.u32 2147483647, %v2332
        %vm2470 = vcmp.le.f32.partialorder %v2469, 0.7853982
        %vm2471 = vcmp.lt.s32.totalorder %v2332, 0
        %v2472 = vand.u32 %v2332, 2139095040
        %v2473 = vshrl.u32 %v2472, 23
        %v2474 = vsub.s32 %v2473, 127
        %v2475 = vand.u32 2147483647, %v2332
        %v2476 = vand.u32 %v2475, 8388607
        %v2477 = vor.u32 %v2476, 8388608
        %v2478 = vsub.s32 0, %v2477
        %v2479 = vadd.s32 %v2474, 1
        %vm2480 = vcmp.gt.s32.totalorder %v2479, 0
        %v2481 = vsel %vm2480, %v2479, 0
        %v2482 = vshrl.u32 %v2481, 5
        %v2483 = vand.u32 %v2481, 31
        %v2484 = vsub.s32 32, %v2483
        %v2485 = vshrl.u32 683565275, %v2484
        %v2486 = vshll.u32 683565275, %v2483
        %v2487 = vshrl.u32 2475754826, %v2484
        %v2488 = vor.u32 %v2486, %v2487
        %v2489 = vshll.u32 2475754826, %v2483
        %v2490 = vshrl.u32 2131351028, %v2484
        %v2491 = vor.u32 %v2489, %v2490
        %v2492 = vshll.u32 2131351028, %v2483
        %v2493 = vshrl.u32 2102212464, %v2484
        %v2494 = vor.u32 %v2492, %v2493
        %v2495 = vshll.u32 2102212464, %v2483
        %v2496 = vshrl.u32 920167782, %v2484
        %v2497 = vor.u32 %v2495, %v2496
        %v2498 = vshll.u32 920167782, %v2483
        %v2499 = vshrl.u32 1326507024, %v2484
        %v2500 = vor.u32 %v2498, %v2499
        %vm2501 = vcmp.lt.s32.totalorder %v2482, 1
        %vm2502 = vcmp.lt.s32.totalorder %v2482, 2
        %vm2503 = vcmp.lt.s32.totalorder %v2482, 3
        %vm2504 = vcmp.lt.s32.totalorder %v2482, 4
        %v2505 = vsel %vm2501, %v2485, %v2488
        %v2506 = vsel %vm2504, %v2494, 2102212464
        %v2507 = vsel %vm2503, %v2491, %v2506
        %v2508 = vsel %vm2502, %v2505, %v2507
        %v2509 = vsel %vm2501, %v2488, %v2491
        %v2510 = vsel %vm2504, %v2497, 920167782
        %v2511 = vsel %vm2503, %v2494, %v2510
        %v2512 = vsel %vm2502, %v2509, %v2511
        %v2513 = vsel %vm2501, %v2491, %v2494
        %v2514 = vsel %vm2504, %v2500, 1326507024
        %v2515 = vsel %vm2503, %v2497, %v2514
        %v2516 = vsel %vm2502, %v2513, %v2515
        %v2517 = vshll.u32 %v2477, 8
        %v2518 = vmul.u32.u64.compose %v2517, %v2516
        %v2519 = vextract.low.u32 %v2518
        %v2520 = vextract.high.u32 %v2518
        %v2521 = vmul.u32.u64.compose %v2517, %v2512
        %v2522 = vextract.low.u32 %v2521
        %v2523 = vextract.high.u32 %v2521
        %v2524 = vmul.u32 %v2517, %v2508
        %v2525 = vadd.s32 %v2520, %v2522
        %vm2526 = vc.u32 %v2520, %v2522
        %v2527 = vadd.s32 %v2523, 1
        %v2528 = vsel %vm2526, %v2527, %v2523
        %v2529 = vadd.s32 %v2524, %v2528
        %v2530 = vadd.s32 %v2529, 536870912
        %v2531 = vshrl.u32 %v2530, 30
        %v2532 = vshll.u32 %v2531, 30
        %v2533 = vsub.s32 %v2529, %v2532
        %vm2534 = vcmp.lt.s32.totalorder %v2533, 0
        %v2535 = vsub.s32 0, %v2533
        %v2536 = vsel %vm2534, %v2535, %v2533
        %v2537 = vclz %v2536
        %v2538 = vsub.s32 %v2537, 2
        %vm2539 = vcmp.gt.s32.totalorder 0, %v2538
        %v2540 = vsel %vm2539, 0, %v2538
        %v2541 = vsub.s32 32, %v2540
        %v2542 = vshll.u32 %v2533, %v2540
        %v2543 = vshrl.u32 %v2525, %v2541
        %v2544 = vor.u32 %v2542, %v2543
        %v2545 = vsub.s32 4294967266, %v2540
        %v2546 = vadd.s32 %v2545, 127
        %v2547 = vshll.u32 %v2546, 23
        %v2548 = vor.u32 4788187, %v2547
        %v2549 = vand.u32 2147483647, %v2548
        %v2551 = vcvt.s32.f32 %v2544
        %v2552 = vmul.f32 %v2551, %v2549
        %v2553 = vxor.u32 %v2552, 2147483648
        %v2554 = vsel %vm2471, %v2553, %v2552
        %v2555 = vsub.s32 4, %v2531
        %v2556 = vsel %vm2471, %v2555, %v2531
        %v2557 = vsel %vm2470, %v2332, %v2554
        %v2558 = vsel %vm2470, 0, %v2556
        %v2559 = vcosq.f32.pop %v2557
        %v2560 = vsinq.f32.pop %v2557
        %vm2561 = vweird.f32 %v2332
        %v2562 = vadd.s32 %v2558, 3
        %v2563 = vand.u32 %v2562, 3
        %vm2564 = vcmp.lt.s32.totalorder %v2563, 2
        %vm2565 = vcmp.eq.s32.totalorder %v2563, 0
        %v2566 = vxor.u32 %v2560, 2147483648
        %v2567 = vsel %vm2565, %v2559, %v2566
        %vm2568 = vcmp.eq.s32.totalorder %v2563, 2
        %v2569 = vxor.u32 %v2559, 2147483648
        %v2570 = vsel %vm2568, %v2569, %v2560
        %v2571 = vsel %vm2564, %v2567, %v2570
        %v2572 = vsel %vm2561, nan, %v2571
        %v2573 = vand.u32 2147483647, %v2337
        %vm2574 = vcmp.le.f32.partialorder %v2573, 0.7853982
        %vm2575 = vcmp.lt.s32.totalorder %v2337, 0
        %v2576 = vand.u32 %v2337, 2139095040
        %v2577 = vshrl.u32 %v2576, 23
        %v2578 = vsub.s32 %v2577, 127
        %v2579 = vand.u32 2147483647, %v2337
        %v2580 = vand.u32 %v2579, 8388607
        %v2581 = vor.u32 %v2580, 8388608
        %v2582 = vsub.s32 0, %v2581
        %v2583 = vadd.s32 %v2578, 1
        %vm2584 = vcmp.gt.s32.totalorder %v2583, 0
        %v2585 = vsel %vm2584, %v2583, 0
        %v2586 = vshrl.u32 %v2585, 5
        %v2587 = vand.u32 %v2585, 31
        %v2588 = vsub.s32 32, %v2587
        %v2589 = vshrl.u32 683565275, %v2588
        %v2590 = vshll.u32 683565275, %v2587
        %v2591 = vshrl.u32 2475754826, %v2588
        %v2592 = vor.u32 %v2590, %v2591
        %v2593 = vshll.u32 2475754826, %v2587
        %v2594 = vshrl.u32 2131351028, %v2588
        %v2595 = vor.u32 %v2593, %v2594
        %v2596 = vshll.u32 2131351028, %v2587
        %v2597 = vshrl.u32 2102212464, %v2588
        %v2598 = vor.u32 %v2596, %v2597
        %v2599 = vshll.u32 2102212464, %v2587
        %v2600 = vshrl.u32 920167782, %v2588
        %v2601 = vor.u32 %v2599, %v2600
        %v2602 = vshll.u32 920167782, %v2587
        %v2603 = vshrl.u32 1326507024, %v2588
        %v2604 = vor.u32 %v2602, %v2603
        %vm2605 = vcmp.lt.s32.totalorder %v2586, 1
        %vm2606 = vcmp.lt.s32.totalorder %v2586, 2
        %vm2607 = vcmp.lt.s32.totalorder %v2586, 3
        %vm2608 = vcmp.lt.s32.totalorder %v2586, 4
        %v2609 = vsel %vm2605, %v2589, %v2592
        %v2610 = vsel %vm2608, %v2598, 2102212464
        %v2611 = vsel %vm2607, %v2595, %v2610
        %v2612 = vsel %vm2606, %v2609, %v2611
        %v2613 = vsel %vm2605, %v2592, %v2595
        %v2614 = vsel %vm2608, %v2601, 920167782
        %v2615 = vsel %vm2607, %v2598, %v2614
        %v2616 = vsel %vm2606, %v2613, %v2615
        %v2617 = vsel %vm2605, %v2595, %v2598
        %v2618 = vsel %vm2608, %v2604, 1326507024
        %v2619 = vsel %vm2607, %v2601, %v2618
        %v2620 = vsel %vm2606, %v2617, %v2619
        %v2621 = vshll.u32 %v2581, 8
        %v2622 = vmul.u32.u64.compose %v2621, %v2620
        %v2623 = vextract.low.u32 %v2622
        %v2624 = vextract.high.u32 %v2622
        %v2625 = vmul.u32.u64.compose %v2621, %v2616
        %v2626 = vextract.low.u32 %v2625
        %v2627 = vextract.high.u32 %v2625
        %v2628 = vmul.u32 %v2621, %v2612
        %v2629 = vadd.s32 %v2624, %v2626
        %vm2630 = vc.u32 %v2624, %v2626
        %v2631 = vadd.s32 %v2627, 1
        %v2632 = vsel %vm2630, %v2631, %v2627
        %v2633 = vadd.s32 %v2628, %v2632
        %v2634 = vadd.s32 %v2633, 536870912
        %v2635 = vshrl.u32 %v2634, 30
        %v2636 = vshll.u32 %v2635, 30
        %v2637 = vsub.s32 %v2633, %v2636
        %vm2638 = vcmp.lt.s32.totalorder %v2637, 0
        %v2639 = vsub.s32 0, %v2637
        %v2640 = vsel %vm2638, %v2639, %v2637
        %v2641 = vclz %v2640
        %v2642 = vsub.s32 %v2641, 2
        %vm2643 = vcmp.gt.s32.totalorder 0, %v2642
        %v2644 = vsel %vm2643, 0, %v2642
        %v2645 = vsub.s32 32, %v2644
        %v2646 = vshll.u32 %v2637, %v2644
        %v2647 = vshrl.u32 %v2629, %v2645
        %v2648 = vor.u32 %v2646, %v2647
        %v2649 = vsub.s32 4294967266, %v2644
        %v2650 = vadd.s32 %v2649, 127
        %v2651 = vshll.u32 %v2650, 23
        %v2652 = vor.u32 4788187, %v2651
        %v2653 = vand.u32 2147483647, %v2652
        %v2655 = vcvt.s32.f32 %v2648
        %v2656 = vmul.f32 %v2655, %v2653
        %v2657 = vxor.u32 %v2656, 2147483648
        %v2658 = vsel %vm2575, %v2657, %v2656
        %v2659 = vsub.s32 4, %v2635
        %v2660 = vsel %vm2575, %v2659, %v2635
        %v2661 = vsel %vm2574, %v2337, %v2658
        %v2662 = vsel %vm2574, 0, %v2660
        %v2663 = vcosq.f32.pop %v2661
        %v2664 = vsinq.f32.pop %v2661
        %vm2665 = vweird.f32 %v2337
        %v2666 = vadd.s32 %v2662, 3
        %v2667 = vand.u32 %v2666, 3
        %vm2668 = vcmp.lt.s32.totalorder %v2667, 2
        %vm2669 = vcmp.eq.s32.totalorder %v2667, 0
        %v2670 = vxor.u32 %v2664, 2147483648
        %v2671 = vsel %vm2669, %v2663, %v2670
        %vm2672 = vcmp.eq.s32.totalorder %v2667, 2
        %v2673 = vxor.u32 %v2663, 2147483648
        %v2674 = vsel %vm2672, %v2673, %v2664
        %v2675 = vsel %vm2668, %v2671, %v2674
        %v2676 = vsel %vm2665, nan, %v2675
        %v2677 = vand.u32 2147483647, %v2342
        %vm2678 = vcmp.le.f32.partialorder %v2677, 0.7853982
        %vm2679 = vcmp.lt.s32.totalorder %v2342, 0
        %v2680 = vand.u32 %v2342, 2139095040
        %v2681 = vshrl.u32 %v2680, 23
        %v2682 = vsub.s32 %v2681, 127
        %v2683 = vand.u32 2147483647, %v2342
        %v2684 = vand.u32 %v2683, 8388607
        %v2685 = vor.u32 %v2684, 8388608
        %v2686 = vsub.s32 0, %v2685
        %v2687 = vadd.s32 %v2682, 1
        %vm2688 = vcmp.gt.s32.totalorder %v2687, 0
        %v2689 = vsel %vm2688, %v2687, 0
        %v2690 = vshrl.u32 %v2689, 5
        %v2691 = vand.u32 %v2689, 31
        %v2692 = vsub.s32 32, %v2691
        %v2693 = vshrl.u32 683565275, %v2692
        %v2694 = vshll.u32 683565275, %v2691
        %v2695 = vshrl.u32 2475754826, %v2692
        %v2696 = vor.u32 %v2694, %v2695
        %v2697 = vshll.u32 2475754826, %v2691
        %v2698 = vshrl.u32 2131351028, %v2692
        %v2699 = vor.u32 %v2697, %v2698
        %v2700 = vshll.u32 2131351028, %v2691
        %v2701 = vshrl.u32 2102212464, %v2692
        %v2702 = vor.u32 %v2700, %v2701
        %v2703 = vshll.u32 2102212464, %v2691
        %v2704 = vshrl.u32 920167782, %v2692
        %v2705 = vor.u32 %v2703, %v2704
        %v2706 = vshll.u32 920167782, %v2691
        %v2707 = vshrl.u32 1326507024, %v2692
        %v2708 = vor.u32 %v2706, %v2707
        %vm2709 = vcmp.lt.s32.totalorder %v2690, 1
        %vm2710 = vcmp.lt.s32.totalorder %v2690, 2
        %vm2711 = vcmp.lt.s32.totalorder %v2690, 3
        %vm2712 = vcmp.lt.s32.totalorder %v2690, 4
        %v2713 = vsel %vm2709, %v2693, %v2696
        %v2714 = vsel %vm2712, %v2702, 2102212464
        %v2715 = vsel %vm2711, %v2699, %v2714
        %v2716 = vsel %vm2710, %v2713, %v2715
        %v2717 = vsel %vm2709, %v2696, %v2699
        %v2718 = vsel %vm2712, %v2705, 920167782
        %v2719 = vsel %vm2711, %v2702, %v2718
        %v2720 = vsel %vm2710, %v2717, %v2719
        %v2721 = vsel %vm2709, %v2699, %v2702
        %v2722 = vsel %vm2712, %v2708, 1326507024
        %v2723 = vsel %vm2711, %v2705, %v2722
        %v2724 = vsel %vm2710, %v2721, %v2723
        %v2725 = vshll.u32 %v2685, 8
        %v2726 = vmul.u32.u64.compose %v2725, %v2724
        %v2727 = vextract.low.u32 %v2726
        %v2728 = vextract.high.u32 %v2726
        %v2729 = vmul.u32.u64.compose %v2725, %v2720
        %v2730 = vextract.low.u32 %v2729
        %v2731 = vextract.high.u32 %v2729
        %v2732 = vmul.u32 %v2725, %v2716
        %v2733 = vadd.s32 %v2728, %v2730
        %vm2734 = vc.u32 %v2728, %v2730
        %v2735 = vadd.s32 %v2731, 1
        %v2736 = vsel %vm2734, %v2735, %v2731
        %v2737 = vadd.s32 %v2732, %v2736
        %v2738 = vadd.s32 %v2737, 536870912
        %v2739 = vshrl.u32 %v2738, 30
        %v2740 = vshll.u32 %v2739, 30
        %v2741 = vsub.s32 %v2737, %v2740
        %vm2742 = vcmp.lt.s32.totalorder %v2741, 0
        %v2743 = vsub.s32 0, %v2741
        %v2744 = vsel %vm2742, %v2743, %v2741
        %v2745 = vclz %v2744
        %v2746 = vsub.s32 %v2745, 2
        %vm2747 = vcmp.gt.s32.totalorder 0, %v2746
        %v2748 = vsel %vm2747, 0, %v2746
        %v2749 = vsub.s32 32, %v2748
        %v2750 = vshll.u32 %v2741, %v2748
        %v2751 = vshrl.u32 %v2733, %v2749
        %v2752 = vor.u32 %v2750, %v2751
        %v2753 = vsub.s32 4294967266, %v2748
        %v2754 = vadd.s32 %v2753, 127
        %v2755 = vshll.u32 %v2754, 23
        %v2756 = vor.u32 4788187, %v2755
        %v2757 = vand.u32 2147483647, %v2756
        %v2759 = vcvt.s32.f32 %v2752
        %v2760 = vmul.f32 %v2759, %v2757
        %v2761 = vxor.u32 %v2760, 2147483648
        %v2762 = vsel %vm2679, %v2761, %v2760
        %v2763 = vsub.s32 4, %v2739
        %v2764 = vsel %vm2679, %v2763, %v2739
        %v2765 = vsel %vm2678, %v2342, %v2762
        %v2766 = vsel %vm2678, 0, %v2764
        %v2767 = vcosq.f32.pop %v2765
        %v2768 = vsinq.f32.pop %v2765
        %vm2769 = vweird.f32 %v2342
        %v2770 = vadd.s32 %v2766, 3
        %v2771 = vand.u32 %v2770, 3
        %vm2772 = vcmp.lt.s32.totalorder %v2771, 2
        %vm2773 = vcmp.eq.s32.totalorder %v2771, 0
        %v2774 = vxor.u32 %v2768, 2147483648
        %v2775 = vsel %vm2773, %v2767, %v2774
        %vm2776 = vcmp.eq.s32.totalorder %v2771, 2
        %v2777 = vxor.u32 %v2767, 2147483648
        %v2778 = vsel %vm2776, %v2777, %v2768
        %v2779 = vsel %vm2772, %v2775, %v2778
        %v2780 = vsel %vm2769, nan, %v2779
        %v2781 = vand.u32 2147483647, %v2347
        %vm2782 = vcmp.le.f32.partialorder %v2781, 0.7853982
        %vm2783 = vcmp.lt.s32.totalorder %v2347, 0
        %v2784 = vand.u32 %v2347, 2139095040
        %v2785 = vshrl.u32 %v2784, 23
        %v2786 = vsub.s32 %v2785, 127
        %v2787 = vand.u32 2147483647, %v2347
        %v2788 = vand.u32 %v2787, 8388607
        %v2789 = vor.u32 %v2788, 8388608
        %v2790 = vsub.s32 0, %v2789
        %v2791 = vadd.s32 %v2786, 1
        %vm2792 = vcmp.gt.s32.totalorder %v2791, 0
        %v2793 = vsel %vm2792, %v2791, 0
        %v2794 = vshrl.u32 %v2793, 5
        %v2795 = vand.u32 %v2793, 31
        %v2796 = vsub.s32 32, %v2795
        %v2797 = vshrl.u32 683565275, %v2796
        %v2798 = vshll.u32 683565275, %v2795
        %v2799 = vshrl.u32 2475754826, %v2796
        %v2800 = vor.u32 %v2798, %v2799
        %v2801 = vshll.u32 2475754826, %v2795
        %v2802 = vshrl.u32 2131351028, %v2796
        %v2803 = vor.u32 %v2801, %v2802
        %v2804 = vshll.u32 2131351028, %v2795
        %v2805 = vshrl.u32 2102212464, %v2796
        %v2806 = vor.u32 %v2804, %v2805
        %v2807 = vshll.u32 2102212464, %v2795
        %v2808 = vshrl.u32 920167782, %v2796
        %v2809 = vor.u32 %v2807, %v2808
        %v2810 = vshll.u32 920167782, %v2795
        %v2811 = vshrl.u32 1326507024, %v2796
        %v2812 = vor.u32 %v2810, %v2811
        %vm2813 = vcmp.lt.s32.totalorder %v2794, 1
        %vm2814 = vcmp.lt.s32.totalorder %v2794, 2
        %vm2815 = vcmp.lt.s32.totalorder %v2794, 3
        %vm2816 = vcmp.lt.s32.totalorder %v2794, 4
        %v2817 = vsel %vm2813, %v2797, %v2800
        %v2818 = vsel %vm2816, %v2806, 2102212464
        %v2819 = vsel %vm2815, %v2803, %v2818
        %v2820 = vsel %vm2814, %v2817, %v2819
        %v2821 = vsel %vm2813, %v2800, %v2803
        %v2822 = vsel %vm2816, %v2809, 920167782
        %v2823 = vsel %vm2815, %v2806, %v2822
        %v2824 = vsel %vm2814, %v2821, %v2823
        %v2825 = vsel %vm2813, %v2803, %v2806
        %v2826 = vsel %vm2816, %v2812, 1326507024
        %v2827 = vsel %vm2815, %v2809, %v2826
        %v2828 = vsel %vm2814, %v2825, %v2827
        %v2829 = vshll.u32 %v2789, 8
        %v2830 = vmul.u32.u64.compose %v2829, %v2828
        %v2831 = vextract.low.u32 %v2830
        %v2832 = vextract.high.u32 %v2830
        %v2833 = vmul.u32.u64.compose %v2829, %v2824
        %v2834 = vextract.low.u32 %v2833
        %v2835 = vextract.high.u32 %v2833
        %v2836 = vmul.u32 %v2829, %v2820
        %v2837 = vadd.s32 %v2832, %v2834
        %vm2838 = vc.u32 %v2832, %v2834
        %v2839 = vadd.s32 %v2835, 1
        %v2840 = vsel %vm2838, %v2839, %v2835
        %v2841 = vadd.s32 %v2836, %v2840
        %v2842 = vadd.s32 %v2841, 536870912
        %v2843 = vshrl.u32 %v2842, 30
        %v2844 = vshll.u32 %v2843, 30
        %v2845 = vsub.s32 %v2841, %v2844
        %vm2846 = vcmp.lt.s32.totalorder %v2845, 0
        %v2847 = vsub.s32 0, %v2845
        %v2848 = vsel %vm2846, %v2847, %v2845
        %v2849 = vclz %v2848
        %v2850 = vsub.s32 %v2849, 2
        %vm2851 = vcmp.gt.s32.totalorder 0, %v2850
        %v2852 = vsel %vm2851, 0, %v2850
        %v2853 = vsub.s32 32, %v2852
        %v2854 = vshll.u32 %v2845, %v2852
        %v2855 = vshrl.u32 %v2837, %v2853
        %v2856 = vor.u32 %v2854, %v2855
        %v2857 = vsub.s32 4294967266, %v2852
        %v2858 = vadd.s32 %v2857, 127
        %v2859 = vshll.u32 %v2858, 23
        %v2860 = vor.u32 4788187, %v2859
        %v2861 = vand.u32 2147483647, %v2860
        %v2863 = vcvt.s32.f32 %v2856
        %v2864 = vmul.f32 %v2863, %v2861
        %v2865 = vxor.u32 %v2864, 2147483648
        %v2866 = vsel %vm2783, %v2865, %v2864
        %v2867 = vsub.s32 4, %v2843
        %v2868 = vsel %vm2783, %v2867, %v2843
        %v2869 = vsel %vm2782, %v2347, %v2866
        %v2870 = vsel %vm2782, 0, %v2868
        %v2871 = vcosq.f32.pop %v2869
        %v2872 = vsinq.f32.pop %v2869
        %vm2873 = vweird.f32 %v2347
        %v2874 = vadd.s32 %v2870, 3
        %v2875 = vand.u32 %v2874, 3
        %vm2876 = vcmp.lt.s32.totalorder %v2875, 2
        %vm2877 = vcmp.eq.s32.totalorder %v2875, 0
        %v2878 = vxor.u32 %v2872, 2147483648
        %v2879 = vsel %vm2877, %v2871, %v2878
        %vm2880 = vcmp.eq.s32.totalorder %v2875, 2
        %v2881 = vxor.u32 %v2871, 2147483648
        %v2882 = vsel %vm2880, %v2881, %v2872
        %v2883 = vsel %vm2876, %v2879, %v2882
        %v2884 = vsel %vm2873, nan, %v2883
        %v2885 = vand.u32 2147483647, %v2352
        %vm2886 = vcmp.le.f32.partialorder %v2885, 0.7853982
        %vm2887 = vcmp.lt.s32.totalorder %v2352, 0
        %v2888 = vand.u32 %v2352, 2139095040
        %v2889 = vshrl.u32 %v2888, 23
        %v2890 = vsub.s32 %v2889, 127
        %v2891 = vand.u32 2147483647, %v2352
        %v2892 = vand.u32 %v2891, 8388607
        %v2893 = vor.u32 %v2892, 8388608
        %v2894 = vsub.s32 0, %v2893
        %v2895 = vadd.s32 %v2890, 1
        %vm2896 = vcmp.gt.s32.totalorder %v2895, 0
        %v2897 = vsel %vm2896, %v2895, 0
        %v2898 = vshrl.u32 %v2897, 5
        %v2899 = vand.u32 %v2897, 31
        %v2900 = vsub.s32 32, %v2899
        %v2901 = vshrl.u32 683565275, %v2900
        %v2902 = vshll.u32 683565275, %v2899
        %v2903 = vshrl.u32 2475754826, %v2900
        %v2904 = vor.u32 %v2902, %v2903
        %v2905 = vshll.u32 2475754826, %v2899
        %v2906 = vshrl.u32 2131351028, %v2900
        %v2907 = vor.u32 %v2905, %v2906
        %v2908 = vshll.u32 2131351028, %v2899
        %v2909 = vshrl.u32 2102212464, %v2900
        %v2910 = vor.u32 %v2908, %v2909
        %v2911 = vshll.u32 2102212464, %v2899
        %v2912 = vshrl.u32 920167782, %v2900
        %v2913 = vor.u32 %v2911, %v2912
        %v2914 = vshll.u32 920167782, %v2899
        %v2915 = vshrl.u32 1326507024, %v2900
        %v2916 = vor.u32 %v2914, %v2915
        %vm2917 = vcmp.lt.s32.totalorder %v2898, 1
        %vm2918 = vcmp.lt.s32.totalorder %v2898, 2
        %vm2919 = vcmp.lt.s32.totalorder %v2898, 3
        %vm2920 = vcmp.lt.s32.totalorder %v2898, 4
        %v2921 = vsel %vm2917, %v2901, %v2904
        %v2922 = vsel %vm2920, %v2910, 2102212464
        %v2923 = vsel %vm2919, %v2907, %v2922
        %v2924 = vsel %vm2918, %v2921, %v2923
        %v2925 = vsel %vm2917, %v2904, %v2907
        %v2926 = vsel %vm2920, %v2913, 920167782
        %v2927 = vsel %vm2919, %v2910, %v2926
        %v2928 = vsel %vm2918, %v2925, %v2927
        %v2929 = vsel %vm2917, %v2907, %v2910
        %v2930 = vsel %vm2920, %v2916, 1326507024
        %v2931 = vsel %vm2919, %v2913, %v2930
        %v2932 = vsel %vm2918, %v2929, %v2931
        %v2933 = vshll.u32 %v2893, 8
        %v2934 = vmul.u32.u64.compose %v2933, %v2932
        %v2935 = vextract.low.u32 %v2934
        %v2936 = vextract.high.u32 %v2934
        %v2937 = vmul.u32.u64.compose %v2933, %v2928
        %v2938 = vextract.low.u32 %v2937
        %v2939 = vextract.high.u32 %v2937
        %v2940 = vmul.u32 %v2933, %v2924
        %v2941 = vadd.s32 %v2936, %v2938
        %vm2942 = vc.u32 %v2936, %v2938
        %v2943 = vadd.s32 %v2939, 1
        %v2944 = vsel %vm2942, %v2943, %v2939
        %v2945 = vadd.s32 %v2940, %v2944
        %v2946 = vadd.s32 %v2945, 536870912
        %v2947 = vshrl.u32 %v2946, 30
        %v2948 = vshll.u32 %v2947, 30
        %v2949 = vsub.s32 %v2945, %v2948
        %vm2950 = vcmp.lt.s32.totalorder %v2949, 0
        %v2951 = vsub.s32 0, %v2949
        %v2952 = vsel %vm2950, %v2951, %v2949
        %v2953 = vclz %v2952
        %v2954 = vsub.s32 %v2953, 2
        %vm2955 = vcmp.gt.s32.totalorder 0, %v2954
        %v2956 = vsel %vm2955, 0, %v2954
        %v2957 = vsub.s32 32, %v2956
        %v2958 = vshll.u32 %v2949, %v2956
        %v2959 = vshrl.u32 %v2941, %v2957
        %v2960 = vor.u32 %v2958, %v2959
        %v2961 = vsub.s32 4294967266, %v2956
        %v2962 = vadd.s32 %v2961, 127
        %v2963 = vshll.u32 %v2962, 23
        %v2964 = vor.u32 4788187, %v2963
        %v2965 = vand.u32 2147483647, %v2964
        %v2967 = vcvt.s32.f32 %v2960
        %v2968 = vmul.f32 %v2967, %v2965
        %v2969 = vxor.u32 %v2968, 2147483648
        %v2970 = vsel %vm2887, %v2969, %v2968
        %v2971 = vsub.s32 4, %v2947
        %v2972 = vsel %vm2887, %v2971, %v2947
        %v2973 = vsel %vm2886, %v2352, %v2970
        %v2974 = vsel %vm2886, 0, %v2972
        %v2975 = vcosq.f32.pop %v2973
        %v2976 = vsinq.f32.pop %v2973
        %vm2977 = vweird.f32 %v2352
        %v2978 = vadd.s32 %v2974, 3
        %v2979 = vand.u32 %v2978, 3
        %vm2980 = vcmp.lt.s32.totalorder %v2979, 2
        %vm2981 = vcmp.eq.s32.totalorder %v2979, 0
        %v2982 = vxor.u32 %v2976, 2147483648
        %v2983 = vsel %vm2981, %v2975, %v2982
        %vm2984 = vcmp.eq.s32.totalorder %v2979, 2
        %v2985 = vxor.u32 %v2975, 2147483648
        %v2986 = vsel %vm2984, %v2985, %v2976
        %v2987 = vsel %vm2980, %v2983, %v2986
        %v2988 = vsel %vm2977, nan, %v2987
        %v2989 = vand.u32 2147483647, %v2357
        %vm2990 = vcmp.le.f32.partialorder %v2989, 0.7853982
        %vm2991 = vcmp.lt.s32.totalorder %v2357, 0
        %v2992 = vand.u32 %v2357, 2139095040
        %v2993 = vshrl.u32 %v2992, 23
        %v2994 = vsub.s32 %v2993, 127
        %v2995 = vand.u32 2147483647, %v2357
        %v2996 = vand.u32 %v2995, 8388607
        %v2997 = vor.u32 %v2996, 8388608
        %v2998 = vsub.s32 0, %v2997
        %v2999 = vadd.s32 %v2994, 1
        %vm3000 = vcmp.gt.s32.totalorder %v2999, 0
        %v3001 = vsel %vm3000, %v2999, 0
        %v3002 = vshrl.u32 %v3001, 5
        %v3003 = vand.u32 %v3001, 31
        %v3004 = vsub.s32 32, %v3003
        %v3005 = vshrl.u32 683565275, %v3004
        %v3006 = vshll.u32 683565275, %v3003
        %v3007 = vshrl.u32 2475754826, %v3004
        %v3008 = vor.u32 %v3006, %v3007
        %v3009 = vshll.u32 2475754826, %v3003
        %v3010 = vshrl.u32 2131351028, %v3004
        %v3011 = vor.u32 %v3009, %v3010
        %v3012 = vshll.u32 2131351028, %v3003
        %v3013 = vshrl.u32 2102212464, %v3004
        %v3014 = vor.u32 %v3012, %v3013
        %v3015 = vshll.u32 2102212464, %v3003
        %v3016 = vshrl.u32 920167782, %v3004
        %v3017 = vor.u32 %v3015, %v3016
        %v3018 = vshll.u32 920167782, %v3003
        %v3019 = vshrl.u32 1326507024, %v3004
        %v3020 = vor.u32 %v3018, %v3019
        %vm3021 = vcmp.lt.s32.totalorder %v3002, 1
        %vm3022 = vcmp.lt.s32.totalorder %v3002, 2
        %vm3023 = vcmp.lt.s32.totalorder %v3002, 3
        %vm3024 = vcmp.lt.s32.totalorder %v3002, 4
        %v3025 = vsel %vm3021, %v3005, %v3008
        %v3026 = vsel %vm3024, %v3014, 2102212464
        %v3027 = vsel %vm3023, %v3011, %v3026
        %v3028 = vsel %vm3022, %v3025, %v3027
        %v3029 = vsel %vm3021, %v3008, %v3011
        %v3030 = vsel %vm3024, %v3017, 920167782
        %v3031 = vsel %vm3023, %v3014, %v3030
        %v3032 = vsel %vm3022, %v3029, %v3031
        %v3033 = vsel %vm3021, %v3011, %v3014
        %v3034 = vsel %vm3024, %v3020, 1326507024
        %v3035 = vsel %vm3023, %v3017, %v3034
        %v3036 = vsel %vm3022, %v3033, %v3035
        %v3037 = vshll.u32 %v2997, 8
        %v3038 = vmul.u32.u64.compose %v3037, %v3036
        %v3039 = vextract.low.u32 %v3038
        %v3040 = vextract.high.u32 %v3038
        %v3041 = vmul.u32.u64.compose %v3037, %v3032
        %v3042 = vextract.low.u32 %v3041
        %v3043 = vextract.high.u32 %v3041
        %v3044 = vmul.u32 %v3037, %v3028
        %v3045 = vadd.s32 %v3040, %v3042
        %vm3046 = vc.u32 %v3040, %v3042
        %v3047 = vadd.s32 %v3043, 1
        %v3048 = vsel %vm3046, %v3047, %v3043
        %v3049 = vadd.s32 %v3044, %v3048
        %v3050 = vadd.s32 %v3049, 536870912
        %v3051 = vshrl.u32 %v3050, 30
        %v3052 = vshll.u32 %v3051, 30
        %v3053 = vsub.s32 %v3049, %v3052
        %vm3054 = vcmp.lt.s32.totalorder %v3053, 0
        %v3055 = vsub.s32 0, %v3053
        %v3056 = vsel %vm3054, %v3055, %v3053
        %v3057 = vclz %v3056
        %v3058 = vsub.s32 %v3057, 2
        %vm3059 = vcmp.gt.s32.totalorder 0, %v3058
        %v3060 = vsel %vm3059, 0, %v3058
        %v3061 = vsub.s32 32, %v3060
        %v3062 = vshll.u32 %v3053, %v3060
        %v3063 = vshrl.u32 %v3045, %v3061
        %v3064 = vor.u32 %v3062, %v3063
        %v3065 = vsub.s32 4294967266, %v3060
        %v3066 = vadd.s32 %v3065, 127
        %v3067 = vshll.u32 %v3066, 23
        %v3068 = vor.u32 4788187, %v3067
        %v3069 = vand.u32 2147483647, %v3068
        %v3071 = vcvt.s32.f32 %v3064
        %v3072 = vmul.f32 %v3071, %v3069
        %v3073 = vxor.u32 %v3072, 2147483648
        %v3074 = vsel %vm2991, %v3073, %v3072
        %v3075 = vsub.s32 4, %v3051
        %v3076 = vsel %vm2991, %v3075, %v3051
        %v3077 = vsel %vm2990, %v2357, %v3074
        %v3078 = vsel %vm2990, 0, %v3076
        %v3079 = vcosq.f32.pop %v3077
        %v3080 = vsinq.f32.pop %v3077
        %vm3081 = vweird.f32 %v2357
        %v3082 = vadd.s32 %v3078, 3
        %v3083 = vand.u32 %v3082, 3
        %vm3084 = vcmp.lt.s32.totalorder %v3083, 2
        %vm3085 = vcmp.eq.s32.totalorder %v3083, 0
        %v3086 = vxor.u32 %v3080, 2147483648
        %v3087 = vsel %vm3085, %v3079, %v3086
        %vm3088 = vcmp.eq.s32.totalorder %v3083, 2
        %v3089 = vxor.u32 %v3079, 2147483648
        %v3090 = vsel %vm3088, %v3089, %v3080
        %v3091 = vsel %vm3084, %v3087, %v3090
        %v3092 = vsel %vm3081, nan, %v3091
        %v3093 = vand.u32 2147483647, %v2362
        %vm3094 = vcmp.le.f32.partialorder %v3093, 0.7853982
        %vm3095 = vcmp.lt.s32.totalorder %v2362, 0
        %v3096 = vand.u32 %v2362, 2139095040
        %v3097 = vshrl.u32 %v3096, 23
        %v3098 = vsub.s32 %v3097, 127
        %v3099 = vand.u32 2147483647, %v2362
        %v3100 = vand.u32 %v3099, 8388607
        %v3101 = vor.u32 %v3100, 8388608
        %v3102 = vsub.s32 0, %v3101
        %v3103 = vadd.s32 %v3098, 1
        %vm3104 = vcmp.gt.s32.totalorder %v3103, 0
        %v3105 = vsel %vm3104, %v3103, 0
        %v3106 = vshrl.u32 %v3105, 5
        %v3107 = vand.u32 %v3105, 31
        %v3108 = vsub.s32 32, %v3107
        %v3109 = vshrl.u32 683565275, %v3108
        %v3110 = vshll.u32 683565275, %v3107
        %v3111 = vshrl.u32 2475754826, %v3108
        %v3112 = vor.u32 %v3110, %v3111
        %v3113 = vshll.u32 2475754826, %v3107
        %v3114 = vshrl.u32 2131351028, %v3108
        %v3115 = vor.u32 %v3113, %v3114
        %v3116 = vshll.u32 2131351028, %v3107
        %v3117 = vshrl.u32 2102212464, %v3108
        %v3118 = vor.u32 %v3116, %v3117
        %v3119 = vshll.u32 2102212464, %v3107
        %v3120 = vshrl.u32 920167782, %v3108
        %v3121 = vor.u32 %v3119, %v3120
        %v3122 = vshll.u32 920167782, %v3107
        %v3123 = vshrl.u32 1326507024, %v3108
        %v3124 = vor.u32 %v3122, %v3123
        %vm3125 = vcmp.lt.s32.totalorder %v3106, 1
        %vm3126 = vcmp.lt.s32.totalorder %v3106, 2
        %vm3127 = vcmp.lt.s32.totalorder %v3106, 3
        %vm3128 = vcmp.lt.s32.totalorder %v3106, 4
        %v3129 = vsel %vm3125, %v3109, %v3112
        %v3130 = vsel %vm3128, %v3118, 2102212464
        %v3131 = vsel %vm3127, %v3115, %v3130
        %v3132 = vsel %vm3126, %v3129, %v3131
        %v3133 = vsel %vm3125, %v3112, %v3115
        %v3134 = vsel %vm3128, %v3121, 920167782
        %v3135 = vsel %vm3127, %v3118, %v3134
        %v3136 = vsel %vm3126, %v3133, %v3135
        %v3137 = vsel %vm3125, %v3115, %v3118
        %v3138 = vsel %vm3128, %v3124, 1326507024
        %v3139 = vsel %vm3127, %v3121, %v3138
        %v3140 = vsel %vm3126, %v3137, %v3139
        %v3141 = vshll.u32 %v3101, 8
        %v3142 = vmul.u32.u64.compose %v3141, %v3140
        %v3143 = vextract.low.u32 %v3142
        %v3144 = vextract.high.u32 %v3142
        %v3145 = vmul.u32.u64.compose %v3141, %v3136
        %v3146 = vextract.low.u32 %v3145
        %v3147 = vextract.high.u32 %v3145
        %v3148 = vmul.u32 %v3141, %v3132
        %v3149 = vadd.s32 %v3144, %v3146
        %vm3150 = vc.u32 %v3144, %v3146
        %v3151 = vadd.s32 %v3147, 1
        %v3152 = vsel %vm3150, %v3151, %v3147
        %v3153 = vadd.s32 %v3148, %v3152
        %v3154 = vadd.s32 %v3153, 536870912
        %v3155 = vshrl.u32 %v3154, 30
        %v3156 = vshll.u32 %v3155, 30
        %v3157 = vsub.s32 %v3153, %v3156
        %vm3158 = vcmp.lt.s32.totalorder %v3157, 0
        %v3159 = vsub.s32 0, %v3157
        %v3160 = vsel %vm3158, %v3159, %v3157
        %v3161 = vclz %v3160
        %v3162 = vsub.s32 %v3161, 2
        %vm3163 = vcmp.gt.s32.totalorder 0, %v3162
        %v3164 = vsel %vm3163, 0, %v3162
        %v3165 = vsub.s32 32, %v3164
        %v3166 = vshll.u32 %v3157, %v3164
        %v3167 = vshrl.u32 %v3149, %v3165
        %v3168 = vor.u32 %v3166, %v3167
        %v3169 = vsub.s32 4294967266, %v3164
        %v3170 = vadd.s32 %v3169, 127
        %v3171 = vshll.u32 %v3170, 23
        %v3172 = vor.u32 4788187, %v3171
        %v3173 = vand.u32 2147483647, %v3172
        %v3175 = vcvt.s32.f32 %v3168
        %v3176 = vmul.f32 %v3175, %v3173
        %v3177 = vxor.u32 %v3176, 2147483648
        %v3178 = vsel %vm3095, %v3177, %v3176
        %v3179 = vsub.s32 4, %v3155
        %v3180 = vsel %vm3095, %v3179, %v3155
        %v3181 = vsel %vm3094, %v2362, %v3178
        %v3182 = vsel %vm3094, 0, %v3180
        %v3183 = vcosq.f32.pop %v3181
        %v3184 = vsinq.f32.pop %v3181
        %vm3185 = vweird.f32 %v2362
        %v3186 = vadd.s32 %v3182, 3
        %v3187 = vand.u32 %v3186, 3
        %vm3188 = vcmp.lt.s32.totalorder %v3187, 2
        %vm3189 = vcmp.eq.s32.totalorder %v3187, 0
        %v3190 = vxor.u32 %v3184, 2147483648
        %v3191 = vsel %vm3189, %v3183, %v3190
        %vm3192 = vcmp.eq.s32.totalorder %v3187, 2
        %v3193 = vxor.u32 %v3183, 2147483648
        %v3194 = vsel %vm3192, %v3193, %v3184
        %v3195 = vsel %vm3188, %v3191, %v3194
        %v3196 = vsel %vm3185, nan, %v3195
        %s3197 = scalar_lea.vmem [#allocation2], 256
        %v3198 = vld [vmem:[%s3197] sm:$0xff]
        %v3199 = vld [vmem:[%s3197 + $0x8] sm:$0xff]
        %v3200 = vld [vmem:[%s3197 + $0x10] sm:$0xff]
        %v3201 = vld [vmem:[%s3197 + $0x18] sm:$0xff]
        %v3202 = vld [vmem:[%s3197 + $0x20] sm:$0xff]
        %v3203 = vld [vmem:[%s3197 + $0x28] sm:$0xff]
        %v3204 = vld [vmem:[%s3197 + $0x30] sm:$0xff]
        %v3205 = vld [vmem:[%s3197 + $0x38] sm:$0xff]
        %v3206 = vld [vmem:[%s3197 + $0x40] sm:$0xff]
        %v3207 = vld [vmem:[%s3197 + $0x48] sm:$0xff]
        %v3208 = vld [vmem:[%s3197 + $0x50] sm:$0xff]
        %v3209 = vld [vmem:[%s3197 + $0x58] sm:$0xff]
        %v3210 = vld [vmem:[%s3197 + $0x60] sm:$0xff]
        %v3211 = vld [vmem:[%s3197 + $0x68] sm:$0xff]
        %v3212 = vld [vmem:[%s3197 + $0x70] sm:$0xff]
        %v3213 = vld [vmem:[%s3197 + $0x78] sm:$0xff]
        %s3214 = scalar_lea.vmem %s4, 2
        %v3215 = vld [vmem:[%s3214] sm:$0x1]
        %v3217 = vlaneseq
        %v3218 = vshrl.u32 %v3217, 7
        %v3219 = vsub.s32 0, %v3218
        %v3220 = vrot.slane %v3215, %v3219
        %3222 = vmatprep.subr.mxu0 0.0
        %3223 = vmatpush1.msra.mxu0 %v3198
        %3224 = vmatprep.subr.mxu0 0.0
        %3225 = vmatpush1.msra.mxu0 %v3199
        %3226 = vmatprep.subr.mxu0 0.0
        %3227 = vmatpush1.msra.mxu0 %v3200
        %3228 = vmatprep.subr.mxu0 0.0
        %3229 = vmatpush1.msra.mxu0 %v3201
        %3230 = vmatprep.subr.mxu0 0.0
        %3231 = vmatpush1.msra.mxu0 %v3202
        %3232 = vmatprep.subr.mxu0 0.0
        %3233 = vmatpush1.msra.mxu0 %v3203
        %3234 = vmatprep.subr.mxu0 0.0
        %3235 = vmatpush1.msra.mxu0 %v3204
        %3236 = vmatprep.subr.mxu0 0.0
        %3237 = vmatpush1.msra.mxu0 %v3205
        %3238 = vmatprep.subr.mxu0 0.0
        %3239 = vmatpush1.msra.mxu0 %v3206
        %3240 = vmatprep.subr.mxu0 0.0
        %3241 = vmatpush1.msra.mxu0 %v3207
        %3242 = vmatprep.subr.mxu0 0.0
        %3243 = vmatpush1.msra.mxu0 %v3208
        %3244 = vmatprep.subr.mxu0 0.0
        %3245 = vmatpush1.msra.mxu0 %v3209
        %3246 = vmatprep.subr.mxu0 0.0
        %3247 = vmatpush1.msra.mxu0 %v3210
        %3248 = vmatprep.subr.mxu0 0.0
        %3249 = vmatpush1.msra.mxu0 %v3211
        %3250 = vmatprep.subr.mxu0 0.0
        %3251 = vmatpush1.msra.mxu0 %v3212
        %3252 = vmatprep.subr.mxu0 0.0
        %3253 = vmatpush1.msra.mxu0 %v3213
        %3254 = vmatprep.subr.mxu0 0.0
        %3255 = vmatpush1.msra.mxu0 0.0
        %3256 = vmatprep.subr.mxu0 0.0
        %3257 = vmatpush1.msra.mxu0 0.0
        %3258 = vmatprep.subr.mxu0 0.0
        %3259 = vmatpush1.msra.mxu0 0.0
        %3260 = vmatprep.subr.mxu0 0.0
        %3261 = vmatpush1.msra.mxu0 0.0
        %3262 = vmatprep.subr.mxu0 0.0
        %3263 = vmatpush1.msra.mxu0 0.0
        %3264 = vmatprep.subr.mxu0 0.0
        %3265 = vmatpush1.msra.mxu0 0.0
        %3266 = vmatprep.subr.mxu0 0.0
        %3267 = vmatpush1.msra.mxu0 0.0
        %3268 = vmatprep.subr.mxu0 0.0
        %3269 = vmatpush1.msra.mxu0 0.0
        %3270 = vmatprep.subr.mxu0 0.0
        %3271 = vmatpush1.msra.mxu0 0.0
        %3272 = vmatprep.subr.mxu0 0.0
        %3273 = vmatpush1.msra.mxu0 0.0
        %3274 = vmatprep.subr.mxu0 0.0
        %3275 = vmatpush1.msra.mxu0 0.0
        %3276 = vmatprep.subr.mxu0 0.0
        %3277 = vmatpush1.msra.mxu0 0.0
        %3278 = vmatprep.subr.mxu0 0.0
        %3279 = vmatpush1.msra.mxu0 0.0
        %3280 = vmatprep.subr.mxu0 0.0
        %3281 = vmatpush1.msra.mxu0 0.0
        %3282 = vmatprep.subr.mxu0 0.0
        %3283 = vmatpush1.msra.mxu0 0.0
        %3284 = vmatprep.subr.mxu0 0.0
        %3285 = vmatpush1.msra.mxu0 0.0
        %3286 = vmatprep.mubr.f32.mxu0 0.0
        %3287 = vmatmul.mubr.f32.gmra.mrb[0].mxu0 %v2468
        %v3288 = vpop.f32.mrb[0].mxu0
        %v3289 = vadd.f32 %v3220, %v3288
        %v3290 = vpop.f32.mrb[0].mxu0
        %3291 = vmatprep.mubr.f32.mxu0 0.0
        %3292 = vmatmul.mubr.f32.gmra.mrb[0].mxu0 %v2572
        %v3293 = vpop.f32.mrb[0].mxu0
        %v3294 = vadd.f32 %v3220, %v3293
        %v3295 = vpop.f32.mrb[0].mxu0
        %3296 = vmatprep.mubr.f32.mxu0 0.0
        %3297 = vmatmul.mubr.f32.gmra.mrb[0].mxu0 %v2676
        %v3298 = vpop.f32.mrb[0].mxu0
        %v3299 = vadd.f32 %v3220, %v3298
        %v3300 = vpop.f32.mrb[0].mxu0
        %3301 = vmatprep.mubr.f32.mxu0 0.0
        %3302 = vmatmul.mubr.f32.gmra.mrb[0].mxu0 %v2780
        %v3303 = vpop.f32.mrb[0].mxu0
        %v3304 = vadd.f32 %v3220, %v3303
        %v3305 = vpop.f32.mrb[0].mxu0
        %3306 = vmatprep.mubr.f32.mxu0 0.0
        %3307 = vmatmul.mubr.f32.gmra.mrb[0].mxu0 %v2884
        %v3308 = vpop.f32.mrb[0].mxu0
        %v3309 = vadd.f32 %v3220, %v3308
        %v3310 = vpop.f32.mrb[0].mxu0
        %3311 = vmatprep.mubr.f32.mxu0 0.0
        %3312 = vmatmul.mubr.f32.gmra.mrb[0].mxu0 %v2988
        %v3313 = vpop.f32.mrb[0].mxu0
        %v3314 = vadd.f32 %v3220, %v3313
        %v3315 = vpop.f32.mrb[0].mxu0
        %3316 = vmatprep.mubr.f32.mxu0 0.0
        %3317 = vmatmul.mubr.f32.gmra.mrb[0].mxu0 %v3092
        %v3318 = vpop.f32.mrb[0].mxu0
        %v3319 = vadd.f32 %v3220, %v3318
        %v3320 = vpop.f32.mrb[0].mxu0
        %3321 = vmatprep.mubr.f32.mxu0 0.0
        %3322 = vmatmul.mubr.f32.gmra.mrb[0].mxu0 %v3196
        %v3323 = vpop.f32.mrb[0].mxu0
        %v3324 = vadd.f32 %v3220, %v3323
        %v3325 = vpop.f32.mrb[0].mxu0
        %3326 = vdwg.mxu0
        %v3327 = vand.u32 2147483647, %v3289
        %vm3328 = vcmp.le.f32.partialorder %v3327, 0.7853982
        %vm3329 = vcmp.lt.s32.totalorder %v3289, 0
        %v3330 = vand.u32 %v3289, 2139095040
        %v3331 = vshrl.u32 %v3330, 23
        %v3332 = vsub.s32 %v3331, 127
        %v3333 = vand.u32 2147483647, %v3289
        %v3334 = vand.u32 %v3333, 8388607
        %v3335 = vor.u32 %v3334, 8388608
        %v3336 = vsub.s32 0, %v3335
        %v3337 = vadd.s32 %v3332, 1
        %vm3338 = vcmp.gt.s32.totalorder %v3337, 0
        %v3339 = vsel %vm3338, %v3337, 0
        %v3340 = vshrl.u32 %v3339, 5
        %v3341 = vand.u32 %v3339, 31
        %v3342 = vsub.s32 32, %v3341
        %v3343 = vshrl.u32 683565275, %v3342
        %v3344 = vshll.u32 683565275, %v3341
        %v3345 = vshrl.u32 2475754826, %v3342
        %v3346 = vor.u32 %v3344, %v3345
        %v3347 = vshll.u32 2475754826, %v3341
        %v3348 = vshrl.u32 2131351028, %v3342
        %v3349 = vor.u32 %v3347, %v3348
        %v3350 = vshll.u32 2131351028, %v3341
        %v3351 = vshrl.u32 2102212464, %v3342
        %v3352 = vor.u32 %v3350, %v3351
        %v3353 = vshll.u32 2102212464, %v3341
        %v3354 = vshrl.u32 920167782, %v3342
        %v3355 = vor.u32 %v3353, %v3354
        %v3356 = vshll.u32 920167782, %v3341
        %v3357 = vshrl.u32 1326507024, %v3342
        %v3358 = vor.u32 %v3356, %v3357
        %vm3359 = vcmp.lt.s32.totalorder %v3340, 1
        %vm3360 = vcmp.lt.s32.totalorder %v3340, 2
        %vm3361 = vcmp.lt.s32.totalorder %v3340, 3
        %vm3362 = vcmp.lt.s32.totalorder %v3340, 4
        %v3363 = vsel %vm3359, %v3343, %v3346
        %v3364 = vsel %vm3362, %v3352, 2102212464
        %v3365 = vsel %vm3361, %v3349, %v3364
        %v3366 = vsel %vm3360, %v3363, %v3365
        %v3367 = vsel %vm3359, %v3346, %v3349
        %v3368 = vsel %vm3362, %v3355, 920167782
        %v3369 = vsel %vm3361, %v3352, %v3368
        %v3370 = vsel %vm3360, %v3367, %v3369
        %v3371 = vsel %vm3359, %v3349, %v3352
        %v3372 = vsel %vm3362, %v3358, 1326507024
        %v3373 = vsel %vm3361, %v3355, %v3372
        %v3374 = vsel %vm3360, %v3371, %v3373
        %v3375 = vshll.u32 %v3335, 8
        %v3376 = vmul.u32.u64.compose %v3375, %v3374
        %v3377 = vextract.low.u32 %v3376
        %v3378 = vextract.high.u32 %v3376
        %v3379 = vmul.u32.u64.compose %v3375, %v3370
        %v3380 = vextract.low.u32 %v3379
        %v3381 = vextract.high.u32 %v3379
        %v3382 = vmul.u32 %v3375, %v3366
        %v3383 = vadd.s32 %v3378, %v3380
        %vm3384 = vc.u32 %v3378, %v3380
        %v3385 = vadd.s32 %v3381, 1
        %v3386 = vsel %vm3384, %v3385, %v3381
        %v3387 = vadd.s32 %v3382, %v3386
        %v3388 = vadd.s32 %v3387, 536870912
        %v3389 = vshrl.u32 %v3388, 30
        %v3390 = vshll.u32 %v3389, 30
        %v3391 = vsub.s32 %v3387, %v3390
        %vm3392 = vcmp.lt.s32.totalorder %v3391, 0
        %v3393 = vsub.s32 0, %v3391
        %v3394 = vsel %vm3392, %v3393, %v3391
        %v3395 = vclz %v3394
        %v3396 = vsub.s32 %v3395, 2
        %vm3397 = vcmp.gt.s32.totalorder 0, %v3396
        %v3398 = vsel %vm3397, 0, %v3396
        %v3399 = vsub.s32 32, %v3398
        %v3400 = vshll.u32 %v3391, %v3398
        %v3401 = vshrl.u32 %v3383, %v3399
        %v3402 = vor.u32 %v3400, %v3401
        %v3403 = vsub.s32 4294967266, %v3398
        %v3404 = vadd.s32 %v3403, 127
        %v3405 = vshll.u32 %v3404, 23
        %v3406 = vor.u32 4788187, %v3405
        %v3407 = vand.u32 2147483647, %v3406
        %v3409 = vcvt.s32.f32 %v3402
        %v3410 = vmul.f32 %v3409, %v3407
        %v3411 = vxor.u32 %v3410, 2147483648
        %v3412 = vsel %vm3329, %v3411, %v3410
        %v3413 = vsub.s32 4, %v3389
        %v3414 = vsel %vm3329, %v3413, %v3389
        %v3415 = vsel %vm3328, %v3289, %v3412
        %v3416 = vsel %vm3328, 0, %v3414
        %v3417 = vcosq.f32.pop %v3415
        %v3418 = vsinq.f32.pop %v3415
        %vm3419 = vweird.f32 %v3289
        %v3420 = vadd.s32 %v3416, 3
        %v3421 = vand.u32 %v3420, 3
        %vm3422 = vcmp.lt.s32.totalorder %v3421, 2
        %vm3423 = vcmp.eq.s32.totalorder %v3421, 0
        %v3424 = vxor.u32 %v3418, 2147483648
        %v3425 = vsel %vm3423, %v3417, %v3424
        %vm3426 = vcmp.eq.s32.totalorder %v3421, 2
        %v3427 = vxor.u32 %v3417, 2147483648
        %v3428 = vsel %vm3426, %v3427, %v3418
        %v3429 = vsel %vm3422, %v3425, %v3428
        %v3430 = vsel %vm3419, nan, %v3429
        %v3431 = vand.u32 2147483647, %v3294
        %vm3432 = vcmp.le.f32.partialorder %v3431, 0.7853982
        %vm3433 = vcmp.lt.s32.totalorder %v3294, 0
        %v3434 = vand.u32 %v3294, 2139095040
        %v3435 = vshrl.u32 %v3434, 23
        %v3436 = vsub.s32 %v3435, 127
        %v3437 = vand.u32 2147483647, %v3294
        %v3438 = vand.u32 %v3437, 8388607
        %v3439 = vor.u32 %v3438, 8388608
        %v3440 = vsub.s32 0, %v3439
        %v3441 = vadd.s32 %v3436, 1
        %vm3442 = vcmp.gt.s32.totalorder %v3441, 0
        %v3443 = vsel %vm3442, %v3441, 0
        %v3444 = vshrl.u32 %v3443, 5
        %v3445 = vand.u32 %v3443, 31
        %v3446 = vsub.s32 32, %v3445
        %v3447 = vshrl.u32 683565275, %v3446
        %v3448 = vshll.u32 683565275, %v3445
        %v3449 = vshrl.u32 2475754826, %v3446
        %v3450 = vor.u32 %v3448, %v3449
        %v3451 = vshll.u32 2475754826, %v3445
        %v3452 = vshrl.u32 2131351028, %v3446
        %v3453 = vor.u32 %v3451, %v3452
        %v3454 = vshll.u32 2131351028, %v3445
        %v3455 = vshrl.u32 2102212464, %v3446
        %v3456 = vor.u32 %v3454, %v3455
        %v3457 = vshll.u32 2102212464, %v3445
        %v3458 = vshrl.u32 920167782, %v3446
        %v3459 = vor.u32 %v3457, %v3458
        %v3460 = vshll.u32 920167782, %v3445
        %v3461 = vshrl.u32 1326507024, %v3446
        %v3462 = vor.u32 %v3460, %v3461
        %vm3463 = vcmp.lt.s32.totalorder %v3444, 1
        %vm3464 = vcmp.lt.s32.totalorder %v3444, 2
        %vm3465 = vcmp.lt.s32.totalorder %v3444, 3
        %vm3466 = vcmp.lt.s32.totalorder %v3444, 4
        %v3467 = vsel %vm3463, %v3447, %v3450
        %v3468 = vsel %vm3466, %v3456, 2102212464
        %v3469 = vsel %vm3465, %v3453, %v3468
        %v3470 = vsel %vm3464, %v3467, %v3469
        %v3471 = vsel %vm3463, %v3450, %v3453
        %v3472 = vsel %vm3466, %v3459, 920167782
        %v3473 = vsel %vm3465, %v3456, %v3472
        %v3474 = vsel %vm3464, %v3471, %v3473
        %v3475 = vsel %vm3463, %v3453, %v3456
        %v3476 = vsel %vm3466, %v3462, 1326507024
        %v3477 = vsel %vm3465, %v3459, %v3476
        %v3478 = vsel %vm3464, %v3475, %v3477
        %v3479 = vshll.u32 %v3439, 8
        %v3480 = vmul.u32.u64.compose %v3479, %v3478
        %v3481 = vextract.low.u32 %v3480
        %v3482 = vextract.high.u32 %v3480
        %v3483 = vmul.u32.u64.compose %v3479, %v3474
        %v3484 = vextract.low.u32 %v3483
        %v3485 = vextract.high.u32 %v3483
        %v3486 = vmul.u32 %v3479, %v3470
        %v3487 = vadd.s32 %v3482, %v3484
        %vm3488 = vc.u32 %v3482, %v3484
        %v3489 = vadd.s32 %v3485, 1
        %v3490 = vsel %vm3488, %v3489, %v3485
        %v3491 = vadd.s32 %v3486, %v3490
        %v3492 = vadd.s32 %v3491, 536870912
        %v3493 = vshrl.u32 %v3492, 30
        %v3494 = vshll.u32 %v3493, 30
        %v3495 = vsub.s32 %v3491, %v3494
        %vm3496 = vcmp.lt.s32.totalorder %v3495, 0
        %v3497 = vsub.s32 0, %v3495
        %v3498 = vsel %vm3496, %v3497, %v3495
        %v3499 = vclz %v3498
        %v3500 = vsub.s32 %v3499, 2
        %vm3501 = vcmp.gt.s32.totalorder 0, %v3500
        %v3502 = vsel %vm3501, 0, %v3500
        %v3503 = vsub.s32 32, %v3502
        %v3504 = vshll.u32 %v3495, %v3502
        %v3505 = vshrl.u32 %v3487, %v3503
        %v3506 = vor.u32 %v3504, %v3505
        %v3507 = vsub.s32 4294967266, %v3502
        %v3508 = vadd.s32 %v3507, 127
        %v3509 = vshll.u32 %v3508, 23
        %v3510 = vor.u32 4788187, %v3509
        %v3511 = vand.u32 2147483647, %v3510
        %v3513 = vcvt.s32.f32 %v3506
        %v3514 = vmul.f32 %v3513, %v3511
        %v3515 = vxor.u32 %v3514, 2147483648
        %v3516 = vsel %vm3433, %v3515, %v3514
        %v3517 = vsub.s32 4, %v3493
        %v3518 = vsel %vm3433, %v3517, %v3493
        %v3519 = vsel %vm3432, %v3294, %v3516
        %v3520 = vsel %vm3432, 0, %v3518
        %v3521 = vcosq.f32.pop %v3519
        %v3522 = vsinq.f32.pop %v3519
        %vm3523 = vweird.f32 %v3294
        %v3524 = vadd.s32 %v3520, 3
        %v3525 = vand.u32 %v3524, 3
        %vm3526 = vcmp.lt.s32.totalorder %v3525, 2
        %vm3527 = vcmp.eq.s32.totalorder %v3525, 0
        %v3528 = vxor.u32 %v3522, 2147483648
        %v3529 = vsel %vm3527, %v3521, %v3528
        %vm3530 = vcmp.eq.s32.totalorder %v3525, 2
        %v3531 = vxor.u32 %v3521, 2147483648
        %v3532 = vsel %vm3530, %v3531, %v3522
        %v3533 = vsel %vm3526, %v3529, %v3532
        %v3534 = vsel %vm3523, nan, %v3533
        %v3535 = vand.u32 2147483647, %v3299
        %vm3536 = vcmp.le.f32.partialorder %v3535, 0.7853982
        %vm3537 = vcmp.lt.s32.totalorder %v3299, 0
        %v3538 = vand.u32 %v3299, 2139095040
        %v3539 = vshrl.u32 %v3538, 23
        %v3540 = vsub.s32 %v3539, 127
        %v3541 = vand.u32 2147483647, %v3299
        %v3542 = vand.u32 %v3541, 8388607
        %v3543 = vor.u32 %v3542, 8388608
        %v3544 = vsub.s32 0, %v3543
        %v3545 = vadd.s32 %v3540, 1
        %vm3546 = vcmp.gt.s32.totalorder %v3545, 0
        %v3547 = vsel %vm3546, %v3545, 0
        %v3548 = vshrl.u32 %v3547, 5
        %v3549 = vand.u32 %v3547, 31
        %v3550 = vsub.s32 32, %v3549
        %v3551 = vshrl.u32 683565275, %v3550
        %v3552 = vshll.u32 683565275, %v3549
        %v3553 = vshrl.u32 2475754826, %v3550
        %v3554 = vor.u32 %v3552, %v3553
        %v3555 = vshll.u32 2475754826, %v3549
        %v3556 = vshrl.u32 2131351028, %v3550
        %v3557 = vor.u32 %v3555, %v3556
        %v3558 = vshll.u32 2131351028, %v3549
        %v3559 = vshrl.u32 2102212464, %v3550
        %v3560 = vor.u32 %v3558, %v3559
        %v3561 = vshll.u32 2102212464, %v3549
        %v3562 = vshrl.u32 920167782, %v3550
        %v3563 = vor.u32 %v3561, %v3562
        %v3564 = vshll.u32 920167782, %v3549
        %v3565 = vshrl.u32 1326507024, %v3550
        %v3566 = vor.u32 %v3564, %v3565
        %vm3567 = vcmp.lt.s32.totalorder %v3548, 1
        %vm3568 = vcmp.lt.s32.totalorder %v3548, 2
        %vm3569 = vcmp.lt.s32.totalorder %v3548, 3
        %vm3570 = vcmp.lt.s32.totalorder %v3548, 4
        %v3571 = vsel %vm3567, %v3551, %v3554
        %v3572 = vsel %vm3570, %v3560, 2102212464
        %v3573 = vsel %vm3569, %v3557, %v3572
        %v3574 = vsel %vm3568, %v3571, %v3573
        %v3575 = vsel %vm3567, %v3554, %v3557
        %v3576 = vsel %vm3570, %v3563, 920167782
        %v3577 = vsel %vm3569, %v3560, %v3576
        %v3578 = vsel %vm3568, %v3575, %v3577
        %v3579 = vsel %vm3567, %v3557, %v3560
        %v3580 = vsel %vm3570, %v3566, 1326507024
        %v3581 = vsel %vm3569, %v3563, %v3580
        %v3582 = vsel %vm3568, %v3579, %v3581
        %v3583 = vshll.u32 %v3543, 8
        %v3584 = vmul.u32.u64.compose %v3583, %v3582
        %v3585 = vextract.low.u32 %v3584
        %v3586 = vextract.high.u32 %v3584
        %v3587 = vmul.u32.u64.compose %v3583, %v3578
        %v3588 = vextract.low.u32 %v3587
        %v3589 = vextract.high.u32 %v3587
        %v3590 = vmul.u32 %v3583, %v3574
        %v3591 = vadd.s32 %v3586, %v3588
        %vm3592 = vc.u32 %v3586, %v3588
        %v3593 = vadd.s32 %v3589, 1
        %v3594 = vsel %vm3592, %v3593, %v3589
        %v3595 = vadd.s32 %v3590, %v3594
        %v3596 = vadd.s32 %v3595, 536870912
        %v3597 = vshrl.u32 %v3596, 30
        %v3598 = vshll.u32 %v3597, 30
        %v3599 = vsub.s32 %v3595, %v3598
        %vm3600 = vcmp.lt.s32.totalorder %v3599, 0
        %v3601 = vsub.s32 0, %v3599
        %v3602 = vsel %vm3600, %v3601, %v3599
        %v3603 = vclz %v3602
        %v3604 = vsub.s32 %v3603, 2
        %vm3605 = vcmp.gt.s32.totalorder 0, %v3604
        %v3606 = vsel %vm3605, 0, %v3604
        %v3607 = vsub.s32 32, %v3606
        %v3608 = vshll.u32 %v3599, %v3606
        %v3609 = vshrl.u32 %v3591, %v3607
        %v3610 = vor.u32 %v3608, %v3609
        %v3611 = vsub.s32 4294967266, %v3606
        %v3612 = vadd.s32 %v3611, 127
        %v3613 = vshll.u32 %v3612, 23
        %v3614 = vor.u32 4788187, %v3613
        %v3615 = vand.u32 2147483647, %v3614
        %v3617 = vcvt.s32.f32 %v3610
        %v3618 = vmul.f32 %v3617, %v3615
        %v3619 = vxor.u32 %v3618, 2147483648
        %v3620 = vsel %vm3537, %v3619, %v3618
        %v3621 = vsub.s32 4, %v3597
        %v3622 = vsel %vm3537, %v3621, %v3597
        %v3623 = vsel %vm3536, %v3299, %v3620
        %v3624 = vsel %vm3536, 0, %v3622
        %v3625 = vcosq.f32.pop %v3623
        %v3626 = vsinq.f32.pop %v3623
        %vm3627 = vweird.f32 %v3299
        %v3628 = vadd.s32 %v3624, 3
        %v3629 = vand.u32 %v3628, 3
        %vm3630 = vcmp.lt.s32.totalorder %v3629, 2
        %vm3631 = vcmp.eq.s32.totalorder %v3629, 0
        %v3632 = vxor.u32 %v3626, 2147483648
        %v3633 = vsel %vm3631, %v3625, %v3632
        %vm3634 = vcmp.eq.s32.totalorder %v3629, 2
        %v3635 = vxor.u32 %v3625, 2147483648
        %v3636 = vsel %vm3634, %v3635, %v3626
        %v3637 = vsel %vm3630, %v3633, %v3636
        %v3638 = vsel %vm3627, nan, %v3637
        %v3639 = vand.u32 2147483647, %v3304
        %vm3640 = vcmp.le.f32.partialorder %v3639, 0.7853982
        %vm3641 = vcmp.lt.s32.totalorder %v3304, 0
        %v3642 = vand.u32 %v3304, 2139095040
        %v3643 = vshrl.u32 %v3642, 23
        %v3644 = vsub.s32 %v3643, 127
        %v3645 = vand.u32 2147483647, %v3304
        %v3646 = vand.u32 %v3645, 8388607
        %v3647 = vor.u32 %v3646, 8388608
        %v3648 = vsub.s32 0, %v3647
        %v3649 = vadd.s32 %v3644, 1
        %vm3650 = vcmp.gt.s32.totalorder %v3649, 0
        %v3651 = vsel %vm3650, %v3649, 0
        %v3652 = vshrl.u32 %v3651, 5
        %v3653 = vand.u32 %v3651, 31
        %v3654 = vsub.s32 32, %v3653
        %v3655 = vshrl.u32 683565275, %v3654
        %v3656 = vshll.u32 683565275, %v3653
        %v3657 = vshrl.u32 2475754826, %v3654
        %v3658 = vor.u32 %v3656, %v3657
        %v3659 = vshll.u32 2475754826, %v3653
        %v3660 = vshrl.u32 2131351028, %v3654
        %v3661 = vor.u32 %v3659, %v3660
        %v3662 = vshll.u32 2131351028, %v3653
        %v3663 = vshrl.u32 2102212464, %v3654
        %v3664 = vor.u32 %v3662, %v3663
        %v3665 = vshll.u32 2102212464, %v3653
        %v3666 = vshrl.u32 920167782, %v3654
        %v3667 = vor.u32 %v3665, %v3666
        %v3668 = vshll.u32 920167782, %v3653
        %v3669 = vshrl.u32 1326507024, %v3654
        %v3670 = vor.u32 %v3668, %v3669
        %vm3671 = vcmp.lt.s32.totalorder %v3652, 1
        %vm3672 = vcmp.lt.s32.totalorder %v3652, 2
        %vm3673 = vcmp.lt.s32.totalorder %v3652, 3
        %vm3674 = vcmp.lt.s32.totalorder %v3652, 4
        %v3675 = vsel %vm3671, %v3655, %v3658
        %v3676 = vsel %vm3674, %v3664, 2102212464
        %v3677 = vsel %vm3673, %v3661, %v3676
        %v3678 = vsel %vm3672, %v3675, %v3677
        %v3679 = vsel %vm3671, %v3658, %v3661
        %v3680 = vsel %vm3674, %v3667, 920167782
        %v3681 = vsel %vm3673, %v3664, %v3680
        %v3682 = vsel %vm3672, %v3679, %v3681
        %v3683 = vsel %vm3671, %v3661, %v3664
        %v3684 = vsel %vm3674, %v3670, 1326507024
        %v3685 = vsel %vm3673, %v3667, %v3684
        %v3686 = vsel %vm3672, %v3683, %v3685
        %v3687 = vshll.u32 %v3647, 8
        %v3688 = vmul.u32.u64.compose %v3687, %v3686
        %v3689 = vextract.low.u32 %v3688
        %v3690 = vextract.high.u32 %v3688
        %v3691 = vmul.u32.u64.compose %v3687, %v3682
        %v3692 = vextract.low.u32 %v3691
        %v3693 = vextract.high.u32 %v3691
        %v3694 = vmul.u32 %v3687, %v3678
        %v3695 = vadd.s32 %v3690, %v3692
        %vm3696 = vc.u32 %v3690, %v3692
        %v3697 = vadd.s32 %v3693, 1
        %v3698 = vsel %vm3696, %v3697, %v3693
        %v3699 = vadd.s32 %v3694, %v3698
        %v3700 = vadd.s32 %v3699, 536870912
        %v3701 = vshrl.u32 %v3700, 30
        %v3702 = vshll.u32 %v3701, 30
        %v3703 = vsub.s32 %v3699, %v3702
        %vm3704 = vcmp.lt.s32.totalorder %v3703, 0
        %v3705 = vsub.s32 0, %v3703
        %v3706 = vsel %vm3704, %v3705, %v3703
        %v3707 = vclz %v3706
        %v3708 = vsub.s32 %v3707, 2
        %vm3709 = vcmp.gt.s32.totalorder 0, %v3708
        %v3710 = vsel %vm3709, 0, %v3708
        %v3711 = vsub.s32 32, %v3710
        %v3712 = vshll.u32 %v3703, %v3710
        %v3713 = vshrl.u32 %v3695, %v3711
        %v3714 = vor.u32 %v3712, %v3713
        %v3715 = vsub.s32 4294967266, %v3710
        %v3716 = vadd.s32 %v3715, 127
        %v3717 = vshll.u32 %v3716, 23
        %v3718 = vor.u32 4788187, %v3717
        %v3719 = vand.u32 2147483647, %v3718
        %v3721 = vcvt.s32.f32 %v3714
        %v3722 = vmul.f32 %v3721, %v3719
        %v3723 = vxor.u32 %v3722, 2147483648
        %v3724 = vsel %vm3641, %v3723, %v3722
        %v3725 = vsub.s32 4, %v3701
        %v3726 = vsel %vm3641, %v3725, %v3701
        %v3727 = vsel %vm3640, %v3304, %v3724
        %v3728 = vsel %vm3640, 0, %v3726
        %v3729 = vcosq.f32.pop %v3727
        %v3730 = vsinq.f32.pop %v3727
        %vm3731 = vweird.f32 %v3304
        %v3732 = vadd.s32 %v3728, 3
        %v3733 = vand.u32 %v3732, 3
        %vm3734 = vcmp.lt.s32.totalorder %v3733, 2
        %vm3735 = vcmp.eq.s32.totalorder %v3733, 0
        %v3736 = vxor.u32 %v3730, 2147483648
        %v3737 = vsel %vm3735, %v3729, %v3736
        %vm3738 = vcmp.eq.s32.totalorder %v3733, 2
        %v3739 = vxor.u32 %v3729, 2147483648
        %v3740 = vsel %vm3738, %v3739, %v3730
        %v3741 = vsel %vm3734, %v3737, %v3740
        %v3742 = vsel %vm3731, nan, %v3741
        %v3743 = vand.u32 2147483647, %v3309
        %vm3744 = vcmp.le.f32.partialorder %v3743, 0.7853982
        %vm3745 = vcmp.lt.s32.totalorder %v3309, 0
        %v3746 = vand.u32 %v3309, 2139095040
        %v3747 = vshrl.u32 %v3746, 23
        %v3748 = vsub.s32 %v3747, 127
        %v3749 = vand.u32 2147483647, %v3309
        %v3750 = vand.u32 %v3749, 8388607
        %v3751 = vor.u32 %v3750, 8388608
        %v3752 = vsub.s32 0, %v3751
        %v3753 = vadd.s32 %v3748, 1
        %vm3754 = vcmp.gt.s32.totalorder %v3753, 0
        %v3755 = vsel %vm3754, %v3753, 0
        %v3756 = vshrl.u32 %v3755, 5
        %v3757 = vand.u32 %v3755, 31
        %v3758 = vsub.s32 32, %v3757
        %v3759 = vshrl.u32 683565275, %v3758
        %v3760 = vshll.u32 683565275, %v3757
        %v3761 = vshrl.u32 2475754826, %v3758
        %v3762 = vor.u32 %v3760, %v3761
        %v3763 = vshll.u32 2475754826, %v3757
        %v3764 = vshrl.u32 2131351028, %v3758
        %v3765 = vor.u32 %v3763, %v3764
        %v3766 = vshll.u32 2131351028, %v3757
        %v3767 = vshrl.u32 2102212464, %v3758
        %v3768 = vor.u32 %v3766, %v3767
        %v3769 = vshll.u32 2102212464, %v3757
        %v3770 = vshrl.u32 920167782, %v3758
        %v3771 = vor.u32 %v3769, %v3770
        %v3772 = vshll.u32 920167782, %v3757
        %v3773 = vshrl.u32 1326507024, %v3758
        %v3774 = vor.u32 %v3772, %v3773
        %vm3775 = vcmp.lt.s32.totalorder %v3756, 1
        %vm3776 = vcmp.lt.s32.totalorder %v3756, 2
        %vm3777 = vcmp.lt.s32.totalorder %v3756, 3
        %vm3778 = vcmp.lt.s32.totalorder %v3756, 4
        %v3779 = vsel %vm3775, %v3759, %v3762
        %v3780 = vsel %vm3778, %v3768, 2102212464
        %v3781 = vsel %vm3777, %v3765, %v3780
        %v3782 = vsel %vm3776, %v3779, %v3781
        %v3783 = vsel %vm3775, %v3762, %v3765
        %v3784 = vsel %vm3778, %v3771, 920167782
        %v3785 = vsel %vm3777, %v3768, %v3784
        %v3786 = vsel %vm3776, %v3783, %v3785
        %v3787 = vsel %vm3775, %v3765, %v3768
        %v3788 = vsel %vm3778, %v3774, 1326507024
        %v3789 = vsel %vm3777, %v3771, %v3788
        %v3790 = vsel %vm3776, %v3787, %v3789
        %v3791 = vshll.u32 %v3751, 8
        %v3792 = vmul.u32.u64.compose %v3791, %v3790
        %v3793 = vextract.low.u32 %v3792
        %v3794 = vextract.high.u32 %v3792
        %v3795 = vmul.u32.u64.compose %v3791, %v3786
        %v3796 = vextract.low.u32 %v3795
        %v3797 = vextract.high.u32 %v3795
        %v3798 = vmul.u32 %v3791, %v3782
        %v3799 = vadd.s32 %v3794, %v3796
        %vm3800 = vc.u32 %v3794, %v3796
        %v3801 = vadd.s32 %v3797, 1
        %v3802 = vsel %vm3800, %v3801, %v3797
        %v3803 = vadd.s32 %v3798, %v3802
        %v3804 = vadd.s32 %v3803, 536870912
        %v3805 = vshrl.u32 %v3804, 30
        %v3806 = vshll.u32 %v3805, 30
        %v3807 = vsub.s32 %v3803, %v3806
        %vm3808 = vcmp.lt.s32.totalorder %v3807, 0
        %v3809 = vsub.s32 0, %v3807
        %v3810 = vsel %vm3808, %v3809, %v3807
        %v3811 = vclz %v3810
        %v3812 = vsub.s32 %v3811, 2
        %vm3813 = vcmp.gt.s32.totalorder 0, %v3812
        %v3814 = vsel %vm3813, 0, %v3812
        %v3815 = vsub.s32 32, %v3814
        %v3816 = vshll.u32 %v3807, %v3814
        %v3817 = vshrl.u32 %v3799, %v3815
        %v3818 = vor.u32 %v3816, %v3817
        %v3819 = vsub.s32 4294967266, %v3814
        %v3820 = vadd.s32 %v3819, 127
        %v3821 = vshll.u32 %v3820, 23
        %v3822 = vor.u32 4788187, %v3821
        %v3823 = vand.u32 2147483647, %v3822
        %v3825 = vcvt.s32.f32 %v3818
        %v3826 = vmul.f32 %v3825, %v3823
        %v3827 = vxor.u32 %v3826, 2147483648
        %v3828 = vsel %vm3745, %v3827, %v3826
        %v3829 = vsub.s32 4, %v3805
        %v3830 = vsel %vm3745, %v3829, %v3805
        %v3831 = vsel %vm3744, %v3309, %v3828
        %v3832 = vsel %vm3744, 0, %v3830
        %v3833 = vcosq.f32.pop %v3831
        %v3834 = vsinq.f32.pop %v3831
        %vm3835 = vweird.f32 %v3309
        %v3836 = vadd.s32 %v3832, 3
        %v3837 = vand.u32 %v3836, 3
        %vm3838 = vcmp.lt.s32.totalorder %v3837, 2
        %vm3839 = vcmp.eq.s32.totalorder %v3837, 0
        %v3840 = vxor.u32 %v3834, 2147483648
        %v3841 = vsel %vm3839, %v3833, %v3840
        %vm3842 = vcmp.eq.s32.totalorder %v3837, 2
        %v3843 = vxor.u32 %v3833, 2147483648
        %v3844 = vsel %vm3842, %v3843, %v3834
        %v3845 = vsel %vm3838, %v3841, %v3844
        %v3846 = vsel %vm3835, nan, %v3845
        %v3847 = vand.u32 2147483647, %v3314
        %vm3848 = vcmp.le.f32.partialorder %v3847, 0.7853982
        %vm3849 = vcmp.lt.s32.totalorder %v3314, 0
        %v3850 = vand.u32 %v3314, 2139095040
        %v3851 = vshrl.u32 %v3850, 23
        %v3852 = vsub.s32 %v3851, 127
        %v3853 = vand.u32 2147483647, %v3314
        %v3854 = vand.u32 %v3853, 8388607
        %v3855 = vor.u32 %v3854, 8388608
        %v3856 = vsub.s32 0, %v3855
        %v3857 = vadd.s32 %v3852, 1
        %vm3858 = vcmp.gt.s32.totalorder %v3857, 0
        %v3859 = vsel %vm3858, %v3857, 0
        %v3860 = vshrl.u32 %v3859, 5
        %v3861 = vand.u32 %v3859, 31
        %v3862 = vsub.s32 32, %v3861
        %v3863 = vshrl.u32 683565275, %v3862
        %v3864 = vshll.u32 683565275, %v3861
        %v3865 = vshrl.u32 2475754826, %v3862
        %v3866 = vor.u32 %v3864, %v3865
        %v3867 = vshll.u32 2475754826, %v3861
        %v3868 = vshrl.u32 2131351028, %v3862
        %v3869 = vor.u32 %v3867, %v3868
        %v3870 = vshll.u32 2131351028, %v3861
        %v3871 = vshrl.u32 2102212464, %v3862
        %v3872 = vor.u32 %v3870, %v3871
        %v3873 = vshll.u32 2102212464, %v3861
        %v3874 = vshrl.u32 920167782, %v3862
        %v3875 = vor.u32 %v3873, %v3874
        %v3876 = vshll.u32 920167782, %v3861
        %v3877 = vshrl.u32 1326507024, %v3862
        %v3878 = vor.u32 %v3876, %v3877
        %vm3879 = vcmp.lt.s32.totalorder %v3860, 1
        %vm3880 = vcmp.lt.s32.totalorder %v3860, 2
        %vm3881 = vcmp.lt.s32.totalorder %v3860, 3
        %vm3882 = vcmp.lt.s32.totalorder %v3860, 4
        %v3883 = vsel %vm3879, %v3863, %v3866
        %v3884 = vsel %vm3882, %v3872, 2102212464
        %v3885 = vsel %vm3881, %v3869, %v3884
        %v3886 = vsel %vm3880, %v3883, %v3885
        %v3887 = vsel %vm3879, %v3866, %v3869
        %v3888 = vsel %vm3882, %v3875, 920167782
        %v3889 = vsel %vm3881, %v3872, %v3888
        %v3890 = vsel %vm3880, %v3887, %v3889
        %v3891 = vsel %vm3879, %v3869, %v3872
        %v3892 = vsel %vm3882, %v3878, 1326507024
        %v3893 = vsel %vm3881, %v3875, %v3892
        %v3894 = vsel %vm3880, %v3891, %v3893
        %v3895 = vshll.u32 %v3855, 8
        %v3896 = vmul.u32.u64.compose %v3895, %v3894
        %v3897 = vextract.low.u32 %v3896
        %v3898 = vextract.high.u32 %v3896
        %v3899 = vmul.u32.u64.compose %v3895, %v3890
        %v3900 = vextract.low.u32 %v3899
        %v3901 = vextract.high.u32 %v3899
        %v3902 = vmul.u32 %v3895, %v3886
        %v3903 = vadd.s32 %v3898, %v3900
        %vm3904 = vc.u32 %v3898, %v3900
        %v3905 = vadd.s32 %v3901, 1
        %v3906 = vsel %vm3904, %v3905, %v3901
        %v3907 = vadd.s32 %v3902, %v3906
        %v3908 = vadd.s32 %v3907, 536870912
        %v3909 = vshrl.u32 %v3908, 30
        %v3910 = vshll.u32 %v3909, 30
        %v3911 = vsub.s32 %v3907, %v3910
        %vm3912 = vcmp.lt.s32.totalorder %v3911, 0
        %v3913 = vsub.s32 0, %v3911
        %v3914 = vsel %vm3912, %v3913, %v3911
        %v3915 = vclz %v3914
        %v3916 = vsub.s32 %v3915, 2
        %vm3917 = vcmp.gt.s32.totalorder 0, %v3916
        %v3918 = vsel %vm3917, 0, %v3916
        %v3919 = vsub.s32 32, %v3918
        %v3920 = vshll.u32 %v3911, %v3918
        %v3921 = vshrl.u32 %v3903, %v3919
        %v3922 = vor.u32 %v3920, %v3921
        %v3923 = vsub.s32 4294967266, %v3918
        %v3924 = vadd.s32 %v3923, 127
        %v3925 = vshll.u32 %v3924, 23
        %v3926 = vor.u32 4788187, %v3925
        %v3927 = vand.u32 2147483647, %v3926
        %v3929 = vcvt.s32.f32 %v3922
        %v3930 = vmul.f32 %v3929, %v3927
        %v3931 = vxor.u32 %v3930, 2147483648
        %v3932 = vsel %vm3849, %v3931, %v3930
        %v3933 = vsub.s32 4, %v3909
        %v3934 = vsel %vm3849, %v3933, %v3909
        %v3935 = vsel %vm3848, %v3314, %v3932
        %v3936 = vsel %vm3848, 0, %v3934
        %v3937 = vcosq.f32.pop %v3935
        %v3938 = vsinq.f32.pop %v3935
        %vm3939 = vweird.f32 %v3314
        %v3940 = vadd.s32 %v3936, 3
        %v3941 = vand.u32 %v3940, 3
        %vm3942 = vcmp.lt.s32.totalorder %v3941, 2
        %vm3943 = vcmp.eq.s32.totalorder %v3941, 0
        %v3944 = vxor.u32 %v3938, 2147483648
        %v3945 = vsel %vm3943, %v3937, %v3944
        %vm3946 = vcmp.eq.s32.totalorder %v3941, 2
        %v3947 = vxor.u32 %v3937, 2147483648
        %v3948 = vsel %vm3946, %v3947, %v3938
        %v3949 = vsel %vm3942, %v3945, %v3948
        %v3950 = vsel %vm3939, nan, %v3949
        %v3951 = vand.u32 2147483647, %v3319
        %vm3952 = vcmp.le.f32.partialorder %v3951, 0.7853982
        %vm3953 = vcmp.lt.s32.totalorder %v3319, 0
        %v3954 = vand.u32 %v3319, 2139095040
        %v3955 = vshrl.u32 %v3954, 23
        %v3956 = vsub.s32 %v3955, 127
        %v3957 = vand.u32 2147483647, %v3319
        %v3958 = vand.u32 %v3957, 8388607
        %v3959 = vor.u32 %v3958, 8388608
        %v3960 = vsub.s32 0, %v3959
        %v3961 = vadd.s32 %v3956, 1
        %vm3962 = vcmp.gt.s32.totalorder %v3961, 0
        %v3963 = vsel %vm3962, %v3961, 0
        %v3964 = vshrl.u32 %v3963, 5
        %v3965 = vand.u32 %v3963, 31
        %v3966 = vsub.s32 32, %v3965
        %v3967 = vshrl.u32 683565275, %v3966
        %v3968 = vshll.u32 683565275, %v3965
        %v3969 = vshrl.u32 2475754826, %v3966
        %v3970 = vor.u32 %v3968, %v3969
        %v3971 = vshll.u32 2475754826, %v3965
        %v3972 = vshrl.u32 2131351028, %v3966
        %v3973 = vor.u32 %v3971, %v3972
        %v3974 = vshll.u32 2131351028, %v3965
        %v3975 = vshrl.u32 2102212464, %v3966
        %v3976 = vor.u32 %v3974, %v3975
        %v3977 = vshll.u32 2102212464, %v3965
        %v3978 = vshrl.u32 920167782, %v3966
        %v3979 = vor.u32 %v3977, %v3978
        %v3980 = vshll.u32 920167782, %v3965
        %v3981 = vshrl.u32 1326507024, %v3966
        %v3982 = vor.u32 %v3980, %v3981
        %vm3983 = vcmp.lt.s32.totalorder %v3964, 1
        %vm3984 = vcmp.lt.s32.totalorder %v3964, 2
        %vm3985 = vcmp.lt.s32.totalorder %v3964, 3
        %vm3986 = vcmp.lt.s32.totalorder %v3964, 4
        %v3987 = vsel %vm3983, %v3967, %v3970
        %v3988 = vsel %vm3986, %v3976, 2102212464
        %v3989 = vsel %vm3985, %v3973, %v3988
        %v3990 = vsel %vm3984, %v3987, %v3989
        %v3991 = vsel %vm3983, %v3970, %v3973
        %v3992 = vsel %vm3986, %v3979, 920167782
        %v3993 = vsel %vm3985, %v3976, %v3992
        %v3994 = vsel %vm3984, %v3991, %v3993
        %v3995 = vsel %vm3983, %v3973, %v3976
        %v3996 = vsel %vm3986, %v3982, 1326507024
        %v3997 = vsel %vm3985, %v3979, %v3996
        %v3998 = vsel %vm3984, %v3995, %v3997
        %v3999 = vshll.u32 %v3959, 8
        %v4000 = vmul.u32.u64.compose %v3999, %v3998
        %v4001 = vextract.low.u32 %v4000
        %v4002 = vextract.high.u32 %v4000
        %v4003 = vmul.u32.u64.compose %v3999, %v3994
        %v4004 = vextract.low.u32 %v4003
        %v4005 = vextract.high.u32 %v4003
        %v4006 = vmul.u32 %v3999, %v3990
        %v4007 = vadd.s32 %v4002, %v4004
        %vm4008 = vc.u32 %v4002, %v4004
        %v4009 = vadd.s32 %v4005, 1
        %v4010 = vsel %vm4008, %v4009, %v4005
        %v4011 = vadd.s32 %v4006, %v4010
        %v4012 = vadd.s32 %v4011, 536870912
        %v4013 = vshrl.u32 %v4012, 30
        %v4014 = vshll.u32 %v4013, 30
        %v4015 = vsub.s32 %v4011, %v4014
        %vm4016 = vcmp.lt.s32.totalorder %v4015, 0
        %v4017 = vsub.s32 0, %v4015
        %v4018 = vsel %vm4016, %v4017, %v4015
        %v4019 = vclz %v4018
        %v4020 = vsub.s32 %v4019, 2
        %vm4021 = vcmp.gt.s32.totalorder 0, %v4020
        %v4022 = vsel %vm4021, 0, %v4020
        %v4023 = vsub.s32 32, %v4022
        %v4024 = vshll.u32 %v4015, %v4022
        %v4025 = vshrl.u32 %v4007, %v4023
        %v4026 = vor.u32 %v4024, %v4025
        %v4027 = vsub.s32 4294967266, %v4022
        %v4028 = vadd.s32 %v4027, 127
        %v4029 = vshll.u32 %v4028, 23
        %v4030 = vor.u32 4788187, %v4029
        %v4031 = vand.u32 2147483647, %v4030
        %v4033 = vcvt.s32.f32 %v4026
        %v4034 = vmul.f32 %v4033, %v4031
        %v4035 = vxor.u32 %v4034, 2147483648
        %v4036 = vsel %vm3953, %v4035, %v4034
        %v4037 = vsub.s32 4, %v4013
        %v4038 = vsel %vm3953, %v4037, %v4013
        %v4039 = vsel %vm3952, %v3319, %v4036
        %v4040 = vsel %vm3952, 0, %v4038
        %v4041 = vcosq.f32.pop %v4039
        %v4042 = vsinq.f32.pop %v4039
        %vm4043 = vweird.f32 %v3319
        %v4044 = vadd.s32 %v4040, 3
        %v4045 = vand.u32 %v4044, 3
        %vm4046 = vcmp.lt.s32.totalorder %v4045, 2
        %vm4047 = vcmp.eq.s32.totalorder %v4045, 0
        %v4048 = vxor.u32 %v4042, 2147483648
        %v4049 = vsel %vm4047, %v4041, %v4048
        %vm4050 = vcmp.eq.s32.totalorder %v4045, 2
        %v4051 = vxor.u32 %v4041, 2147483648
        %v4052 = vsel %vm4050, %v4051, %v4042
        %v4053 = vsel %vm4046, %v4049, %v4052
        %v4054 = vsel %vm4043, nan, %v4053
        %v4055 = vand.u32 2147483647, %v3324
        %vm4056 = vcmp.le.f32.partialorder %v4055, 0.7853982
        %vm4057 = vcmp.lt.s32.totalorder %v3324, 0
        %v4058 = vand.u32 %v3324, 2139095040
        %v4059 = vshrl.u32 %v4058, 23
        %v4060 = vsub.s32 %v4059, 127
        %v4061 = vand.u32 2147483647, %v3324
        %v4062 = vand.u32 %v4061, 8388607
        %v4063 = vor.u32 %v4062, 8388608
        %v4064 = vsub.s32 0, %v4063
        %v4065 = vadd.s32 %v4060, 1
        %vm4066 = vcmp.gt.s32.totalorder %v4065, 0
        %v4067 = vsel %vm4066, %v4065, 0
        %v4068 = vshrl.u32 %v4067, 5
        %v4069 = vand.u32 %v4067, 31
        %v4070 = vsub.s32 32, %v4069
        %v4071 = vshrl.u32 683565275, %v4070
        %v4072 = vshll.u32 683565275, %v4069
        %v4073 = vshrl.u32 2475754826, %v4070
        %v4074 = vor.u32 %v4072, %v4073
        %v4075 = vshll.u32 2475754826, %v4069
        %v4076 = vshrl.u32 2131351028, %v4070
        %v4077 = vor.u32 %v4075, %v4076
        %v4078 = vshll.u32 2131351028, %v4069
        %v4079 = vshrl.u32 2102212464, %v4070
        %v4080 = vor.u32 %v4078, %v4079
        %v4081 = vshll.u32 2102212464, %v4069
        %v4082 = vshrl.u32 920167782, %v4070
        %v4083 = vor.u32 %v4081, %v4082
        %v4084 = vshll.u32 920167782, %v4069
        %v4085 = vshrl.u32 1326507024, %v4070
        %v4086 = vor.u32 %v4084, %v4085
        %vm4087 = vcmp.lt.s32.totalorder %v4068, 1
        %vm4088 = vcmp.lt.s32.totalorder %v4068, 2
        %vm4089 = vcmp.lt.s32.totalorder %v4068, 3
        %vm4090 = vcmp.lt.s32.totalorder %v4068, 4
        %v4091 = vsel %vm4087, %v4071, %v4074
        %v4092 = vsel %vm4090, %v4080, 2102212464
        %v4093 = vsel %vm4089, %v4077, %v4092
        %v4094 = vsel %vm4088, %v4091, %v4093
        %v4095 = vsel %vm4087, %v4074, %v4077
        %v4096 = vsel %vm4090, %v4083, 920167782
        %v4097 = vsel %vm4089, %v4080, %v4096
        %v4098 = vsel %vm4088, %v4095, %v4097
        %v4099 = vsel %vm4087, %v4077, %v4080
        %v4100 = vsel %vm4090, %v4086, 1326507024
        %v4101 = vsel %vm4089, %v4083, %v4100
        %v4102 = vsel %vm4088, %v4099, %v4101
        %v4103 = vshll.u32 %v4063, 8
        %v4104 = vmul.u32.u64.compose %v4103, %v4102
        %v4105 = vextract.low.u32 %v4104
        %v4106 = vextract.high.u32 %v4104
        %v4107 = vmul.u32.u64.compose %v4103, %v4098
        %v4108 = vextract.low.u32 %v4107
        %v4109 = vextract.high.u32 %v4107
        %v4110 = vmul.u32 %v4103, %v4094
        %v4111 = vadd.s32 %v4106, %v4108
        %vm4112 = vc.u32 %v4106, %v4108
        %v4113 = vadd.s32 %v4109, 1
        %v4114 = vsel %vm4112, %v4113, %v4109
        %v4115 = vadd.s32 %v4110, %v4114
        %v4116 = vadd.s32 %v4115, 536870912
        %v4117 = vshrl.u32 %v4116, 30
        %v4118 = vshll.u32 %v4117, 30
        %v4119 = vsub.s32 %v4115, %v4118
        %vm4120 = vcmp.lt.s32.totalorder %v4119, 0
        %v4121 = vsub.s32 0, %v4119
        %v4122 = vsel %vm4120, %v4121, %v4119
        %v4123 = vclz %v4122
        %v4124 = vsub.s32 %v4123, 2
        %vm4125 = vcmp.gt.s32.totalorder 0, %v4124
        %v4126 = vsel %vm4125, 0, %v4124
        %v4127 = vsub.s32 32, %v4126
        %v4128 = vshll.u32 %v4119, %v4126
        %v4129 = vshrl.u32 %v4111, %v4127
        %v4130 = vor.u32 %v4128, %v4129
        %v4131 = vsub.s32 4294967266, %v4126
        %v4132 = vadd.s32 %v4131, 127
        %v4133 = vshll.u32 %v4132, 23
        %v4134 = vor.u32 4788187, %v4133
        %v4135 = vand.u32 2147483647, %v4134
        %v4137 = vcvt.s32.f32 %v4130
        %v4138 = vmul.f32 %v4137, %v4135
        %v4139 = vxor.u32 %v4138, 2147483648
        %v4140 = vsel %vm4057, %v4139, %v4138
        %v4141 = vsub.s32 4, %v4117
        %v4142 = vsel %vm4057, %v4141, %v4117
        %v4143 = vsel %vm4056, %v3324, %v4140
        %v4144 = vsel %vm4056, 0, %v4142
        %v4145 = vcosq.f32.pop %v4143
        %v4146 = vsinq.f32.pop %v4143
        %vm4147 = vweird.f32 %v3324
        %v4148 = vadd.s32 %v4144, 3
        %v4149 = vand.u32 %v4148, 3
        %vm4150 = vcmp.lt.s32.totalorder %v4149, 2
        %vm4151 = vcmp.eq.s32.totalorder %v4149, 0
        %v4152 = vxor.u32 %v4146, 2147483648
        %v4153 = vsel %vm4151, %v4145, %v4152
        %vm4154 = vcmp.eq.s32.totalorder %v4149, 2
        %v4155 = vxor.u32 %v4145, 2147483648
        %v4156 = vsel %vm4154, %v4155, %v4146
        %v4157 = vsel %vm4150, %v4153, %v4156
        %v4158 = vsel %vm4147, nan, %v4157
        %v4159 = vld [vmem:[%s5] sm:$0xff]
        %v4160 = vld [vmem:[%s5 + $0x8] sm:$0xff]
        %v4161 = vld [vmem:[%s5 + $0x10] sm:$0xff]
        %v4162 = vld [vmem:[%s5 + $0x18] sm:$0xff]
        %v4163 = vld [vmem:[%s5 + $0x20] sm:$0xff]
        %v4164 = vld [vmem:[%s5 + $0x28] sm:$0xff]
        %v4165 = vld [vmem:[%s5 + $0x30] sm:$0xff]
        %v4166 = vld [vmem:[%s5 + $0x38] sm:$0xff]
        %v4167 = vld [vmem:[%s5 + $0x40] sm:$0xff]
        %v4168 = vld [vmem:[%s5 + $0x48] sm:$0xff]
        %v4169 = vld [vmem:[%s5 + $0x50] sm:$0xff]
        %v4170 = vld [vmem:[%s5 + $0x58] sm:$0xff]
        %v4171 = vld [vmem:[%s5 + $0x60] sm:$0xff]
        %v4172 = vld [vmem:[%s5 + $0x68] sm:$0xff]
        %v4173 = vld [vmem:[%s5 + $0x70] sm:$0xff]
        %v4174 = vld [vmem:[%s5 + $0x78] sm:$0xff]
        %v4175 = vld [vmem:[%s6] sm:$0x1]
        %v4177 = vlaneseq
        %v4178 = vshrl.u32 %v4177, 7
        %v4179 = vsub.s32 0, %v4178
        %v4180 = vrot.slane %v4175, %v4179
        %4182 = vmatprep.subr.mxu0 0.0
        %4183 = vmatpush1.msra.mxu0 %v4159
        %4184 = vmatprep.subr.mxu0 0.0
        %4185 = vmatpush1.msra.mxu0 %v4160
        %4186 = vmatprep.subr.mxu0 0.0
        %4187 = vmatpush1.msra.mxu0 %v4161
        %4188 = vmatprep.subr.mxu0 0.0
        %4189 = vmatpush1.msra.mxu0 %v4162
        %4190 = vmatprep.subr.mxu0 0.0
        %4191 = vmatpush1.msra.mxu0 %v4163
        %4192 = vmatprep.subr.mxu0 0.0
        %4193 = vmatpush1.msra.mxu0 %v4164
        %4194 = vmatprep.subr.mxu0 0.0
        %4195 = vmatpush1.msra.mxu0 %v4165
        %4196 = vmatprep.subr.mxu0 0.0
        %4197 = vmatpush1.msra.mxu0 %v4166
        %4198 = vmatprep.subr.mxu0 0.0
        %4199 = vmatpush1.msra.mxu0 %v4167
        %4200 = vmatprep.subr.mxu0 0.0
        %4201 = vmatpush1.msra.mxu0 %v4168
        %4202 = vmatprep.subr.mxu0 0.0
        %4203 = vmatpush1.msra.mxu0 %v4169
        %4204 = vmatprep.subr.mxu0 0.0
        %4205 = vmatpush1.msra.mxu0 %v4170
        %4206 = vmatprep.subr.mxu0 0.0
        %4207 = vmatpush1.msra.mxu0 %v4171
        %4208 = vmatprep.subr.mxu0 0.0
        %4209 = vmatpush1.msra.mxu0 %v4172
        %4210 = vmatprep.subr.mxu0 0.0
        %4211 = vmatpush1.msra.mxu0 %v4173
        %4212 = vmatprep.subr.mxu0 0.0
        %4213 = vmatpush1.msra.mxu0 %v4174
        %4214 = vmatprep.subr.mxu0 0.0
        %4215 = vmatpush1.msra.mxu0 0.0
        %4216 = vmatprep.subr.mxu0 0.0
        %4217 = vmatpush1.msra.mxu0 0.0
        %4218 = vmatprep.subr.mxu0 0.0
        %4219 = vmatpush1.msra.mxu0 0.0
        %4220 = vmatprep.subr.mxu0 0.0
        %4221 = vmatpush1.msra.mxu0 0.0
        %4222 = vmatprep.subr.mxu0 0.0
        %4223 = vmatpush1.msra.mxu0 0.0
        %4224 = vmatprep.subr.mxu0 0.0
        %4225 = vmatpush1.msra.mxu0 0.0
        %4226 = vmatprep.subr.mxu0 0.0
        %4227 = vmatpush1.msra.mxu0 0.0
        %4228 = vmatprep.subr.mxu0 0.0
        %4229 = vmatpush1.msra.mxu0 0.0
        %4230 = vmatprep.subr.mxu0 0.0
        %4231 = vmatpush1.msra.mxu0 0.0
        %4232 = vmatprep.subr.mxu0 0.0
        %4233 = vmatpush1.msra.mxu0 0.0
        %4234 = vmatprep.subr.mxu0 0.0
        %4235 = vmatpush1.msra.mxu0 0.0
        %4236 = vmatprep.subr.mxu0 0.0
        %4237 = vmatpush1.msra.mxu0 0.0
        %4238 = vmatprep.subr.mxu0 0.0
        %4239 = vmatpush1.msra.mxu0 0.0
        %4240 = vmatprep.subr.mxu0 0.0
        %4241 = vmatpush1.msra.mxu0 0.0
        %4242 = vmatprep.subr.mxu0 0.0
        %4243 = vmatpush1.msra.mxu0 0.0
        %4244 = vmatprep.subr.mxu0 0.0
        %4245 = vmatpush1.msra.mxu0 0.0
        %4246 = vmatprep.mubr.f32.mxu0 0.0
        %4247 = vmatmul.mubr.f32.gmra.mrb[0].mxu0 %v3430
        %v4248 = vpop.f32.mrb[0].mxu0
        %v4249 = vadd.f32 %v4180, %v4248
        %v4250 = vpop.f32.mrb[0].mxu0
        %4251 = vmatprep.mubr.f32.mxu0 0.0
        %4252 = vmatmul.mubr.f32.gmra.mrb[0].mxu0 %v3534
        %v4253 = vpop.f32.mrb[0].mxu0
        %v4254 = vadd.f32 %v4180, %v4253
        %v4255 = vpop.f32.mrb[0].mxu0
        %4256 = vmatprep.mubr.f32.mxu0 0.0
        %4257 = vmatmul.mubr.f32.gmra.mrb[0].mxu0 %v3638
        %v4258 = vpop.f32.mrb[0].mxu0
        %v4259 = vadd.f32 %v4180, %v4258
        %v4260 = vpop.f32.mrb[0].mxu0
        %4261 = vmatprep.mubr.f32.mxu0 0.0
        %4262 = vmatmul.mubr.f32.gmra.mrb[0].mxu0 %v3742
        %v4263 = vpop.f32.mrb[0].mxu0
        %v4264 = vadd.f32 %v4180, %v4263
        %v4265 = vpop.f32.mrb[0].mxu0
        %4266 = vmatprep.mubr.f32.mxu0 0.0
        %4267 = vmatmul.mubr.f32.gmra.mrb[0].mxu0 %v3846
        %v4268 = vpop.f32.mrb[0].mxu0
        %v4269 = vadd.f32 %v4180, %v4268
        %v4270 = vpop.f32.mrb[0].mxu0
        %4271 = vmatprep.mubr.f32.mxu0 0.0
        %4272 = vmatmul.mubr.f32.gmra.mrb[0].mxu0 %v3950
        %v4273 = vpop.f32.mrb[0].mxu0
        %v4274 = vadd.f32 %v4180, %v4273
        %v4275 = vpop.f32.mrb[0].mxu0
        %4276 = vmatprep.mubr.f32.mxu0 0.0
        %4277 = vmatmul.mubr.f32.gmra.mrb[0].mxu0 %v4054
        %v4278 = vpop.f32.mrb[0].mxu0
        %v4279 = vadd.f32 %v4180, %v4278
        %v4280 = vpop.f32.mrb[0].mxu0
        %4281 = vmatprep.mubr.f32.mxu0 0.0
        %4282 = vmatmul.mubr.f32.gmra.mrb[0].mxu0 %v4158
        %v4283 = vpop.f32.mrb[0].mxu0
        %v4284 = vadd.f32 %v4180, %v4283
        %v4285 = vpop.f32.mrb[0].mxu0
        %4286 = vdwg.mxu0
        %vm4287 = vcmask 15360
        %4288 = vst.msk [vmem:[%s295] sm:$0xff] %vm4287, %v4249
        %4289 = vst.msk [vmem:[%s295 + $0x8] sm:$0xff] %vm4287, %v4254
        %4290 = vst.msk [vmem:[%s295 + $0x10] sm:$0xff] %vm4287, %v4259
        %4291 = vst.msk [vmem:[%s295 + $0x18] sm:$0xff] %vm4287, %v4264
        %4292 = vst.msk [vmem:[%s295 + $0x20] sm:$0xff] %vm4287, %v4269
        %4293 = vst.msk [vmem:[%s295 + $0x28] sm:$0xff] %vm4287, %v4274
        %4294 = vst.msk [vmem:[%s295 + $0x30] sm:$0xff] %vm4287, %v4279
        %4295 = vst.msk [vmem:[%s295 + $0x38] sm:$0xff] %vm4287, %v4284
        %s4296 = smul.u32 8, %s19
        %p4297 = scmp.lt.s32.totalorder %s4296, 15
        %s4298 = scalar_select %p4297, %s4296, 15
        %s4299 = smul.addr %s4298, 8
        %s4300 = scalar_lea.vmem %s7, %s4299
        // Predicated region
        $region53: #{tpu_custom_call.1} parent=47 // pred_check
          %p4301 = pneg %p189
        $region54: #{tpu_custom_call.1} parent=47 // pred_check_branch
          %4303 = sbr.rel (%p4301) target = $region56
        $region55: #{tpu_custom_call.1} parent=47 // pred_region
          %s4304 = smul.u32 8, %s19
        $region56: #{tpu_custom_call.1} parent=47 // pred_fallthru
          _
      $region48: #{tpu_custom_call.1} parent=5 // pred_fallthru
        _
      %p4305 = scmp.le.s32.totalorder 2, %s14
      // Predicated region
      $region57: #{tpu_custom_call.1} parent=5 // pred_check
        %p4306 = pneg %p4305
      $region58: #{tpu_custom_call.1} parent=5 // pred_check_branch
        %4308 = sbr.rel (%p4306) target = $region60
      $region59: #{tpu_custom_call.1} parent=5 // pred_region
        %s4309 = ssub.s32 %s14, 2
        // Predicated region
        $region61: #{tpu_custom_call.1} parent=59 // pred_check
          %p4310 = pneg %p195
        $region62: #{tpu_custom_call.1} parent=59 // pred_check_branch
          %4312 = sbr.rel (%p4310) target = $region64
        $region63: #{tpu_custom_call.1} parent=59 // pred_region
          %s4313 = smul.u32 8, %s20
          %p4314 = scmp.lt.s32.totalorder %s4313, 15
          %s4315 = scalar_select %p4314, %s4313, 15
          %s4316 = smul.addr %s4315, 8
          %s4317 = scalar_lea.vmem %s7, %s4316
        $region64: #{tpu_custom_call.1} parent=59 // pred_fallthru
          _
      $region60: #{tpu_custom_call.1} parent=5 // pred_fallthru
        _
    $region6: #{tpu_custom_call.1} parent=1 // loop_footer
      %s18 = sadd.s32 1, %s14
    $region7: #{tpu_custom_call.1} parent=1 // loop_footer_branch
      %13 = sbr.rel target = $region3
    $region8: #{tpu_custom_call.1} parent=1 // loop_exit
      _
    %4318 = vsyncpa [#allocation3], 1
    %s4319 = scalar_lea.sflag [#allocation3], 1
    %4320 = vsyncpa %s4319, 1

</llo_original>
